<compile_context>
chip_gen: v7x
topology: tpu7x:2x2x1
jax: 0.10.0
libtpu: 0.0.40
codegen_flags: <defaults>
</compile_context>

<pallas_src>
import functools
import math

import jax
import jax.numpy as jnp
from jax.experimental import pallas as pl
from jax.experimental.pallas import tpu as pltpu


LN_EPS = 1e-5


def _tpu_generation_defaults():
    """Generation-aware scoped-VMEM limit and row-tile cap.

    v5e/v6e have 128 MiB physical VMEM -> raise the scoped limit well past the
    32 MiB default and allow bigger row tiles.  v7x has only 64 MiB per
    TensorCore -> keep the scoped budget and tiles conservative.
    """
    try:
        kind = jax.devices()[0].device_kind.lower()
    except Exception:  # defensive: never fail at import time
        kind = ""
    is_v7 = ("v7" in kind) or ("tpu7" in kind)
    if is_v7:
        return 48 * 1024 * 1024, 512
    return 96 * 1024 * 1024, 1024


VMEM_LIMIT, ROW_TILE_CAP = _tpu_generation_defaults()


def _pick_tile(dim, cap, align):
    """Largest multiple of `align` <= cap that evenly divides `dim`; else dim.

    Fallback to the full dim only happens for small / oddly-sized dims (demo
    scale); at realistic sizes N*S and vocab are multiples of the tile caps.
    """
    if dim <= cap:
        return dim
    t = (cap // align) * align
    while t >= align:
        if dim % t == 0:
            return t
        t -= align
    return dim


# ---------------------------------------------------------------------------
# Fused multi-head-attention sub-block (one batch element per grid step):
#   out = LayerNorm(x_q + OutProj(MHA(x_q, x_kv)))
# ---------------------------------------------------------------------------

def _mha_block_kernel(*refs, num_heads, scale, eps, is_self):
    if is_self:
        (xq_ref, wq_ref, bq_ref, wk_ref, bk_ref, wv_ref, bv_ref,
         wo_ref, bo_ref, g_ref, bt_ref, o_ref, ctx_ref) = refs
    else:
        (xq_ref, xkv_ref, wq_ref, bq_ref, wk_ref, bk_ref, wv_ref, bv_ref,
         wo_ref, bo_ref, g_ref, bt_ref, o_ref, ctx_ref) = refs

    Sq, E = xq_ref.shape
    H = num_heads
    Dh = E // H

    xq = xq_ref[...].astype(jnp.float32)
    xkv = xq if is_self else xkv_ref[...].astype(jnp.float32)

    # Full-width (E x E) projections on the MXU; Q pre-scaled by 1/sqrt(Dh).
    q = (jnp.dot(xq, wq_ref[...], preferred_element_type=jnp.float32)
         + bq_ref[...]) * scale
    k = jnp.dot(xkv, wk_ref[...], preferred_element_type=jnp.float32) + bk_ref[...]
    v = jnp.dot(xkv, wv_ref[...], preferred_element_type=jnp.float32) + bv_ref[...]

    # Per-head attention.  Each head's context is packed into a (Sq, E) VMEM
    # scratch so the out-projection is a single full-K matmul.
    for h in range(H):
        lo = h * Dh
        qh = q[:, lo:lo + Dh]                  # (Sq, Dh)
        kh = k[:, lo:lo + Dh]                  # (Sk, Dh)
        vh = v[:, lo:lo + Dh]                  # (Sk, Dh)
        # scores = qh @ kh^T  (contraction on the head dim, no materialized T)
        s = jax.lax.dot_general(qh, kh, (((1,), (1,)), ((), ())),
                                preferred_element_type=jnp.float32)  # (Sq, Sk)
        m = jnp.max(s, axis=-1, keepdims=True)
        p = jnp.exp(s - m)
        p = p / jnp.sum(p, axis=-1, keepdims=True)   # exact div (f32 parity)
        ctx_ref[:, lo:lo + Dh] = jnp.dot(p, vh,
                                         preferred_element_type=jnp.float32)

    attn = jnp.dot(ctx_ref[...], wo_ref[...],
                   preferred_element_type=jnp.float32) + bo_ref[...]

    # fused residual + LayerNorm
    x = xq + attn
    mu = jnp.mean(x, axis=-1, keepdims=True)
    var = jnp.mean(jnp.square(x - mu), axis=-1, keepdims=True)
    y = (x - mu) * jax.lax.rsqrt(var + eps)
    o_ref[...] = (y * g_ref[...] + bt_ref[...]).astype(o_ref.dtype)


def mha_block(xq2, xkv2, attn_p, ln_g, ln_b, *, num_heads, n_batch, is_self):
    """xq2: (N*Sq, E) batch-major; xkv2: (N*Sk, E).  Returns (N*Sq, E)."""
    M, E = xq2.shape
    Sq = M // n_batch
    Sk = xkv2.shape[0] // n_batch
    scale = 1.0 / math.sqrt(E // num_heads)
    kernel = functools.partial(
        _mha_block_kernel, num_heads=num_heads, scale=scale, eps=LN_EPS,
        is_self=is_self)

    row_q = lambda n: (n, 0)
    row_kv = lambda n: (n, 0)
    const = lambda n: (0, 0)

    args = [xq2]
    in_specs = [pl.BlockSpec((Sq, E), row_q)]
    if not is_self:
        args.append(xkv2)
        in_specs.append(pl.BlockSpec((Sk, E), row_kv))

    weights = [attn_p["wqT"], attn_p["bq"], attn_p["wkT"], attn_p["bk"],
               attn_p["wvT"], attn_p["bv"], attn_p["woT"], attn_p["bo"],
               ln_g, ln_b]
    for w in weights:
        in_specs.append(pl.BlockSpec(w.shape, const))   # resident, fetched once
    args += weights

    return pl.pallas_call(
        kernel,
        out_shape=jax.ShapeDtypeStruct((M, E), xq2.dtype),
        grid=(n_batch,),
        in_specs=in_specs,
        out_specs=pl.BlockSpec((Sq, E), row_q),
        scratch_shapes=[pltpu.VMEM((Sq, E), jnp.float32)],
        compiler_params=pltpu.CompilerParams(
            dimension_semantics=("parallel",),
            vmem_limit_bytes=VMEM_LIMIT),
    )(*args)


# ---------------------------------------------------------------------------
# Fused FFN sub-block:  out = LayerNorm(x + lin2(relu(lin1(x))))
# Row-tiled grid; the (tm, FFN) hidden never leaves VMEM.
# ---------------------------------------------------------------------------

def _ffn_block_kernel(x_ref, w1_ref, b1_ref, w2_ref, b2_ref, g_ref, bt_ref,
                      o_ref, *, eps):
    x = x_ref[...].astype(jnp.float32)
    h = jnp.dot(x, w1_ref[...], preferred_element_type=jnp.float32) + b1_ref[...]
    h = jnp.maximum(h, 0.0)
    y = jnp.dot(h, w2_ref[...], preferred_element_type=jnp.float32) + b2_ref[...]
    x = x + y
    mu = jnp.mean(x, axis=-1, keepdims=True)
    var = jnp.mean(jnp.square(x - mu), axis=-1, keepdims=True)
    z = (x - mu) * jax.lax.rsqrt(var + eps)
    o_ref[...] = (z * g_ref[...] + bt_ref[...]).astype(o_ref.dtype)


def ffn_block(x2, w1T, b1, w2T, b2, ln_g, ln_b):
    M, E = x2.shape
    F = w1T.shape[1]
    tm = _pick_tile(M, ROW_TILE_CAP, 8)
    grid = (M // tm,)
    return pl.pallas_call(
        functools.partial(_ffn_block_kernel, eps=LN_EPS),
        out_shape=jax.ShapeDtypeStruct((M, E), x2.dtype),
        grid=grid,
        in_specs=[
            pl.BlockSpec((tm, E), lambda i: (i, 0)),
            pl.BlockSpec((E, F), lambda i: (0, 0)),
            pl.BlockSpec((1, F), lambda i: (0, 0)),
            pl.BlockSpec((F, E), lambda i: (0, 0)),
            pl.BlockSpec((1, E), lambda i: (0, 0)),
            pl.BlockSpec((1, E), lambda i: (0, 0)),
            pl.BlockSpec((1, E), lambda i: (0, 0)),
        ],
        out_specs=pl.BlockSpec((tm, E), lambda i: (i, 0)),
        compiler_params=pltpu.CompilerParams(
            dimension_semantics=("parallel",),
            vmem_limit_bytes=VMEM_LIMIT),
    )(x2, w1T, b1, w2T, b2, ln_g, ln_b)


# ---------------------------------------------------------------------------
# Tiled linear for the fc3 vocab head.  Weights pre-transposed.  Grid order:
# output-column axis OUTER, row axis INNER, so the large (E, V) weight is
# streamed from HBM exactly once.
# ---------------------------------------------------------------------------

def _linear_kernel(x_ref, w_ref, b_ref, o_ref):
    y = jnp.dot(x_ref[...], w_ref[...],
                preferred_element_type=jnp.float32) + b_ref[...]
    o_ref[...] = y.astype(o_ref.dtype)


def pallas_linear(x, wT, b):
    """x: (M,K), wT: (K,O) (already transposed), b: (1,O) -> (M,O)."""
    M, K = x.shape
    O = wT.shape[1]
    tm = _pick_tile(M, min(512, ROW_TILE_CAP), 8)
    tn = _pick_tile(O, 1024, 128)
    grid = (O // tn, M // tm)        # columns outer, rows inner
    return pl.pallas_call(
        _linear_kernel,
        out_shape=jax.ShapeDtypeStruct((M, O), x.dtype),
        grid=grid,
        in_specs=[
            pl.BlockSpec((tm, K), lambda j, i: (i, 0)),
            pl.BlockSpec((K, tn), lambda j, i: (0, j)),   # constant over inner axis
            pl.BlockSpec((1, tn), lambda j, i: (0, j)),
        ],
        out_specs=pl.BlockSpec((tm, tn), lambda j, i: (i, j)),
        compiler_params=pltpu.CompilerParams(
            dimension_semantics=("parallel", "parallel"),
            vmem_limit_bytes=VMEM_LIMIT),
    )(x, wT, b)


# --------------------------------- model -----------------------------------

def forward(params, src, tgt, *, num_heads):
    """src, tgt: (S, N) int32.  tgt is unused (the reference forward overwrites
    it).  Returns (S, N, vocab) float32, matching PyTorch batch_first=False."""
    del tgt
    S, N = src.shape
    emb = params["embedding"]
    V, E = emb.shape

    # embedding gather (memory-bound, left to XLA); internal layout (N, S, E)
    x = jnp.take(emb, src.T, axis=0).reshape(N * S, E)

    for p in params["enc_layers"]:
        x = mha_block(x, x, p["self_attn"], p["norm1_g"], p["norm1_b"],
                      num_heads=num_heads, n_batch=N, is_self=True)
        x = ffn_block(x, p["lin1_wT"], p["lin1_b"], p["lin2_wT"], p["lin2_b"],
                      p["norm2_g"], p["norm2_b"])
    encoded2 = x                                         # (N*S, E)

    # ---- tiny pooled bottleneck: plain XLA (sub-128 lane outputs) ----------
    # TODO(synk): target_dim=6 path stays in XLA (masked partial stores in
    # Pallas would cost more than they save).
    pooled = jnp.mean(encoded2.reshape(N, S, E), axis=1)          # mean over S
    compressed = pooled @ params["fc1_wT"] + params["fc1_b"]      # (N, target)
    t = compressed @ params["fc2_wT"] + params["fc2_b"]           # (N, E)
    y = jnp.broadcast_to(t[:, None, :], (N, S, E)).reshape(N * S, E)

    for p in params["dec_layers"]:
        y = mha_block(y, y, p["self_attn"], p["norm1_g"], p["norm1_b"],
                      num_heads=num_heads, n_batch=N, is_self=True)
        y = mha_block(y, encoded2, p["cross_attn"], p["norm2_g"], p["norm2_b"],
                      num_heads=num_heads, n_batch=N, is_self=False)
        y = ffn_block(y, p["lin1_wT"], p["lin1_b"], p["lin2_wT"], p["lin2_b"],
                      p["norm3_g"], p["norm3_b"])

    out = pallas_linear(y, params["fc3_wT"], params["fc3_b"])     # (N*S, V)
    # single output-layout transpose back to PyTorch's (S, N, V)
    return out.reshape(N, S, V).transpose(1, 0, 2)


# --------------------------- parameter creation -----------------------------

def init_params(key, vocab_size, embed_size, num_heads, num_layers, target_dim,
                ffn_dim):
    state = {"key": key}

    def nxt():
        state["key"], sub = jax.random.split(state["key"])
        return sub

    def dense(shape, scale=0.05):
        return scale * jax.random.normal(nxt(), shape, dtype=jnp.float32)

    def attn_params():
        # weights stored pre-transposed (x @ W^T  ->  x @ wT), and Q/K/V kept
        # as separate (E, E) arrays to avoid any in-kernel lane slicing.
        return dict(
            wqT=dense((embed_size, embed_size)), bq=dense((1, embed_size)),
            wkT=dense((embed_size, embed_size)), bk=dense((1, embed_size)),
            wvT=dense((embed_size, embed_size)), bv=dense((1, embed_size)),
            woT=dense((embed_size, embed_size)), bo=dense((1, embed_size)),
        )

    def ones(n):
        return jnp.ones((1, n), jnp.float32)

    def zeros(n):
        return jnp.zeros((1, n), jnp.float32)

    def enc_layer_params():
        return dict(
            self_attn=attn_params(),
            lin1_wT=dense((embed_size, ffn_dim)), lin1_b=dense((1, ffn_dim)),
            lin2_wT=dense((ffn_dim, embed_size)), lin2_b=dense((1, embed_size)),
            norm1_g=ones(embed_size), norm1_b=zeros(embed_size),
            norm2_g=ones(embed_size), norm2_b=zeros(embed_size),
        )

    def dec_layer_params():
        d = enc_layer_params()
        d["cross_attn"] = attn_params()
        d["norm3_g"] = ones(embed_size)
        d["norm3_b"] = zeros(embed_size)
        return d

    return dict(
        embedding=dense((vocab_size, embed_size), scale=1.0),
        enc_layers=[enc_layer_params() for _ in range(num_layers)],
        dec_layers=[dec_layer_params() for _ in range(num_layers)],
        fc1_wT=dense((embed_size, target_dim)), fc1_b=dense((1, target_dim)),
        fc2_wT=dense((target_dim, embed_size)), fc2_b=dense((1, embed_size)),
        fc3_wT=dense((embed_size, vocab_size)), fc3_b=dense((1, vocab_size)),
    )


# --------------------------------- main -------------------------------------

if __name__ == "__main__":
    # small, TPU-friendly shapes consistent with the module
    # (defaults 256/8/6/2048 scaled down; E a multiple of 128 -> lane dense)
    VOCAB, EMBED, HEADS, LAYERS, TARGET, FFN = 128, 128, 4, 2, 6, 256
    S, N = 8, 2   # (seq_len, batch) — seq-first interface like PyTorch

    key = jax.random.PRNGKey(0)
    pkey, skey, tkey = jax.random.split(key, 3)
    params = init_params(pkey, VOCAB, EMBED, HEADS, LAYERS, TARGET, FFN)

    src = jax.random.randint(skey, (S, N), 0, VOCAB, dtype=jnp.int32)
    tgt = jax.random.randint(tkey, (S, N), 0, VOCAB, dtype=jnp.int32)  # unused

    fwd = jax.jit(functools.partial(forward, num_heads=HEADS))
    out = jax.block_until_ready(fwd(params, src, tgt))

    assert out.shape == (S, N, VOCAB), out.shape
    assert out.dtype == jnp.float32
    assert bool(jnp.all(jnp.isfinite(out)))
    print("KERNEL_OK")
</pallas_src>

<mosaic_0001>
module attributes {stable_mosaic.version = 11 : i64} {
  func.func @_ffn_block_kernel(%arg0: i32, %arg1: memref<16x128xf32, #tpu.memory_space<vmem>>, %arg2: memref<128x256xf32, #tpu.memory_space<vmem>>, %arg3: memref<1x256xf32, #tpu.memory_space<vmem>>, %arg4: memref<256x128xf32, #tpu.memory_space<vmem>>, %arg5: memref<1x128xf32, #tpu.memory_space<vmem>>, %arg6: memref<1x128xf32, #tpu.memory_space<vmem>>, %arg7: memref<1x128xf32, #tpu.memory_space<vmem>>, %arg8: memref<16x128xf32, #tpu.memory_space<vmem>>) attributes {dimension_semantics = [#tpu.dimension_semantics<parallel>], iteration_bounds = array<i64: 1>, scalar_prefetch = 0 : i64, scratch_operands = 0 : i64, tpu.core_type = #tpu.core_type<tc>, window_params = [{transform_indices = @transform_0, window_bounds = array<i64: 16, 128>}, {pipeline_mode = #tpu.pipeline_mode<synchronous>, transform_indices = @transform_1, window_bounds = array<i64: 128, 256>}, {pipeline_mode = #tpu.pipeline_mode<synchronous>, transform_indices = @transform_2, window_bounds = array<i64: 1, 256>}, {pipeline_mode = #tpu.pipeline_mode<synchronous>, transform_indices = @transform_3, window_bounds = array<i64: 256, 128>}, {pipeline_mode = #tpu.pipeline_mode<synchronous>, transform_indices = @transform_4, window_bounds = array<i64: 1, 128>}, {pipeline_mode = #tpu.pipeline_mode<synchronous>, transform_indices = @transform_5, window_bounds = array<i64: 1, 128>}, {pipeline_mode = #tpu.pipeline_mode<synchronous>, transform_indices = @transform_6, window_bounds = array<i64: 1, 128>}, {transform_indices = @transform_7, window_bounds = array<i64: 16, 128>}]} {
    %c0 = arith.constant 0 : index
    %c0_0 = arith.constant 0 : index
    %0 = vector.load %arg1[%c0, %c0_0] : memref<16x128xf32, #tpu.memory_space<vmem>>, vector<16x128xf32>
    %c0_1 = arith.constant 0 : index
    %c0_2 = arith.constant 0 : index
    %1 = vector.load %arg2[%c0_1, %c0_2] : memref<128x256xf32, #tpu.memory_space<vmem>>, vector<128x256xf32>
    %cst = arith.constant dense<0.000000e+00> : vector<16x256xf32>
    %2 = tpu.matmul %0, %1, %cst {dimension_numbers = #tpu.dot_dimension_numbers<[1], [0], [0], [1], [0, 0, 1, 1], [], []>} : vector<16x128xf32>, vector<128x256xf32>, vector<16x256xf32> -> vector<16x256xf32>
    %c0_3 = arith.constant 0 : index
    %c0_4 = arith.constant 0 : index
    %3 = vector.load %arg3[%c0_3, %c0_4] : memref<1x256xf32, #tpu.memory_space<vmem>>, vector<1x256xf32>
    %4 = vector.broadcast %3 : vector<1x256xf32> to vector<16x256xf32>
    %5 = arith.addf %2, %4 : vector<16x256xf32>
    %cst_5 = arith.constant 0.000000e+00 : f32
    %6 = vector.broadcast %cst_5 : f32 to vector<16x256xf32>
    %7 = arith.maximumf %5, %6 : vector<16x256xf32>
    %c0_6 = arith.constant 0 : index
    %c0_7 = arith.constant 0 : index
    %8 = vector.load %arg4[%c0_6, %c0_7] : memref<256x128xf32, #tpu.memory_space<vmem>>, vector<256x128xf32>
    %cst_8 = arith.constant dense<0.000000e+00> : vector<16x128xf32>
    %9 = tpu.matmul %7, %8, %cst_8 {dimension_numbers = #tpu.dot_dimension_numbers<[1], [0], [0], [1], [0, 0, 1, 1], [], []>} : vector<16x256xf32>, vector<256x128xf32>, vector<16x128xf32> -> vector<16x128xf32>
    %c0_9 = arith.constant 0 : index
    %c0_10 = arith.constant 0 : index
    %10 = vector.load %arg5[%c0_9, %c0_10] : memref<1x128xf32, #tpu.memory_space<vmem>>, vector<1x128xf32>
    %11 = vector.broadcast %10 : vector<1x128xf32> to vector<16x128xf32>
    %12 = arith.addf %9, %11 : vector<16x128xf32>
    %13 = arith.addf %0, %12 : vector<16x128xf32>
    %cst_11 = arith.constant dense<0.000000e+00> : vector<16xf32>
    %14 = vector.multi_reduction <add>, %13, %cst_11 [1] : vector<16x128xf32> to vector<16xf32>
    %15 = vector.shape_cast %14 : vector<16xf32> to vector<16x1xf32>
    %cst_12 = arith.constant 1.280000e+02 : f32
    %16 = vector.broadcast %cst_12 : f32 to vector<16x1xf32>
    %17 = arith.divf %15, %16 : vector<16x1xf32>
    %18 = vector.broadcast %17 : vector<16x1xf32> to vector<16x128xf32>
    %19 = arith.subf %13, %18 : vector<16x128xf32>
    %20 = arith.mulf %19, %19 : vector<16x128xf32>
    %cst_13 = arith.constant dense<0.000000e+00> : vector<16xf32>
    %21 = vector.multi_reduction <add>, %20, %cst_13 [1] : vector<16x128xf32> to vector<16xf32>
    %22 = vector.shape_cast %21 : vector<16xf32> to vector<16x1xf32>
    %cst_14 = arith.constant 1.280000e+02 : f32
    %23 = vector.broadcast %cst_14 : f32 to vector<16x1xf32>
    %24 = arith.divf %22, %23 : vector<16x1xf32>
    %25 = vector.broadcast %17 : vector<16x1xf32> to vector<16x128xf32>
    %26 = arith.subf %13, %25 : vector<16x128xf32>
    %cst_15 = arith.constant 9.99999974E-6 : f32
    %27 = vector.broadcast %cst_15 : f32 to vector<16x1xf32>
    %28 = arith.addf %24, %27 : vector<16x1xf32>
    %29 = math.rsqrt %28 : vector<16x1xf32>
    %30 = vector.broadcast %29 : vector<16x1xf32> to vector<16x128xf32>
    %31 = arith.mulf %26, %30 : vector<16x128xf32>
    %c0_16 = arith.constant 0 : index
    %c0_17 = arith.constant 0 : index
    %32 = vector.load %arg6[%c0_16, %c0_17] : memref<1x128xf32, #tpu.memory_space<vmem>>, vector<1x128xf32>
    %33 = vector.broadcast %32 : vector<1x128xf32> to vector<16x128xf32>
    %34 = arith.mulf %31, %33 : vector<16x128xf32>
    %c0_18 = arith.constant 0 : index
    %c0_19 = arith.constant 0 : index
    %35 = vector.load %arg7[%c0_18, %c0_19] : memref<1x128xf32, #tpu.memory_space<vmem>>, vector<1x128xf32>
    %36 = vector.broadcast %35 : vector<1x128xf32> to vector<16x128xf32>
    %37 = arith.addf %34, %36 : vector<16x128xf32>
    %c0_20 = arith.constant 0 : index
    %c0_21 = arith.constant 0 : index
    %38 = vector.load %arg8[%c0_20, %c0_21] : memref<16x128xf32, #tpu.memory_space<vmem>>, vector<16x128xf32>
    tpu.vector_store %arg8[%c0_20, %c0_21], %37 {strides = array<i32>} : memref<16x128xf32, #tpu.memory_space<vmem>>, vector<16x128xf32>,
    return
  }
  func.func @transform_0(%arg0: i32) -> (i32, i32) {
    %c0_i32 = arith.constant 0 : i32
    %c0_i32_0 = arith.constant 0 : i32
    return %arg0, %c0_i32 : i32, i32
  }
  func.func @transform_1(%arg0: i32) -> (i32, i32) {
    %c0_i32 = arith.constant 0 : i32
    %c0_i32_0 = arith.constant 0 : i32
    %c0_i32_1 = arith.constant 0 : i32
    return %c0_i32, %c0_i32_0 : i32, i32
  }
  func.func @transform_2(%arg0: i32) -> (i32, i32) {
    %c0_i32 = arith.constant 0 : i32
    %c0_i32_0 = arith.constant 0 : i32
    %c0_i32_1 = arith.constant 0 : i32
    return %c0_i32, %c0_i32_0 : i32, i32
  }
  func.func @transform_3(%arg0: i32) -> (i32, i32) {
    %c0_i32 = arith.constant 0 : i32
    %c0_i32_0 = arith.constant 0 : i32
    %c0_i32_1 = arith.constant 0 : i32
    return %c0_i32, %c0_i32_0 : i32, i32
  }
  func.func @transform_4(%arg0: i32) -> (i32, i32) {
    %c0_i32 = arith.constant 0 : i32
    %c0_i32_0 = arith.constant 0 : i32
    %c0_i32_1 = arith.constant 0 : i32
    return %c0_i32, %c0_i32_0 : i32, i32
  }
  func.func @transform_5(%arg0: i32) -> (i32, i32) {
    %c0_i32 = arith.constant 0 : i32
    %c0_i32_0 = arith.constant 0 : i32
    %c0_i32_1 = arith.constant 0 : i32
    return %c0_i32, %c0_i32_0 : i32, i32
  }
  func.func @transform_6(%arg0: i32) -> (i32, i32) {
    %c0_i32 = arith.constant 0 : i32
    %c0_i32_0 = arith.constant 0 : i32
    %c0_i32_1 = arith.constant 0 : i32
    return %c0_i32, %c0_i32_0 : i32, i32
  }
  func.func @transform_7(%arg0: i32) -> (i32, i32) {
    %c0_i32 = arith.constant 0 : i32
    %c0_i32_0 = arith.constant 0 : i32
    return %arg0, %c0_i32 : i32, i32
  }
}

module attributes {stable_mosaic.version = 11 : i64} {
  func.func @_mha_block_kernel(%arg0: i32, %arg1: memref<8x128xf32, #tpu.memory_space<vmem>>, %arg2: memref<128x128xf32, #tpu.memory_space<vmem>>, %arg3: memref<1x128xf32, #tpu.memory_space<vmem>>, %arg4: memref<128x128xf32, #tpu.memory_space<vmem>>, %arg5: memref<1x128xf32, #tpu.memory_space<vmem>>, %arg6: memref<128x128xf32, #tpu.memory_space<vmem>>, %arg7: memref<1x128xf32, #tpu.memory_space<vmem>>, %arg8: memref<128x128xf32, #tpu.memory_space<vmem>>, %arg9: memref<1x128xf32, #tpu.memory_space<vmem>>, %arg10: memref<1x128xf32, #tpu.memory_space<vmem>>, %arg11: memref<1x128xf32, #tpu.memory_space<vmem>>, %arg12: memref<8x128xf32, #tpu.memory_space<vmem>>, %arg13: memref<8x128xf32, #tpu.memory_space<vmem>>) attributes {dimension_semantics = [#tpu.dimension_semantics<parallel>], iteration_bounds = array<i64: 2>, scalar_prefetch = 0 : i64, scratch_operands = 1 : i64, tpu.core_type = #tpu.core_type<tc>, window_params = [{transform_indices = @transform_0, window_bounds = array<i64: 8, 128>}, {pipeline_mode = #tpu.pipeline_mode<synchronous>, transform_indices = @transform_1, window_bounds = array<i64: 128, 128>}, {pipeline_mode = #tpu.pipeline_mode<synchronous>, transform_indices = @transform_2, window_bounds = array<i64: 1, 128>}, {pipeline_mode = #tpu.pipeline_mode<synchronous>, transform_indices = @transform_3, window_bounds = array<i64: 128, 128>}, {pipeline_mode = #tpu.pipeline_mode<synchronous>, transform_indices = @transform_4, window_bounds = array<i64: 1, 128>}, {pipeline_mode = #tpu.pipeline_mode<synchronous>, transform_indices = @transform_5, window_bounds = array<i64: 128, 128>}, {pipeline_mode = #tpu.pipeline_mode<synchronous>, transform_indices = @transform_6, window_bounds = array<i64: 1, 128>}, {pipeline_mode = #tpu.pipeline_mode<synchronous>, transform_indices = @transform_7, window_bounds = array<i64: 128, 128>}, {pipeline_mode = #tpu.pipeline_mode<synchronous>, transform_indices = @transform_8, window_bounds = array<i64: 1, 128>}, {pipeline_mode = #tpu.pipeline_mode<synchronous>, transform_indices = @transform_9, window_bounds = array<i64: 1, 128>}, {pipeline_mode = #tpu.pipeline_mode<synchronous>, transform_indices = @transform_10, window_bounds = array<i64: 1, 128>}, {transform_indices = @transform_11, window_bounds = array<i64: 8, 128>}]} {
    %c0 = arith.constant 0 : index
    %c0_0 = arith.constant 0 : index
    %0 = vector.load %arg1[%c0, %c0_0] : memref<8x128xf32, #tpu.memory_space<vmem>>, vector<8x128xf32>
    %c0_1 = arith.constant 0 : index
    %c0_2 = arith.constant 0 : index
    %1 = vector.load %arg2[%c0_1, %c0_2] : memref<128x128xf32, #tpu.memory_space<vmem>>, vector<128x128xf32>
    %cst = arith.constant dense<0.000000e+00> : vector<8x128xf32>
    %2 = tpu.matmul %0, %1, %cst {dimension_numbers = #tpu.dot_dimension_numbers<[1], [0], [0], [1], [0, 0, 1, 1], [], []>} : vector<8x128xf32>, vector<128x128xf32>, vector<8x128xf32> -> vector<8x128xf32>
    %c0_3 = arith.constant 0 : index
    %c0_4 = arith.constant 0 : index
    %3 = vector.load %arg3[%c0_3, %c0_4] : memref<1x128xf32, #tpu.memory_space<vmem>>, vector<1x128xf32>
    %4 = vector.broadcast %3 : vector<1x128xf32> to vector<8x128xf32>
    %5 = arith.addf %2, %4 : vector<8x128xf32>
    %cst_5 = arith.constant 0.176776692 : f32
    %6 = vector.broadcast %cst_5 : f32 to vector<8x128xf32>
    %7 = arith.mulf %5, %6 : vector<8x128xf32>
    %c0_6 = arith.constant 0 : index
    %c0_7 = arith.constant 0 : index
    %8 = vector.load %arg4[%c0_6, %c0_7] : memref<128x128xf32, #tpu.memory_space<vmem>>, vector<128x128xf32>
    %cst_8 = arith.constant dense<0.000000e+00> : vector<8x128xf32>
    %9 = tpu.matmul %0, %8, %cst_8 {dimension_numbers = #tpu.dot_dimension_numbers<[1], [0], [0], [1], [0, 0, 1, 1], [], []>} : vector<8x128xf32>, vector<128x128xf32>, vector<8x128xf32> -> vector<8x128xf32>
    %c0_9 = arith.constant 0 : index
    %c0_10 = arith.constant 0 : index
    %10 = vector.load %arg5[%c0_9, %c0_10] : memref<1x128xf32, #tpu.memory_space<vmem>>, vector<1x128xf32>
    %11 = vector.broadcast %10 : vector<1x128xf32> to vector<8x128xf32>
    %12 = arith.addf %9, %11 : vector<8x128xf32>
    %c0_11 = arith.constant 0 : index
    %c0_12 = arith.constant 0 : index
    %13 = vector.load %arg6[%c0_11, %c0_12] : memref<128x128xf32, #tpu.memory_space<vmem>>, vector<128x128xf32>
    %cst_13 = arith.constant dense<0.000000e+00> : vector<8x128xf32>
    %14 = tpu.matmul %0, %13, %cst_13 {dimension_numbers = #tpu.dot_dimension_numbers<[1], [0], [0], [1], [0, 0, 1, 1], [], []>} : vector<8x128xf32>, vector<128x128xf32>, vector<8x128xf32> -> vector<8x128xf32>
    %c0_14 = arith.constant 0 : index
    %c0_15 = arith.constant 0 : index
    %15 = vector.load %arg7[%c0_14, %c0_15] : memref<1x128xf32, #tpu.memory_space<vmem>>, vector<1x128xf32>
    %16 = vector.broadcast %15 : vector<1x128xf32> to vector<8x128xf32>
    %17 = arith.addf %14, %16 : vector<8x128xf32>
    %18 = vector.extract_strided_slice %7 {offsets = [0, 0], sizes = [8, 32], strides = [1, 1]} : vector<8x128xf32> to vector<8x32xf32>
    %19 = vector.extract_strided_slice %12 {offsets = [0, 0], sizes = [8, 32], strides = [1, 1]} : vector<8x128xf32> to vector<8x32xf32>
    %20 = vector.extract_strided_slice %17 {offsets = [0, 0], sizes = [8, 32], strides = [1, 1]} : vector<8x128xf32> to vector<8x32xf32>
    %cst_16 = arith.constant dense<0.000000e+00> : vector<8x8xf32>
    %21 = tpu.matmul %18, %19, %cst_16 {dimension_numbers = #tpu.dot_dimension_numbers<[1], [1], [0], [0], [0, 0, 1, 0], [], []>} : vector<8x32xf32>, vector<8x32xf32>, vector<8x8xf32> -> vector<8x8xf32>
    %cst_17 = arith.constant dense<0xFF800000> : vector<8xf32>
    %22 = vector.multi_reduction <maximumf>, %21, %cst_17 [1] : vector<8x8xf32> to vector<8xf32>
    %23 = vector.shape_cast %22 : vector<8xf32> to vector<8x1xf32>
    %24 = vector.broadcast %23 : vector<8x1xf32> to vector<8x8xf32>
    %25 = arith.subf %21, %24 : vector<8x8xf32>
    %26 = math.exp %25 : vector<8x8xf32>
    %cst_18 = arith.constant dense<0.000000e+00> : vector<8xf32>
    %27 = vector.multi_reduction <add>, %26, %cst_18 [1] : vector<8x8xf32> to vector<8xf32>
    %28 = vector.shape_cast %27 : vector<8xf32> to vector<8x1xf32>
    %29 = vector.broadcast %28 : vector<8x1xf32> to vector<8x8xf32>
    %30 = arith.divf %26, %29 : vector<8x8xf32>
    %cst_19 = arith.constant dense<0.000000e+00> : vector<8x32xf32>
    %31 = tpu.matmul %30, %20, %cst_19 {dimension_numbers = #tpu.dot_dimension_numbers<[1], [0], [0], [1], [0, 0, 1, 1], [], []>} : vector<8x8xf32>, vector<8x32xf32>, vector<8x32xf32> -> vector<8x32xf32>
    %c0_20 = arith.constant 0 : index
    %c0_21 = arith.constant 0 : index
    %32 = vector.load %arg13[%c0_20, %c0_21] : memref<8x128xf32, #tpu.memory_space<vmem>>, vector<8x32xf32>
    tpu.vector_store %arg13[%c0_20, %c0_21], %31 {strides = array<i32>} : memref<8x128xf32, #tpu.memory_space<vmem>>, vector<8x32xf32>,
    %33 = vector.extract_strided_slice %7 {offsets = [0, 32], sizes = [8, 32], strides = [1, 1]} : vector<8x128xf32> to vector<8x32xf32>
    %34 = vector.extract_strided_slice %12 {offsets = [0, 32], sizes = [8, 32], strides = [1, 1]} : vector<8x128xf32> to vector<8x32xf32>
    %35 = vector.extract_strided_slice %17 {offsets = [0, 32], sizes = [8, 32], strides = [1, 1]} : vector<8x128xf32> to vector<8x32xf32>
    %cst_22 = arith.constant dense<0.000000e+00> : vector<8x8xf32>
    %36 = tpu.matmul %33, %34, %cst_22 {dimension_numbers = #tpu.dot_dimension_numbers<[1], [1], [0], [0], [0, 0, 1, 0], [], []>} : vector<8x32xf32>, vector<8x32xf32>, vector<8x8xf32> -> vector<8x8xf32>
    %cst_23 = arith.constant dense<0xFF800000> : vector<8xf32>
    %37 = vector.multi_reduction <maximumf>, %36, %cst_23 [1] : vector<8x8xf32> to vector<8xf32>
    %38 = vector.shape_cast %37 : vector<8xf32> to vector<8x1xf32>
    %39 = vector.broadcast %38 : vector<8x1xf32> to vector<8x8xf32>
    %40 = arith.subf %36, %39 : vector<8x8xf32>
    %41 = math.exp %40 : vector<8x8xf32>
    %cst_24 = arith.constant dense<0.000000e+00> : vector<8xf32>
    %42 = vector.multi_reduction <add>, %41, %cst_24 [1] : vector<8x8xf32> to vector<8xf32>
    %43 = vector.shape_cast %42 : vector<8xf32> to vector<8x1xf32>
    %44 = vector.broadcast %43 : vector<8x1xf32> to vector<8x8xf32>
    %45 = arith.divf %41, %44 : vector<8x8xf32>
    %cst_25 = arith.constant dense<0.000000e+00> : vector<8x32xf32>
    %46 = tpu.matmul %45, %35, %cst_25 {dimension_numbers = #tpu.dot_dimension_numbers<[1], [0], [0], [1], [0, 0, 1, 1], [], []>} : vector<8x8xf32>, vector<8x32xf32>, vector<8x32xf32> -> vector<8x32xf32>
    %c0_26 = arith.constant 0 : index
    %c32 = arith.constant 32 : index
    %47 = vector.load %arg13[%c0_26, %c32] : memref<8x128xf32, #tpu.memory_space<vmem>>, vector<8x32xf32>
    tpu.vector_store %arg13[%c0_26, %c32], %46 {strides = array<i32>} : memref<8x128xf32, #tpu.memory_space<vmem>>, vector<8x32xf32>,
    %48 = vector.extract_strided_slice %7 {offsets = [0, 64], sizes = [8, 32], strides = [1, 1]} : vector<8x128xf32> to vector<8x32xf32>
    %49 = vector.extract_strided_slice %12 {offsets = [0, 64], sizes = [8, 32], strides = [1, 1]} : vector<8x128xf32> to vector<8x32xf32>
    %50 = vector.extract_strided_slice %17 {offsets = [0, 64], sizes = [8, 32], strides = [1, 1]} : vector<8x128xf32> to vector<8x32xf32>
    %cst_27 = arith.constant dense<0.000000e+00> : vector<8x8xf32>
    %51 = tpu.matmul %48, %49, %cst_27 {dimension_numbers = #tpu.dot_dimension_numbers<[1], [1], [0], [0], [0, 0, 1, 0], [], []>} : vector<8x32xf32>, vector<8x32xf32>, vector<8x8xf32> -> vector<8x8xf32>
    %cst_28 = arith.constant dense<0xFF800000> : vector<8xf32>
    %52 = vector.multi_reduction <maximumf>, %51, %cst_28 [1] : vector<8x8xf32> to vector<8xf32>
    %53 = vector.shape_cast %52 : vector<8xf32> to vector<8x1xf32>
    %54 = vector.broadcast %53 : vector<8x1xf32> to vector<8x8xf32>
    %55 = arith.subf %51, %54 : vector<8x8xf32>
    %56 = math.exp %55 : vector<8x8xf32>
    %cst_29 = arith.constant dense<0.000000e+00> : vector<8xf32>
    %57 = vector.multi_reduction <add>, %56, %cst_29 [1] : vector<8x8xf32> to vector<8xf32>
    %58 = vector.shape_cast %57 : vector<8xf32> to vector<8x1xf32>
    %59 = vector.broadcast %58 : vector<8x1xf32> to vector<8x8xf32>
    %60 = arith.divf %56, %59 : vector<8x8xf32>
    %cst_30 = arith.constant dense<0.000000e+00> : vector<8x32xf32>
    %61 = tpu.matmul %60, %50, %cst_30 {dimension_numbers = #tpu.dot_dimension_numbers<[1], [0], [0], [1], [0, 0, 1, 1], [], []>} : vector<8x8xf32>, vector<8x32xf32>, vector<8x32xf32> -> vector<8x32xf32>
    %c0_31 = arith.constant 0 : index
    %c64 = arith.constant 64 : index
    %62 = vector.load %arg13[%c0_31, %c64] : memref<8x128xf32, #tpu.memory_space<vmem>>, vector<8x32xf32>
    tpu.vector_store %arg13[%c0_31, %c64], %61 {strides = array<i32>} : memref<8x128xf32, #tpu.memory_space<vmem>>, vector<8x32xf32>,
    %63 = vector.extract_strided_slice %7 {offsets = [0, 96], sizes = [8, 32], strides = [1, 1]} : vector<8x128xf32> to vector<8x32xf32>
    %64 = vector.extract_strided_slice %12 {offsets = [0, 96], sizes = [8, 32], strides = [1, 1]} : vector<8x128xf32> to vector<8x32xf32>
    %65 = vector.extract_strided_slice %17 {offsets = [0, 96], sizes = [8, 32], strides = [1, 1]} : vector<8x128xf32> to vector<8x32xf32>
    %cst_32 = arith.constant dense<0.000000e+00> : vector<8x8xf32>
    %66 = tpu.matmul %63, %64, %cst_32 {dimension_numbers = #tpu.dot_dimension_numbers<[1], [1], [0], [0], [0, 0, 1, 0], [], []>} : vector<8x32xf32>, vector<8x32xf32>, vector<8x8xf32> -> vector<8x8xf32>
    %cst_33 = arith.constant dense<0xFF800000> : vector<8xf32>
    %67 = vector.multi_reduction <maximumf>, %66, %cst_33 [1] : vector<8x8xf32> to vector<8xf32>
    %68 = vector.shape_cast %67 : vector<8xf32> to vector<8x1xf32>
    %69 = vector.broadcast %68 : vector<8x1xf32> to vector<8x8xf32>
    %70 = arith.subf %66, %69 : vector<8x8xf32>
    %71 = math.exp %70 : vector<8x8xf32>
    %cst_34 = arith.constant dense<0.000000e+00> : vector<8xf32>
    %72 = vector.multi_reduction <add>, %71, %cst_34 [1] : vector<8x8xf32> to vector<8xf32>
    %73 = vector.shape_cast %72 : vector<8xf32> to vector<8x1xf32>
    %74 = vector.broadcast %73 : vector<8x1xf32> to vector<8x8xf32>
    %75 = arith.divf %71, %74 : vector<8x8xf32>
    %cst_35 = arith.constant dense<0.000000e+00> : vector<8x32xf32>
    %76 = tpu.matmul %75, %65, %cst_35 {dimension_numbers = #tpu.dot_dimension_numbers<[1], [0], [0], [1], [0, 0, 1, 1], [], []>} : vector<8x8xf32>, vector<8x32xf32>, vector<8x32xf32> -> vector<8x32xf32>
    %c0_36 = arith.constant 0 : index
    %c96 = arith.constant 96 : index
    %77 = vector.load %arg13[%c0_36, %c96] : memref<8x128xf32, #tpu.memory_space<vmem>>, vector<8x32xf32>
    tpu.vector_store %arg13[%c0_36, %c96], %76 {strides = array<i32>} : memref<8x128xf32, #tpu.memory_space<vmem>>, vector<8x32xf32>,
    %c0_37 = arith.constant 0 : index
    %c0_38 = arith.constant 0 : index
    %78 = vector.load %arg13[%c0_37, %c0_38] : memref<8x128xf32, #tpu.memory_space<vmem>>, vector<8x128xf32>
    %c0_39 = arith.constant 0 : index
    %c0_40 = arith.constant 0 : index
    %79 = vector.load %arg8[%c0_39, %c0_40] : memref<128x128xf32, #tpu.memory_space<vmem>>, vector<128x128xf32>
    %cst_41 = arith.constant dense<0.000000e+00> : vector<8x128xf32>
    %80 = tpu.matmul %78, %79, %cst_41 {dimension_numbers = #tpu.dot_dimension_numbers<[1], [0], [0], [1], [0, 0, 1, 1], [], []>} : vector<8x128xf32>, vector<128x128xf32>, vector<8x128xf32> -> vector<8x128xf32>
    %c0_42 = arith.constant 0 : index
    %c0_43 = arith.constant 0 : index
    %81 = vector.load %arg9[%c0_42, %c0_43] : memref<1x128xf32, #tpu.memory_space<vmem>>, vector<1x128xf32>
    %82 = vector.broadcast %81 : vector<1x128xf32> to vector<8x128xf32>
    %83 = arith.addf %80, %82 : vector<8x128xf32>
    %84 = arith.addf %0, %83 : vector<8x128xf32>
    %cst_44 = arith.constant dense<0.000000e+00> : vector<8xf32>
    %85 = vector.multi_reduction <add>, %84, %cst_44 [1] : vector<8x128xf32> to vector<8xf32>
    %86 = vector.shape_cast %85 : vector<8xf32> to vector<8x1xf32>
    %cst_45 = arith.constant 1.280000e+02 : f32
    %87 = vector.broadcast %cst_45 : f32 to vector<8x1xf32>
    %88 = arith.divf %86, %87 : vector<8x1xf32>
    %89 = vector.broadcast %88 : vector<8x1xf32> to vector<8x128xf32>
    %90 = arith.subf %84, %89 : vector<8x128xf32>
    %91 = arith.mulf %90, %90 : vector<8x128xf32>
    %cst_46 = arith.constant dense<0.000000e+00> : vector<8xf32>
    %92 = vector.multi_reduction <add>, %91, %cst_46 [1] : vector<8x128xf32> to vector<8xf32>
    %93 = vector.shape_cast %92 : vector<8xf32> to vector<8x1xf32>
    %cst_47 = arith.constant 1.280000e+02 : f32
    %94 = vector.broadcast %cst_47 : f32 to vector<8x1xf32>
    %95 = arith.divf %93, %94 : vector<8x1xf32>
    %96 = vector.broadcast %88 : vector<8x1xf32> to vector<8x128xf32>
    %97 = arith.subf %84, %96 : vector<8x128xf32>
    %cst_48 = arith.constant 9.99999974E-6 : f32
    %98 = vector.broadcast %cst_48 : f32 to vector<8x1xf32>
    %99 = arith.addf %95, %98 : vector<8x1xf32>
    %100 = math.rsqrt %99 : vector<8x1xf32>
    %101 = vector.broadcast %100 : vector<8x1xf32> to vector<8x128xf32>
    %102 = arith.mulf %97, %101 : vector<8x128xf32>
    %c0_49 = arith.constant 0 : index
    %c0_50 = arith.constant 0 : index
    %103 = vector.load %arg10[%c0_49, %c0_50] : memref<1x128xf32, #tpu.memory_space<vmem>>, vector<1x128xf32>
    %104 = vector.broadcast %103 : vector<1x128xf32> to vector<8x128xf32>
    %105 = arith.mulf %102, %104 : vector<8x128xf32>
    %c0_51 = arith.constant 0 : index
    %c0_52 = arith.constant 0 : index
    %106 = vector.load %arg11[%c0_51, %c0_52] : memref<1x128xf32, #tpu.memory_space<vmem>>, vector<1x128xf32>
    %107 = vector.broadcast %106 : vector<1x128xf32> to vector<8x128xf32>
    %108 = arith.addf %105, %107 : vector<8x128xf32>
    %c0_53 = arith.constant 0 : index
    %c0_54 = arith.constant 0 : index
    %109 = vector.load %arg12[%c0_53, %c0_54] : memref<8x128xf32, #tpu.memory_space<vmem>>, vector<8x128xf32>
    tpu.vector_store %arg12[%c0_53, %c0_54], %108 {strides = array<i32>} : memref<8x128xf32, #tpu.memory_space<vmem>>, vector<8x128xf32>,
    return
  }
  func.func @transform_0(%arg0: i32) -> (i32, i32) {
    %c0_i32 = arith.constant 0 : i32
    %c0_i32_0 = arith.constant 0 : i32
    return %arg0, %c0_i32 : i32, i32
  }
  func.func @transform_1(%arg0: i32) -> (i32, i32) {
    %c0_i32 = arith.constant 0 : i32
    %c0_i32_0 = arith.constant 0 : i32
    %c0_i32_1 = arith.constant 0 : i32
    return %c0_i32, %c0_i32_0 : i32, i32
  }
  func.func @transform_2(%arg0: i32) -> (i32, i32) {
    %c0_i32 = arith.constant 0 : i32
    %c0_i32_0 = arith.constant 0 : i32
    %c0_i32_1 = arith.constant 0 : i32
    return %c0_i32, %c0_i32_0 : i32, i32
  }
  func.func @transform_3(%arg0: i32) -> (i32, i32) {
    %c0_i32 = arith.constant 0 : i32
    %c0_i32_0 = arith.constant 0 : i32
    %c0_i32_1 = arith.constant 0 : i32
    return %c0_i32, %c0_i32_0 : i32, i32
  }
  func.func @transform_4(%arg0: i32) -> (i32, i32) {
    %c0_i32 = arith.constant 0 : i32
    %c0_i32_0 = arith.constant 0 : i32
    %c0_i32_1 = arith.constant 0 : i32
    return %c0_i32, %c0_i32_0 : i32, i32
  }
  func.func @transform_5(%arg0: i32) -> (i32, i32) {
    %c0_i32 = arith.constant 0 : i32
    %c0_i32_0 = arith.constant 0 : i32
    %c0_i32_1 = arith.constant 0 : i32
    return %c0_i32, %c0_i32_0 : i32, i32
  }
  func.func @transform_6(%arg0: i32) -> (i32, i32) {
    %c0_i32 = arith.constant 0 : i32
    %c0_i32_0 = arith.constant 0 : i32
    %c0_i32_1 = arith.constant 0 : i32
    return %c0_i32, %c0_i32_0 : i32, i32
  }
  func.func @transform_7(%arg0: i32) -> (i32, i32) {
    %c0_i32 = arith.constant 0 : i32
    %c0_i32_0 = arith.constant 0 : i32
    %c0_i32_1 = arith.constant 0 : i32
    return %c0_i32, %c0_i32_0 : i32, i32
  }
  func.func @transform_8(%arg0: i32) -> (i32, i32) {
    %c0_i32 = arith.constant 0 : i32
    %c0_i32_0 = arith.constant 0 : i32
    %c0_i32_1 = arith.constant 0 : i32
    return %c0_i32, %c0_i32_0 : i32, i32
  }
  func.func @transform_9(%arg0: i32) -> (i32, i32) {
    %c0_i32 = arith.constant 0 : i32
    %c0_i32_0 = arith.constant 0 : i32
    %c0_i32_1 = arith.constant 0 : i32
    return %c0_i32, %c0_i32_0 : i32, i32
  }
  func.func @transform_10(%arg0: i32) -> (i32, i32) {
    %c0_i32 = arith.constant 0 : i32
    %c0_i32_0 = arith.constant 0 : i32
    %c0_i32_1 = arith.constant 0 : i32
    return %c0_i32, %c0_i32_0 : i32, i32
  }
  func.func @transform_11(%arg0: i32) -> (i32, i32) {
    %c0_i32 = arith.constant 0 : i32
    %c0_i32_0 = arith.constant 0 : i32
    return %arg0, %c0_i32 : i32, i32
  }
}

module attributes {stable_mosaic.version = 11 : i64} {
  func.func @_linear_kernel(%arg0: i32, %arg1: i32, %arg2: memref<16x128xf32, #tpu.memory_space<vmem>>, %arg3: memref<128x128xf32, #tpu.memory_space<vmem>>, %arg4: memref<1x128xf32, #tpu.memory_space<vmem>>, %arg5: memref<16x128xf32, #tpu.memory_space<vmem>>) attributes {dimension_semantics = [#tpu.dimension_semantics<parallel>, #tpu.dimension_semantics<parallel>], iteration_bounds = array<i64: 1, 1>, scalar_prefetch = 0 : i64, scratch_operands = 0 : i64, tpu.core_type = #tpu.core_type<tc>, window_params = [{transform_indices = @transform_0, window_bounds = array<i64: 16, 128>}, {transform_indices = @transform_1, window_bounds = array<i64: 128, 128>}, {transform_indices = @transform_2, window_bounds = array<i64: 1, 128>}, {transform_indices = @transform_3, window_bounds = array<i64: 16, 128>}]} {
    %c0 = arith.constant 0 : index
    %c0_0 = arith.constant 0 : index
    %0 = vector.load %arg2[%c0, %c0_0] : memref<16x128xf32, #tpu.memory_space<vmem>>, vector<16x128xf32>
    %c0_1 = arith.constant 0 : index
    %c0_2 = arith.constant 0 : index
    %1 = vector.load %arg3[%c0_1, %c0_2] : memref<128x128xf32, #tpu.memory_space<vmem>>, vector<128x128xf32>
    %cst = arith.constant dense<0.000000e+00> : vector<16x128xf32>
    %2 = tpu.matmul %0, %1, %cst {dimension_numbers = #tpu.dot_dimension_numbers<[1], [0], [0], [1], [0, 0, 1, 1], [], []>} : vector<16x128xf32>, vector<128x128xf32>, vector<16x128xf32> -> vector<16x128xf32>
    %c0_3 = arith.constant 0 : index
    %c0_4 = arith.constant 0 : index
    %3 = vector.load %arg4[%c0_3, %c0_4] : memref<1x128xf32, #tpu.memory_space<vmem>>, vector<1x128xf32>
    %4 = vector.broadcast %3 : vector<1x128xf32> to vector<16x128xf32>
    %5 = arith.addf %2, %4 : vector<16x128xf32>
    %c0_5 = arith.constant 0 : index
    %c0_6 = arith.constant 0 : index
    %6 = vector.load %arg5[%c0_5, %c0_6] : memref<16x128xf32, #tpu.memory_space<vmem>>, vector<16x128xf32>
    tpu.vector_store %arg5[%c0_5, %c0_6], %5 {strides = array<i32>} : memref<16x128xf32, #tpu.memory_space<vmem>>, vector<16x128xf32>,
    return
  }
  func.func @transform_0(%arg0: i32, %arg1: i32) -> (i32, i32) {
    %c0_i32 = arith.constant 0 : i32
    %c0_i32_0 = arith.constant 0 : i32
    return %arg1, %c0_i32 : i32, i32
  }
  func.func @transform_1(%arg0: i32, %arg1: i32) -> (i32, i32) {
    %c0_i32 = arith.constant 0 : i32
    %c0_i32_0 = arith.constant 0 : i32
    return %c0_i32, %arg0 : i32, i32
  }
  func.func @transform_2(%arg0: i32, %arg1: i32) -> (i32, i32) {
    %c0_i32 = arith.constant 0 : i32
    %c0_i32_0 = arith.constant 0 : i32
    return %c0_i32, %arg0 : i32, i32
  }
  func.func @transform_3(%arg0: i32, %arg1: i32) -> (i32, i32) {
    %c0_i32 = arith.constant 0 : i32
    return %arg1, %arg0 : i32, i32
  }
}

module attributes {stable_mosaic.version = 11 : i64} {
  func.func @_mha_block_kernel(%arg0: i32, %arg1: memref<8x128xf32, #tpu.memory_space<vmem>>, %arg2: memref<8x128xf32, #tpu.memory_space<vmem>>, %arg3: memref<128x128xf32, #tpu.memory_space<vmem>>, %arg4: memref<1x128xf32, #tpu.memory_space<vmem>>, %arg5: memref<128x128xf32, #tpu.memory_space<vmem>>, %arg6: memref<1x128xf32, #tpu.memory_space<vmem>>, %arg7: memref<128x128xf32, #tpu.memory_space<vmem>>, %arg8: memref<1x128xf32, #tpu.memory_space<vmem>>, %arg9: memref<128x128xf32, #tpu.memory_space<vmem>>, %arg10: memref<1x128xf32, #tpu.memory_space<vmem>>, %arg11: memref<1x128xf32, #tpu.memory_space<vmem>>, %arg12: memref<1x128xf32, #tpu.memory_space<vmem>>, %arg13: memref<8x128xf32, #tpu.memory_space<vmem>>, %arg14: memref<8x128xf32, #tpu.memory_space<vmem>>) attributes {dimension_semantics = [#tpu.dimension_semantics<parallel>], iteration_bounds = array<i64: 2>, scalar_prefetch = 0 : i64, scratch_operands = 1 : i64, tpu.core_type = #tpu.core_type<tc>, window_params = [{transform_indices = @transform_0, window_bounds = array<i64: 8, 128>}, {transform_indices = @transform_1, window_bounds = array<i64: 8, 128>}, {pipeline_mode = #tpu.pipeline_mode<synchronous>, transform_indices = @transform_2, window_bounds = array<i64: 128, 128>}, {pipeline_mode = #tpu.pipeline_mode<synchronous>, transform_indices = @transform_3, window_bounds = array<i64: 1, 128>}, {pipeline_mode = #tpu.pipeline_mode<synchronous>, transform_indices = @transform_4, window_bounds = array<i64: 128, 128>}, {pipeline_mode = #tpu.pipeline_mode<synchronous>, transform_indices = @transform_5, window_bounds = array<i64: 1, 128>}, {pipeline_mode = #tpu.pipeline_mode<synchronous>, transform_indices = @transform_6, window_bounds = array<i64: 128, 128>}, {pipeline_mode = #tpu.pipeline_mode<synchronous>, transform_indices = @transform_7, window_bounds = array<i64: 1, 128>}, {pipeline_mode = #tpu.pipeline_mode<synchronous>, transform_indices = @transform_8, window_bounds = array<i64: 128, 128>}, {pipeline_mode = #tpu.pipeline_mode<synchronous>, transform_indices = @transform_9, window_bounds = array<i64: 1, 128>}, {pipeline_mode = #tpu.pipeline_mode<synchronous>, transform_indices = @transform_10, window_bounds = array<i64: 1, 128>}, {pipeline_mode = #tpu.pipeline_mode<synchronous>, transform_indices = @transform_11, window_bounds = array<i64: 1, 128>}, {transform_indices = @transform_12, window_bounds = array<i64: 8, 128>}]} {
    %c0 = arith.constant 0 : index
    %c0_0 = arith.constant 0 : index
    %0 = vector.load %arg1[%c0, %c0_0] : memref<8x128xf32, #tpu.memory_space<vmem>>, vector<8x128xf32>
    %c0_1 = arith.constant 0 : index
    %c0_2 = arith.constant 0 : index
    %1 = vector.load %arg2[%c0_1, %c0_2] : memref<8x128xf32, #tpu.memory_space<vmem>>, vector<8x128xf32>
    %c0_3 = arith.constant 0 : index
    %c0_4 = arith.constant 0 : index
    %2 = vector.load %arg3[%c0_3, %c0_4] : memref<128x128xf32, #tpu.memory_space<vmem>>, vector<128x128xf32>
    %cst = arith.constant dense<0.000000e+00> : vector<8x128xf32>
    %3 = tpu.matmul %0, %2, %cst {dimension_numbers = #tpu.dot_dimension_numbers<[1], [0], [0], [1], [0, 0, 1, 1], [], []>} : vector<8x128xf32>, vector<128x128xf32>, vector<8x128xf32> -> vector<8x128xf32>
    %c0_5 = arith.constant 0 : index
    %c0_6 = arith.constant 0 : index
    %4 = vector.load %arg4[%c0_5, %c0_6] : memref<1x128xf32, #tpu.memory_space<vmem>>, vector<1x128xf32>
    %5 = vector.broadcast %4 : vector<1x128xf32> to vector<8x128xf32>
    %6 = arith.addf %3, %5 : vector<8x128xf32>
    %cst_7 = arith.constant 0.176776692 : f32
    %7 = vector.broadcast %cst_7 : f32 to vector<8x128xf32>
    %8 = arith.mulf %6, %7 : vector<8x128xf32>
    %c0_8 = arith.constant 0 : index
    %c0_9 = arith.constant 0 : index
    %9 = vector.load %arg5[%c0_8, %c0_9] : memref<128x128xf32, #tpu.memory_space<vmem>>, vector<128x128xf32>
    %cst_10 = arith.constant dense<0.000000e+00> : vector<8x128xf32>
    %10 = tpu.matmul %1, %9, %cst_10 {dimension_numbers = #tpu.dot_dimension_numbers<[1], [0], [0], [1], [0, 0, 1, 1], [], []>} : vector<8x128xf32>, vector<128x128xf32>, vector<8x128xf32> -> vector<8x128xf32>
    %c0_11 = arith.constant 0 : index
    %c0_12 = arith.constant 0 : index
    %11 = vector.load %arg6[%c0_11, %c0_12] : memref<1x128xf32, #tpu.memory_space<vmem>>, vector<1x128xf32>
    %12 = vector.broadcast %11 : vector<1x128xf32> to vector<8x128xf32>
    %13 = arith.addf %10, %12 : vector<8x128xf32>
    %c0_13 = arith.constant 0 : index
    %c0_14 = arith.constant 0 : index
    %14 = vector.load %arg7[%c0_13, %c0_14] : memref<128x128xf32, #tpu.memory_space<vmem>>, vector<128x128xf32>
    %cst_15 = arith.constant dense<0.000000e+00> : vector<8x128xf32>
    %15 = tpu.matmul %1, %14, %cst_15 {dimension_numbers = #tpu.dot_dimension_numbers<[1], [0], [0], [1], [0, 0, 1, 1], [], []>} : vector<8x128xf32>, vector<128x128xf32>, vector<8x128xf32> -> vector<8x128xf32>
    %c0_16 = arith.constant 0 : index
    %c0_17 = arith.constant 0 : index
    %16 = vector.load %arg8[%c0_16, %c0_17] : memref<1x128xf32, #tpu.memory_space<vmem>>, vector<1x128xf32>
    %17 = vector.broadcast %16 : vector<1x128xf32> to vector<8x128xf32>
    %18 = arith.addf %15, %17 : vector<8x128xf32>
    %19 = vector.extract_strided_slice %8 {offsets = [0, 0], sizes = [8, 32], strides = [1, 1]} : vector<8x128xf32> to vector<8x32xf32>
    %20 = vector.extract_strided_slice %13 {offsets = [0, 0], sizes = [8, 32], strides = [1, 1]} : vector<8x128xf32> to vector<8x32xf32>
    %21 = vector.extract_strided_slice %18 {offsets = [0, 0], sizes = [8, 32], strides = [1, 1]} : vector<8x128xf32> to vector<8x32xf32>
    %cst_18 = arith.constant dense<0.000000e+00> : vector<8x8xf32>
    %22 = tpu.matmul %19, %20, %cst_18 {dimension_numbers = #tpu.dot_dimension_numbers<[1], [1], [0], [0], [0, 0, 1, 0], [], []>} : vector<8x32xf32>, vector<8x32xf32>, vector<8x8xf32> -> vector<8x8xf32>
    %cst_19 = arith.constant dense<0xFF800000> : vector<8xf32>
    %23 = vector.multi_reduction <maximumf>, %22, %cst_19 [1] : vector<8x8xf32> to vector<8xf32>
    %24 = vector.shape_cast %23 : vector<8xf32> to vector<8x1xf32>
    %25 = vector.broadcast %24 : vector<8x1xf32> to vector<8x8xf32>
    %26 = arith.subf %22, %25 : vector<8x8xf32>
    %27 = math.exp %26 : vector<8x8xf32>
    %cst_20 = arith.constant dense<0.000000e+00> : vector<8xf32>
    %28 = vector.multi_reduction <add>, %27, %cst_20 [1] : vector<8x8xf32> to vector<8xf32>
    %29 = vector.shape_cast %28 : vector<8xf32> to vector<8x1xf32>
    %30 = vector.broadcast %29 : vector<8x1xf32> to vector<8x8xf32>
    %31 = arith.divf %27, %30 : vector<8x8xf32>
    %cst_21 = arith.constant dense<0.000000e+00> : vector<8x32xf32>
    %32 = tpu.matmul %31, %21, %cst_21 {dimension_numbers = #tpu.dot_dimension_numbers<[1], [0], [0], [1], [0, 0, 1, 1], [], []>} : vector<8x8xf32>, vector<8x32xf32>, vector<8x32xf32> -> vector<8x32xf32>
    %c0_22 = arith.constant 0 : index
    %c0_23 = arith.constant 0 : index
    %33 = vector.load %arg14[%c0_22, %c0_23] : memref<8x128xf32, #tpu.memory_space<vmem>>, vector<8x32xf32>
    tpu.vector_store %arg14[%c0_22, %c0_23], %32 {strides = array<i32>} : memref<8x128xf32, #tpu.memory_space<vmem>>, vector<8x32xf32>,
    %34 = vector.extract_strided_slice %8 {offsets = [0, 32], sizes = [8, 32], strides = [1, 1]} : vector<8x128xf32> to vector<8x32xf32>
    %35 = vector.extract_strided_slice %13 {offsets = [0, 32], sizes = [8, 32], strides = [1, 1]} : vector<8x128xf32> to vector<8x32xf32>
    %36 = vector.extract_strided_slice %18 {offsets = [0, 32], sizes = [8, 32], strides = [1, 1]} : vector<8x128xf32> to vector<8x32xf32>
    %cst_24 = arith.constant dense<0.000000e+00> : vector<8x8xf32>
    %37 = tpu.matmul %34, %35, %cst_24 {dimension_numbers = #tpu.dot_dimension_numbers<[1], [1], [0], [0], [0, 0, 1, 0], [], []>} : vector<8x32xf32>, vector<8x32xf32>, vector<8x8xf32> -> vector<8x8xf32>
    %cst_25 = arith.constant dense<0xFF800000> : vector<8xf32>
    %38 = vector.multi_reduction <maximumf>, %37, %cst_25 [1] : vector<8x8xf32> to vector<8xf32>
    %39 = vector.shape_cast %38 : vector<8xf32> to vector<8x1xf32>
    %40 = vector.broadcast %39 : vector<8x1xf32> to vector<8x8xf32>
    %41 = arith.subf %37, %40 : vector<8x8xf32>
    %42 = math.exp %41 : vector<8x8xf32>
    %cst_26 = arith.constant dense<0.000000e+00> : vector<8xf32>
    %43 = vector.multi_reduction <add>, %42, %cst_26 [1] : vector<8x8xf32> to vector<8xf32>
    %44 = vector.shape_cast %43 : vector<8xf32> to vector<8x1xf32>
    %45 = vector.broadcast %44 : vector<8x1xf32> to vector<8x8xf32>
    %46 = arith.divf %42, %45 : vector<8x8xf32>
    %cst_27 = arith.constant dense<0.000000e+00> : vector<8x32xf32>
    %47 = tpu.matmul %46, %36, %cst_27 {dimension_numbers = #tpu.dot_dimension_numbers<[1], [0], [0], [1], [0, 0, 1, 1], [], []>} : vector<8x8xf32>, vector<8x32xf32>, vector<8x32xf32> -> vector<8x32xf32>
    %c0_28 = arith.constant 0 : index
    %c32 = arith.constant 32 : index
    %48 = vector.load %arg14[%c0_28, %c32] : memref<8x128xf32, #tpu.memory_space<vmem>>, vector<8x32xf32>
    tpu.vector_store %arg14[%c0_28, %c32], %47 {strides = array<i32>} : memref<8x128xf32, #tpu.memory_space<vmem>>, vector<8x32xf32>,
    %49 = vector.extract_strided_slice %8 {offsets = [0, 64], sizes = [8, 32], strides = [1, 1]} : vector<8x128xf32> to vector<8x32xf32>
    %50 = vector.extract_strided_slice %13 {offsets = [0, 64], sizes = [8, 32], strides = [1, 1]} : vector<8x128xf32> to vector<8x32xf32>
    %51 = vector.extract_strided_slice %18 {offsets = [0, 64], sizes = [8, 32], strides = [1, 1]} : vector<8x128xf32> to vector<8x32xf32>
    %cst_29 = arith.constant dense<0.000000e+00> : vector<8x8xf32>
    %52 = tpu.matmul %49, %50, %cst_29 {dimension_numbers = #tpu.dot_dimension_numbers<[1], [1], [0], [0], [0, 0, 1, 0], [], []>} : vector<8x32xf32>, vector<8x32xf32>, vector<8x8xf32> -> vector<8x8xf32>
    %cst_30 = arith.constant dense<0xFF800000> : vector<8xf32>
    %53 = vector.multi_reduction <maximumf>, %52, %cst_30 [1] : vector<8x8xf32> to vector<8xf32>
    %54 = vector.shape_cast %53 : vector<8xf32> to vector<8x1xf32>
    %55 = vector.broadcast %54 : vector<8x1xf32> to vector<8x8xf32>
    %56 = arith.subf %52, %55 : vector<8x8xf32>
    %57 = math.exp %56 : vector<8x8xf32>
    %cst_31 = arith.constant dense<0.000000e+00> : vector<8xf32>
    %58 = vector.multi_reduction <add>, %57, %cst_31 [1] : vector<8x8xf32> to vector<8xf32>
    %59 = vector.shape_cast %58 : vector<8xf32> to vector<8x1xf32>
    %60 = vector.broadcast %59 : vector<8x1xf32> to vector<8x8xf32>
    %61 = arith.divf %57, %60 : vector<8x8xf32>
    %cst_32 = arith.constant dense<0.000000e+00> : vector<8x32xf32>
    %62 = tpu.matmul %61, %51, %cst_32 {dimension_numbers = #tpu.dot_dimension_numbers<[1], [0], [0], [1], [0, 0, 1, 1], [], []>} : vector<8x8xf32>, vector<8x32xf32>, vector<8x32xf32> -> vector<8x32xf32>
    %c0_33 = arith.constant 0 : index
    %c64 = arith.constant 64 : index
    %63 = vector.load %arg14[%c0_33, %c64] : memref<8x128xf32, #tpu.memory_space<vmem>>, vector<8x32xf32>
    tpu.vector_store %arg14[%c0_33, %c64], %62 {strides = array<i32>} : memref<8x128xf32, #tpu.memory_space<vmem>>, vector<8x32xf32>,
    %64 = vector.extract_strided_slice %8 {offsets = [0, 96], sizes = [8, 32], strides = [1, 1]} : vector<8x128xf32> to vector<8x32xf32>
    %65 = vector.extract_strided_slice %13 {offsets = [0, 96], sizes = [8, 32], strides = [1, 1]} : vector<8x128xf32> to vector<8x32xf32>
    %66 = vector.extract_strided_slice %18 {offsets = [0, 96], sizes = [8, 32], strides = [1, 1]} : vector<8x128xf32> to vector<8x32xf32>
    %cst_34 = arith.constant dense<0.000000e+00> : vector<8x8xf32>
    %67 = tpu.matmul %64, %65, %cst_34 {dimension_numbers = #tpu.dot_dimension_numbers<[1], [1], [0], [0], [0, 0, 1, 0], [], []>} : vector<8x32xf32>, vector<8x32xf32>, vector<8x8xf32> -> vector<8x8xf32>
    %cst_35 = arith.constant dense<0xFF800000> : vector<8xf32>
    %68 = vector.multi_reduction <maximumf>, %67, %cst_35 [1] : vector<8x8xf32> to vector<8xf32>
    %69 = vector.shape_cast %68 : vector<8xf32> to vector<8x1xf32>
    %70 = vector.broadcast %69 : vector<8x1xf32> to vector<8x8xf32>
    %71 = arith.subf %67, %70 : vector<8x8xf32>
    %72 = math.exp %71 : vector<8x8xf32>
    %cst_36 = arith.constant dense<0.000000e+00> : vector<8xf32>
    %73 = vector.multi_reduction <add>, %72, %cst_36 [1] : vector<8x8xf32> to vector<8xf32>
    %74 = vector.shape_cast %73 : vector<8xf32> to vector<8x1xf32>
    %75 = vector.broadcast %74 : vector<8x1xf32> to vector<8x8xf32>
    %76 = arith.divf %72, %75 : vector<8x8xf32>
    %cst_37 = arith.constant dense<0.000000e+00> : vector<8x32xf32>
    %77 = tpu.matmul %76, %66, %cst_37 {dimension_numbers = #tpu.dot_dimension_numbers<[1], [0], [0], [1], [0, 0, 1, 1], [], []>} : vector<8x8xf32>, vector<8x32xf32>, vector<8x32xf32> -> vector<8x32xf32>
    %c0_38 = arith.constant 0 : index
    %c96 = arith.constant 96 : index
    %78 = vector.load %arg14[%c0_38, %c96] : memref<8x128xf32, #tpu.memory_space<vmem>>, vector<8x32xf32>
    tpu.vector_store %arg14[%c0_38, %c96], %77 {strides = array<i32>} : memref<8x128xf32, #tpu.memory_space<vmem>>, vector<8x32xf32>,
    %c0_39 = arith.constant 0 : index
    %c0_40 = arith.constant 0 : index
    %79 = vector.load %arg14[%c0_39, %c0_40] : memref<8x128xf32, #tpu.memory_space<vmem>>, vector<8x128xf32>
    %c0_41 = arith.constant 0 : index
    %c0_42 = arith.constant 0 : index
    %80 = vector.load %arg9[%c0_41, %c0_42] : memref<128x128xf32, #tpu.memory_space<vmem>>, vector<128x128xf32>
    %cst_43 = arith.constant dense<0.000000e+00> : vector<8x128xf32>
    %81 = tpu.matmul %79, %80, %cst_43 {dimension_numbers = #tpu.dot_dimension_numbers<[1], [0], [0], [1], [0, 0, 1, 1], [], []>} : vector<8x128xf32>, vector<128x128xf32>, vector<8x128xf32> -> vector<8x128xf32>
    %c0_44 = arith.constant 0 : index
    %c0_45 = arith.constant 0 : index
    %82 = vector.load %arg10[%c0_44, %c0_45] : memref<1x128xf32, #tpu.memory_space<vmem>>, vector<1x128xf32>
    %83 = vector.broadcast %82 : vector<1x128xf32> to vector<8x128xf32>
    %84 = arith.addf %81, %83 : vector<8x128xf32>
    %85 = arith.addf %0, %84 : vector<8x128xf32>
    %cst_46 = arith.constant dense<0.000000e+00> : vector<8xf32>
    %86 = vector.multi_reduction <add>, %85, %cst_46 [1] : vector<8x128xf32> to vector<8xf32>
    %87 = vector.shape_cast %86 : vector<8xf32> to vector<8x1xf32>
    %cst_47 = arith.constant 1.280000e+02 : f32
    %88 = vector.broadcast %cst_47 : f32 to vector<8x1xf32>
    %89 = arith.divf %87, %88 : vector<8x1xf32>
    %90 = vector.broadcast %89 : vector<8x1xf32> to vector<8x128xf32>
    %91 = arith.subf %85, %90 : vector<8x128xf32>
    %92 = arith.mulf %91, %91 : vector<8x128xf32>
    %cst_48 = arith.constant dense<0.000000e+00> : vector<8xf32>
    %93 = vector.multi_reduction <add>, %92, %cst_48 [1] : vector<8x128xf32> to vector<8xf32>
    %94 = vector.shape_cast %93 : vector<8xf32> to vector<8x1xf32>
    %cst_49 = arith.constant 1.280000e+02 : f32
    %95 = vector.broadcast %cst_49 : f32 to vector<8x1xf32>
    %96 = arith.divf %94, %95 : vector<8x1xf32>
    %97 = vector.broadcast %89 : vector<8x1xf32> to vector<8x128xf32>
    %98 = arith.subf %85, %97 : vector<8x128xf32>
    %cst_50 = arith.constant 9.99999974E-6 : f32
    %99 = vector.broadcast %cst_50 : f32 to vector<8x1xf32>
    %100 = arith.addf %96, %99 : vector<8x1xf32>
    %101 = math.rsqrt %100 : vector<8x1xf32>
    %102 = vector.broadcast %101 : vector<8x1xf32> to vector<8x128xf32>
    %103 = arith.mulf %98, %102 : vector<8x128xf32>
    %c0_51 = arith.constant 0 : index
    %c0_52 = arith.constant 0 : index
    %104 = vector.load %arg11[%c0_51, %c0_52] : memref<1x128xf32, #tpu.memory_space<vmem>>, vector<1x128xf32>
    %105 = vector.broadcast %104 : vector<1x128xf32> to vector<8x128xf32>
    %106 = arith.mulf %103, %105 : vector<8x128xf32>
    %c0_53 = arith.constant 0 : index
    %c0_54 = arith.constant 0 : index
    %107 = vector.load %arg12[%c0_53, %c0_54] : memref<1x128xf32, #tpu.memory_space<vmem>>, vector<1x128xf32>
    %108 = vector.broadcast %107 : vector<1x128xf32> to vector<8x128xf32>
    %109 = arith.addf %106, %108 : vector<8x128xf32>
    %c0_55 = arith.constant 0 : index
    %c0_56 = arith.constant 0 : index
    %110 = vector.load %arg13[%c0_55, %c0_56] : memref<8x128xf32, #tpu.memory_space<vmem>>, vector<8x128xf32>
    tpu.vector_store %arg13[%c0_55, %c0_56], %109 {strides = array<i32>} : memref<8x128xf32, #tpu.memory_space<vmem>>, vector<8x128xf32>,
    return
  }
  func.func @transform_0(%arg0: i32) -> (i32, i32) {
    %c0_i32 = arith.constant 0 : i32
    %c0_i32_0 = arith.constant 0 : i32
    return %arg0, %c0_i32 : i32, i32
  }
  func.func @transform_1(%arg0: i32) -> (i32, i32) {
    %c0_i32 = arith.constant 0 : i32
    %c0_i32_0 = arith.constant 0 : i32
    return %arg0, %c0_i32 : i32, i32
  }
  func.func @transform_2(%arg0: i32) -> (i32, i32) {
    %c0_i32 = arith.constant 0 : i32
    %c0_i32_0 = arith.constant 0 : i32
    %c0_i32_1 = arith.constant 0 : i32
    return %c0_i32, %c0_i32_0 : i32, i32
  }
  func.func @transform_3(%arg0: i32) -> (i32, i32) {
    %c0_i32 = arith.constant 0 : i32
    %c0_i32_0 = arith.constant 0 : i32
    %c0_i32_1 = arith.constant 0 : i32
    return %c0_i32, %c0_i32_0 : i32, i32
  }
  func.func @transform_4(%arg0: i32) -> (i32, i32) {
    %c0_i32 = arith.constant 0 : i32
    %c0_i32_0 = arith.constant 0 : i32
    %c0_i32_1 = arith.constant 0 : i32
    return %c0_i32, %c0_i32_0 : i32, i32
  }
  func.func @transform_5(%arg0: i32) -> (i32, i32) {
    %c0_i32 = arith.constant 0 : i32
    %c0_i32_0 = arith.constant 0 : i32
    %c0_i32_1 = arith.constant 0 : i32
    return %c0_i32, %c0_i32_0 : i32, i32
  }
  func.func @transform_6(%arg0: i32) -> (i32, i32) {
    %c0_i32 = arith.constant 0 : i32
    %c0_i32_0 = arith.constant 0 : i32
    %c0_i32_1 = arith.constant 0 : i32
    return %c0_i32, %c0_i32_0 : i32, i32
  }
  func.func @transform_7(%arg0: i32) -> (i32, i32) {
    %c0_i32 = arith.constant 0 : i32
    %c0_i32_0 = arith.constant 0 : i32
    %c0_i32_1 = arith.constant 0 : i32
    return %c0_i32, %c0_i32_0 : i32, i32
  }
  func.func @transform_8(%arg0: i32) -> (i32, i32) {
    %c0_i32 = arith.constant 0 : i32
    %c0_i32_0 = arith.constant 0 : i32
    %c0_i32_1 = arith.constant 0 : i32
    return %c0_i32, %c0_i32_0 : i32, i32
  }
  func.func @transform_9(%arg0: i32) -> (i32, i32) {
    %c0_i32 = arith.constant 0 : i32
    %c0_i32_0 = arith.constant 0 : i32
    %c0_i32_1 = arith.constant 0 : i32
    return %c0_i32, %c0_i32_0 : i32, i32
  }
  func.func @transform_10(%arg0: i32) -> (i32, i32) {
    %c0_i32 = arith.constant 0 : i32
    %c0_i32_0 = arith.constant 0 : i32
    %c0_i32_1 = arith.constant 0 : i32
    return %c0_i32, %c0_i32_0 : i32, i32
  }
  func.func @transform_11(%arg0: i32) -> (i32, i32) {
    %c0_i32 = arith.constant 0 : i32
    %c0_i32_0 = arith.constant 0 : i32
    %c0_i32_1 = arith.constant 0 : i32
    return %c0_i32, %c0_i32_0 : i32, i32
  }
  func.func @transform_12(%arg0: i32) -> (i32, i32) {
    %c0_i32 = arith.constant 0 : i32
    %c0_i32_0 = arith.constant 0 : i32
    return %arg0, %c0_i32 : i32, i32
  }
}

</mosaic_0001>

<llo_original>
// kernel: forward.21
$region0: #{forward.21}
  #allocation0 [shape = 'u32[]', space=smem, size = 0x4, offset = 0x4, fixed_abs, tag = 'smem constant byte address 0x4 - core index']
  #allocation1 [shape = 'u32[144,128]{1,0:T(1,128)}', space=vmem, size = 0x12000, scoped, tag = 'internal scratch']
  %s0 = inlined_call_operand.hbm [shape: f32[16,128], index: 0, kind: input, shape index: {}]
  %s1 = inlined_call_operand.hbm [shape: f32[128,128], index: 1, kind: input, shape index: {}]
  %s2 = inlined_call_operand.hbm [shape: f32[1,128], index: 2, kind: input, shape index: {}]
  %s3 = inlined_call_operand.hbm [shape: f32[16,128], index: 3, kind: output, shape index: {}]
  %s4 = sld [smem:[#allocation0]]
  $region34: #{forward.21} parent=0
    _
  %s6 = ssub.s32 1, %s4
  %s7 = scalar_select 0, %s6, %s4
  $region1: #{forward.21} parent=0
    #allocation2 [shape = 'u8[8192]{0}', space=vmem, size = 0x2000, scoped, tag = 'input window, operand 0, single buffered']
    #allocation3 [shape = 's32[1]{0}', space=sflag, size = 0x4, scoped, tag = 'scoped memory for forward.21']
    #allocation4 [shape = 's32[1]{0}', space=sflag, size = 0x4, scoped, tag = 'scoped memory for forward.21']
    #allocation5 [shape = 'u8[65536]{0}', space=vmem, size = 0x10000, scoped, tag = 'input window, operand 1, single buffered']
    #allocation6 [shape = 's32[1]{0}', space=sflag, size = 0x4, scoped, tag = 'scoped memory for forward.21']
    #allocation7 [shape = 'u8[512]{0}', space=vmem, size = 0x400, scoped, tag = 'input window, operand 2, single buffered']
    #allocation8 [shape = 'u8[8192]{0}', space=vmem, size = 0x2000, scoped, tag = 'output window, operand 0, single buffered']
    %8 = vsyncpa [#allocation3], 0
    %9 = vsyncpa [#allocation6], 0
    %10 = vsyncpa [#allocation4], 0
    // Predicated region
    $region2: #{forward.21} parent=1 // pred_check
      _
    $region3: #{forward.21} parent=1 // pred_check_branch
      %12 = sbr.rel (0) target = $region5
    $region4: #{forward.21} parent=1 // pred_region
      %s14 = ssub.s32 256, 256
      %15 = vsyncadd [#allocation3], %s14
      %s16 = sshll.u32 [#allocation2], 4
      %s17 = int_to_ptr.vmem [resolvable:$true] %s16
      %22 = dma.hbm_to_vmem [thread:$0]  %s0, 256, %s17, [#allocation3], 128, 128, 8
    $region5: #{forward.21} parent=1 // pred_fallthru
      _
    // Predicated region
    $region6: #{forward.21} parent=1 // pred_check
      _
    $region7: #{forward.21} parent=1 // pred_check_branch
      %24 = sbr.rel (0) target = $region9
    $region8: #{forward.21} parent=1 // pred_region
      %s26 = ssub.s32 2048, 2048
      %27 = vsyncadd [#allocation6], %s26
      %s28 = sshll.u32 [#allocation5], 4
      %s29 = int_to_ptr.vmem [resolvable:$true] %s28
      %34 = dma.hbm_to_vmem [thread:$0]  %s1, 2048, %s29, [#allocation6], 128, 128, 8
    $region9: #{forward.21} parent=1 // pred_fallthru
      _
    // Predicated region
    $region10: #{forward.21} parent=1 // pred_check
      _
    $region11: #{forward.21} parent=1 // pred_check_branch
      %36 = sbr.rel (0) target = $region13
    $region12: #{forward.21} parent=1 // pred_region
      %s38 = ssub.s32 16, 16
      %39 = vsyncadd [#allocation6], %s38
      %s41 = sshll.u32 [#allocation7], 4
      %s42 = int_to_ptr.vmem [resolvable:$true] %s41
      %44 = dma.hbm_to_vmem [thread:$0]  %s2, 16, %s42, [#allocation6]
    $region13: #{forward.21} parent=1 // pred_fallthru
      _
    // Predicated region
    $region14: #{forward.21} parent=1 // pred_check
      _
    $region15: #{forward.21} parent=1 // pred_check_branch
      %46 = sbr.rel (0) target = $region17
    $region16: #{forward.21} parent=1 // pred_region
      %47 = dma.done [#allocation3], 256
    $region17: #{forward.21} parent=1 // pred_fallthru
      _
    // Predicated region
    $region18: #{forward.21} parent=1 // pred_check
      _
    $region19: #{forward.21} parent=1 // pred_check_branch
      %49 = sbr.rel (0) target = $region21
    $region20: #{forward.21} parent=1 // pred_region
      %50 = dma.done [#allocation6], 2048
    $region21: #{forward.21} parent=1 // pred_fallthru
      _
    // Predicated region
    $region22: #{forward.21} parent=1 // pred_check
      _
    $region23: #{forward.21} parent=1 // pred_check_branch
      %52 = sbr.rel (0) target = $region25
    $region24: #{forward.21} parent=1 // pred_region
      %53 = dma.done [#allocation6], 16
    $region25: #{forward.21} parent=1 // pred_fallthru
      _
    %v54 = vld [vmem:[#allocation2] sm:$0xff]
    %v55 = vld [vmem:[#allocation2 + $0x8] sm:$0xff]
    %v56 = vld [vmem:[#allocation5] sm:$0xff]
    %v57 = vld [vmem:[#allocation5 + $0x8] sm:$0xff]
    %v58 = vld [vmem:[#allocation5 + $0x10] sm:$0xff]
    %v59 = vld [vmem:[#allocation5 + $0x18] sm:$0xff]
    %v60 = vld [vmem:[#allocation5 + $0x20] sm:$0xff]
    %v61 = vld [vmem:[#allocation5 + $0x28] sm:$0xff]
    %v62 = vld [vmem:[#allocation5 + $0x30] sm:$0xff]
    %v63 = vld [vmem:[#allocation5 + $0x38] sm:$0xff]
    %v64 = vld [vmem:[#allocation5 + $0x40] sm:$0xff]
    %v65 = vld [vmem:[#allocation5 + $0x48] sm:$0xff]
    %v66 = vld [vmem:[#allocation5 + $0x50] sm:$0xff]
    %v67 = vld [vmem:[#allocation5 + $0x58] sm:$0xff]
    %v68 = vld [vmem:[#allocation5 + $0x60] sm:$0xff]
    %v69 = vld [vmem:[#allocation5 + $0x68] sm:$0xff]
    %v70 = vld [vmem:[#allocation5 + $0x70] sm:$0xff]
    %v71 = vld [vmem:[#allocation5 + $0x78] sm:$0xff]
    %v72 = vld [vmem:[#allocation7] sm:$0x1]
    %v74 = vlaneseq
    %v75 = vshrl.u32 %v74, 7
    %v76 = vsub.s32 0, %v75
    %v77 = vrot.slane %v72, %v76
    %79 = vmatprep.subr.mxu0 0.0
    %80 = vmatpush1.msra.mxu0 %v56
    %81 = vmatprep.subr.mxu0 0.0
    %82 = vmatpush1.msra.mxu0 %v57
    %83 = vmatprep.subr.mxu0 0.0
    %84 = vmatpush1.msra.mxu0 %v58
    %85 = vmatprep.subr.mxu0 0.0
    %86 = vmatpush1.msra.mxu0 %v59
    %87 = vmatprep.subr.mxu0 0.0
    %88 = vmatpush1.msra.mxu0 %v60
    %89 = vmatprep.subr.mxu0 0.0
    %90 = vmatpush1.msra.mxu0 %v61
    %91 = vmatprep.subr.mxu0 0.0
    %92 = vmatpush1.msra.mxu0 %v62
    %93 = vmatprep.subr.mxu0 0.0
    %94 = vmatpush1.msra.mxu0 %v63
    %95 = vmatprep.subr.mxu0 0.0
    %96 = vmatpush1.msra.mxu0 %v64
    %97 = vmatprep.subr.mxu0 0.0
    %98 = vmatpush1.msra.mxu0 %v65
    %99 = vmatprep.subr.mxu0 0.0
    %100 = vmatpush1.msra.mxu0 %v66
    %101 = vmatprep.subr.mxu0 0.0
    %102 = vmatpush1.msra.mxu0 %v67
    %103 = vmatprep.subr.mxu0 0.0
    %104 = vmatpush1.msra.mxu0 %v68
    %105 = vmatprep.subr.mxu0 0.0
    %106 = vmatpush1.msra.mxu0 %v69
    %107 = vmatprep.subr.mxu0 0.0
    %108 = vmatpush1.msra.mxu0 %v70
    %109 = vmatprep.subr.mxu0 0.0
    %110 = vmatpush1.msra.mxu0 %v71
    %111 = vmatprep.subr.mxu0 0.0
    %112 = vmatpush1.msra.mxu0 0.0
    %113 = vmatprep.subr.mxu0 0.0
    %114 = vmatpush1.msra.mxu0 0.0
    %115 = vmatprep.subr.mxu0 0.0
    %116 = vmatpush1.msra.mxu0 0.0
    %117 = vmatprep.subr.mxu0 0.0
    %118 = vmatpush1.msra.mxu0 0.0
    %119 = vmatprep.subr.mxu0 0.0
    %120 = vmatpush1.msra.mxu0 0.0
    %121 = vmatprep.subr.mxu0 0.0
    %122 = vmatpush1.msra.mxu0 0.0
    %123 = vmatprep.subr.mxu0 0.0
    %124 = vmatpush1.msra.mxu0 0.0
    %125 = vmatprep.subr.mxu0 0.0
    %126 = vmatpush1.msra.mxu0 0.0
    %127 = vmatprep.subr.mxu0 0.0
    %128 = vmatpush1.msra.mxu0 0.0
    %129 = vmatprep.subr.mxu0 0.0
    %130 = vmatpush1.msra.mxu0 0.0
    %131 = vmatprep.subr.mxu0 0.0
    %132 = vmatpush1.msra.mxu0 0.0
    %133 = vmatprep.subr.mxu0 0.0
    %134 = vmatpush1.msra.mxu0 0.0
    %135 = vmatprep.subr.mxu0 0.0
    %136 = vmatpush1.msra.mxu0 0.0
    %137 = vmatprep.subr.mxu0 0.0
    %138 = vmatpush1.msra.mxu0 0.0
    %139 = vmatprep.subr.mxu0 0.0
    %140 = vmatpush1.msra.mxu0 0.0
    %141 = vmatprep.subr.mxu0 0.0
    %142 = vmatpush1.msra.mxu0 0.0
    %143 = vmatprep.mubr.f32.mxu0 0.0
    %144 = vmatmul.mubr.f32.gmra.mrb[0].mxu0 %v54
    %v145 = vpop.f32.mrb[0].mxu0
    %v146 = vadd.f32 %v77, %v145
    %v147 = vpop.f32.mrb[0].mxu0
    %148 = vmatprep.mubr.f32.mxu0 0.0
    %149 = vmatmul.mubr.f32.gmra.mrb[0].mxu0 %v55
    %v150 = vpop.f32.mrb[0].mxu0
    %v151 = vadd.f32 %v77, %v150
    %v152 = vpop.f32.mrb[0].mxu0
    %153 = vdwg.mxu0
    %154 = vst [vmem:[#allocation8] sm:$0xff] %v146
    %155 = vst [vmem:[#allocation8 + $0x8] sm:$0xff] %v151
    // Predicated region
    $region26: #{forward.21} parent=1 // pred_check
      _
    $region27: #{forward.21} parent=1 // pred_check_branch
      %157 = sbr.rel (0) target = $region29
    $region28: #{forward.21} parent=1 // pred_region
      %s159 = ssub.s32 256, 256
      %160 = vsyncadd [#allocation4], %s159
      %s161 = sshll.u32 [#allocation8], 4
      %s162 = int_to_ptr.vmem [resolvable:$true] %s161
      %167 = dma.vmem_to_hbm [thread:$0]  %s162, 256, %s3, [#allocation4], 128, 128, 8
    $region29: #{forward.21} parent=1 // pred_fallthru
      _
    // Predicated region
    $region30: #{forward.21} parent=1 // pred_check
      _
    $region31: #{forward.21} parent=1 // pred_check_branch
      %169 = sbr.rel (0) target = $region33
    $region32: #{forward.21} parent=1 // pred_region
      %170 = dma.done [#allocation4], 256
    $region33: #{forward.21} parent=1 // pred_fallthru
      _
    %171 = vsyncpa [#allocation3], 1
    %172 = vsyncpa [#allocation6], 1
    %173 = vsyncpa [#allocation4], 1

// kernel: forward.12
$region0: #{forward.12}
  #allocation0 [shape = 'u32[]', space=smem, size = 0x4, offset = 0x4, fixed_abs, tag = 'smem constant byte address 0x4 - core index']
  #allocation1 [shape = 'u32[144,128]{1,0:T(1,128)}', space=vmem, size = 0x12000, scoped, tag = 'internal scratch']
  %s0 = inlined_call_operand.hbm [shape: f32[16,128], index: 0, kind: input, shape index: {}]
  %s1 = inlined_call_operand.hbm [shape: f32[128,256], index: 1, kind: input, shape index: {}]
  %s2 = inlined_call_operand.hbm [shape: f32[1,256], index: 2, kind: input, shape index: {}]
  %s3 = inlined_call_operand.hbm [shape: f32[256,128], index: 3, kind: input, shape index: {}]
  %s4 = inlined_call_operand.hbm [shape: f32[1,128], index: 4, kind: input, shape index: {}]
  %s5 = inlined_call_operand.hbm [shape: f32[1,128], index: 5, kind: input, shape index: {}]
  %s6 = inlined_call_operand.hbm [shape: f32[1,128], index: 6, kind: input, shape index: {}]
  %s7 = inlined_call_operand.hbm [shape: f32[16,128], index: 7, kind: output, shape index: {}]
  %s8 = sld [smem:[#allocation0]]
  $region66: #{forward.12} parent=0
    _
  %s10 = ssub.s32 1, %s8
  %s11 = scalar_select 0, %s10, %s8
  $region1: #{forward.12} parent=0
    #allocation2 [shape = 'u8[8192]{0}', space=vmem, size = 0x2000, scoped, tag = 'input window, operand 0, single buffered']
    #allocation3 [shape = 's32[1]{0}', space=sflag, size = 0x4, scoped, tag = 'scoped memory for forward.12']
    #allocation4 [shape = 's32[1]{0}', space=sflag, size = 0x4, scoped, tag = 'scoped memory for forward.12']
    #allocation5 [shape = 'u8[131072]{0}', space=vmem, size = 0x20000, scoped, tag = 'input window, operand 1, single buffered']
    #allocation6 [shape = 's32[1]{0}', space=sflag, size = 0x4, scoped, tag = 'scoped memory for forward.12']
    #allocation7 [shape = 'u8[1024]{0}', space=vmem, size = 0x400, scoped, tag = 'input window, operand 2, single buffered']
    #allocation8 [shape = 'u8[131072]{0}', space=vmem, size = 0x20000, scoped, tag = 'input window, operand 3, single buffered']
    #allocation9 [shape = 's32[1]{0}', space=sflag, size = 0x4, scoped, tag = 'scoped memory for forward.12']
    #allocation10 [shape = 'u8[512]{0}', space=vmem, size = 0x400, scoped, tag = 'input window, operand 4, single buffered']
    #allocation11 [shape = 'u8[512]{0}', space=vmem, size = 0x400, scoped, tag = 'input window, operand 5, single buffered']
    #allocation12 [shape = 's32[1]{0}', space=sflag, size = 0x4, scoped, tag = 'scoped memory for forward.12']
    #allocation13 [shape = 'u8[512]{0}', space=vmem, size = 0x400, scoped, tag = 'input window, operand 6, single buffered']
    #allocation14 [shape = 'u8[8192]{0}', space=vmem, size = 0x2000, scoped, tag = 'output window, operand 0, single buffered']
    %12 = vsyncpa [#allocation3], 0
    %13 = vsyncpa [#allocation6], 0
    %14 = vsyncpa [#allocation9], 0
    %15 = vsyncpa [#allocation12], 0
    %16 = vsyncpa [#allocation4], 0
    // Predicated region
    $region2: #{forward.12} parent=1 // pred_check
      _
    $region3: #{forward.12} parent=1 // pred_check_branch
      %18 = sbr.rel (0) target = $region5
    $region4: #{forward.12} parent=1 // pred_region
      %s20 = ssub.s32 256, 256
      %21 = vsyncadd [#allocation3], %s20
      %s22 = sshll.u32 [#allocation2], 4
      %s23 = int_to_ptr.vmem [resolvable:$true] %s22
      %28 = dma.hbm_to_vmem [thread:$0]  %s0, 256, %s23, [#allocation3], 128, 128, 8
    $region5: #{forward.12} parent=1 // pred_fallthru
      _
    // Predicated region
    $region6: #{forward.12} parent=1 // pred_check
      _
    $region7: #{forward.12} parent=1 // pred_check_branch
      %30 = sbr.rel (0) target = $region9
    $region8: #{forward.12} parent=1 // pred_region
      %s32 = ssub.s32 4096, 4096
      %33 = vsyncadd [#allocation6], %s32
      %s34 = sshll.u32 [#allocation5], 4
      %s35 = int_to_ptr.vmem [resolvable:$true] %s34
      %40 = dma.hbm_to_vmem [thread:$0]  %s1, 4096, %s35, [#allocation6], 256, 256, 16
    $region9: #{forward.12} parent=1 // pred_fallthru
      _
    // Predicated region
    $region10: #{forward.12} parent=1 // pred_check
      _
    $region11: #{forward.12} parent=1 // pred_check_branch
      %42 = sbr.rel (0) target = $region13
    $region12: #{forward.12} parent=1 // pred_region
      %s44 = ssub.s32 32, 32
      %45 = vsyncadd [#allocation6], %s44
      %s47 = sshll.u32 [#allocation7], 4
      %s48 = int_to_ptr.vmem [resolvable:$true] %s47
      %50 = dma.hbm_to_vmem [thread:$0]  %s2, 32, %s48, [#allocation6]
    $region13: #{forward.12} parent=1 // pred_fallthru
      _
    // Predicated region
    $region14: #{forward.12} parent=1 // pred_check
      _
    $region15: #{forward.12} parent=1 // pred_check_branch
      %52 = sbr.rel (0) target = $region17
    $region16: #{forward.12} parent=1 // pred_region
      %s54 = ssub.s32 4096, 4096
      %55 = vsyncadd [#allocation9], %s54
      %s56 = sshll.u32 [#allocation8], 4
      %s57 = int_to_ptr.vmem [resolvable:$true] %s56
      %62 = dma.hbm_to_vmem [thread:$0]  %s3, 4096, %s57, [#allocation9], 128, 128, 8
    $region17: #{forward.12} parent=1 // pred_fallthru
      _
    // Predicated region
    $region18: #{forward.12} parent=1 // pred_check
      _
    $region19: #{forward.12} parent=1 // pred_check_branch
      %64 = sbr.rel (0) target = $region21
    $region20: #{forward.12} parent=1 // pred_region
      %s66 = ssub.s32 16, 16
      %67 = vsyncadd [#allocation9], %s66
      %s69 = sshll.u32 [#allocation10], 4
      %s70 = int_to_ptr.vmem [resolvable:$true] %s69
      %72 = dma.hbm_to_vmem [thread:$0]  %s4, 16, %s70, [#allocation9]
    $region21: #{forward.12} parent=1 // pred_fallthru
      _
    // Predicated region
    $region22: #{forward.12} parent=1 // pred_check
      _
    $region23: #{forward.12} parent=1 // pred_check_branch
      %74 = sbr.rel (0) target = $region25
    $region24: #{forward.12} parent=1 // pred_region
      %s76 = ssub.s32 16, 16
      %77 = vsyncadd [#allocation12], %s76
      %s79 = sshll.u32 [#allocation11], 4
      %s80 = int_to_ptr.vmem [resolvable:$true] %s79
      %82 = dma.hbm_to_vmem [thread:$0]  %s5, 16, %s80, [#allocation12]
    $region25: #{forward.12} parent=1 // pred_fallthru
      _
    // Predicated region
    $region26: #{forward.12} parent=1 // pred_check
      _
    $region27: #{forward.12} parent=1 // pred_check_branch
      %84 = sbr.rel (0) target = $region29
    $region28: #{forward.12} parent=1 // pred_region
      %s86 = ssub.s32 16, 16
      %87 = vsyncadd [#allocation12], %s86
      %s89 = sshll.u32 [#allocation13], 4
      %s90 = int_to_ptr.vmem [resolvable:$true] %s89
      %92 = dma.hbm_to_vmem [thread:$0]  %s6, 16, %s90, [#allocation12]
    $region29: #{forward.12} parent=1 // pred_fallthru
      _
    // Predicated region
    $region30: #{forward.12} parent=1 // pred_check
      _
    $region31: #{forward.12} parent=1 // pred_check_branch
      %94 = sbr.rel (0) target = $region33
    $region32: #{forward.12} parent=1 // pred_region
      %95 = dma.done [#allocation3], 256
    $region33: #{forward.12} parent=1 // pred_fallthru
      _
    // Predicated region
    $region34: #{forward.12} parent=1 // pred_check
      _
    $region35: #{forward.12} parent=1 // pred_check_branch
      %97 = sbr.rel (0) target = $region37
    $region36: #{forward.12} parent=1 // pred_region
      %98 = dma.done [#allocation6], 4096
    $region37: #{forward.12} parent=1 // pred_fallthru
      _
    // Predicated region
    $region38: #{forward.12} parent=1 // pred_check
      _
    $region39: #{forward.12} parent=1 // pred_check_branch
      %100 = sbr.rel (0) target = $region41
    $region40: #{forward.12} parent=1 // pred_region
      %101 = dma.done [#allocation6], 32
    $region41: #{forward.12} parent=1 // pred_fallthru
      _
    // Predicated region
    $region42: #{forward.12} parent=1 // pred_check
      _
    $region43: #{forward.12} parent=1 // pred_check_branch
      %103 = sbr.rel (0) target = $region45
    $region44: #{forward.12} parent=1 // pred_region
      %104 = dma.done [#allocation9], 4096
    $region45: #{forward.12} parent=1 // pred_fallthru
      _
    // Predicated region
    $region46: #{forward.12} parent=1 // pred_check
      _
    $region47: #{forward.12} parent=1 // pred_check_branch
      %106 = sbr.rel (0) target = $region49
    $region48: #{forward.12} parent=1 // pred_region
      %107 = dma.done [#allocation9], 16
    $region49: #{forward.12} parent=1 // pred_fallthru
      _
    // Predicated region
    $region50: #{forward.12} parent=1 // pred_check
      _
    $region51: #{forward.12} parent=1 // pred_check_branch
      %109 = sbr.rel (0) target = $region53
    $region52: #{forward.12} parent=1 // pred_region
      %110 = dma.done [#allocation12], 16
    $region53: #{forward.12} parent=1 // pred_fallthru
      _
    // Predicated region
    $region54: #{forward.12} parent=1 // pred_check
      _
    $region55: #{forward.12} parent=1 // pred_check_branch
      %112 = sbr.rel (0) target = $region57
    $region56: #{forward.12} parent=1 // pred_region
      %113 = dma.done [#allocation12], 16
    $region57: #{forward.12} parent=1 // pred_fallthru
      _
    %v114 = vld [vmem:[#allocation2] sm:$0xff]
    %v115 = vld [vmem:[#allocation2 + $0x8] sm:$0xff]
    %v116 = vld [vmem:[#allocation5] sm:$0xff]
    %v117 = vld [vmem:[#allocation5 + $0x8] sm:$0xff]
    %v118 = vld [vmem:[#allocation5 + $0x10] sm:$0xff]
    %v119 = vld [vmem:[#allocation5 + $0x18] sm:$0xff]
    %v120 = vld [vmem:[#allocation5 + $0x20] sm:$0xff]
    %v121 = vld [vmem:[#allocation5 + $0x28] sm:$0xff]
    %v122 = vld [vmem:[#allocation5 + $0x30] sm:$0xff]
    %v123 = vld [vmem:[#allocation5 + $0x38] sm:$0xff]
    %v124 = vld [vmem:[#allocation5 + $0x40] sm:$0xff]
    %v125 = vld [vmem:[#allocation5 + $0x48] sm:$0xff]
    %v126 = vld [vmem:[#allocation5 + $0x50] sm:$0xff]
    %v127 = vld [vmem:[#allocation5 + $0x58] sm:$0xff]
    %v128 = vld [vmem:[#allocation5 + $0x60] sm:$0xff]
    %v129 = vld [vmem:[#allocation5 + $0x68] sm:$0xff]
    %v130 = vld [vmem:[#allocation5 + $0x70] sm:$0xff]
    %v131 = vld [vmem:[#allocation5 + $0x78] sm:$0xff]
    %v132 = vld [vmem:[#allocation5 + $0x80] sm:$0xff]
    %v133 = vld [vmem:[#allocation5 + $0x88] sm:$0xff]
    %v134 = vld [vmem:[#allocation5 + $0x90] sm:$0xff]
    %v135 = vld [vmem:[#allocation5 + $0x98] sm:$0xff]
    %v136 = vld [vmem:[#allocation5 + $0xa0] sm:$0xff]
    %v137 = vld [vmem:[#allocation5 + $0xa8] sm:$0xff]
    %v138 = vld [vmem:[#allocation5 + $0xb0] sm:$0xff]
    %v139 = vld [vmem:[#allocation5 + $0xb8] sm:$0xff]
    %v140 = vld [vmem:[#allocation5 + $0xc0] sm:$0xff]
    %v141 = vld [vmem:[#allocation5 + $0xc8] sm:$0xff]
    %v142 = vld [vmem:[#allocation5 + $0xd0] sm:$0xff]
    %v143 = vld [vmem:[#allocation5 + $0xd8] sm:$0xff]
    %v144 = vld [vmem:[#allocation5 + $0xe0] sm:$0xff]
    %v145 = vld [vmem:[#allocation5 + $0xe8] sm:$0xff]
    %v146 = vld [vmem:[#allocation5 + $0xf0] sm:$0xff]
    %v147 = vld [vmem:[#allocation5 + $0xf8] sm:$0xff]
    %v148 = vld [vmem:[#allocation7] sm:$0x3]
    %v150 = vlaneseq
    %v151 = vshrl.u32 %v150, 7
    %v152 = vsub.s32 0, %v151
    %v153 = vrot.slane %v148, %v152
    %v154 = vlaneseq
    %v155 = vshrl.u32 %v154, 7
    %v156 = vsub.s32 1, %v155
    %v157 = vrot.slane %v148, %v156
    %160 = vmatprep.subr.mxu0 %v117
    %161 = vmatpush1.msra.mxu0 %v116
    %162 = vmatprep.subr.mxu0 %v119
    %163 = vmatpush1.msra.mxu0 %v118
    %164 = vmatprep.subr.mxu0 %v121
    %165 = vmatpush1.msra.mxu0 %v120
    %166 = vmatprep.subr.mxu0 %v123
    %167 = vmatpush1.msra.mxu0 %v122
    %168 = vmatprep.subr.mxu0 %v125
    %169 = vmatpush1.msra.mxu0 %v124
    %170 = vmatprep.subr.mxu0 %v127
    %171 = vmatpush1.msra.mxu0 %v126
    %172 = vmatprep.subr.mxu0 %v129
    %173 = vmatpush1.msra.mxu0 %v128
    %174 = vmatprep.subr.mxu0 %v131
    %175 = vmatpush1.msra.mxu0 %v130
    %176 = vmatprep.subr.mxu0 %v133
    %177 = vmatpush1.msra.mxu0 %v132
    %178 = vmatprep.subr.mxu0 %v135
    %179 = vmatpush1.msra.mxu0 %v134
    %180 = vmatprep.subr.mxu0 %v137
    %181 = vmatpush1.msra.mxu0 %v136
    %182 = vmatprep.subr.mxu0 %v139
    %183 = vmatpush1.msra.mxu0 %v138
    %184 = vmatprep.subr.mxu0 %v141
    %185 = vmatpush1.msra.mxu0 %v140
    %186 = vmatprep.subr.mxu0 %v143
    %187 = vmatpush1.msra.mxu0 %v142
    %188 = vmatprep.subr.mxu0 %v145
    %189 = vmatpush1.msra.mxu0 %v144
    %190 = vmatprep.subr.mxu0 %v147
    %191 = vmatpush1.msra.mxu0 %v146
    %192 = vmatprep.subr.mxu0 0.0
    %193 = vmatpush1.msra.mxu0 0.0
    %194 = vmatprep.subr.mxu0 0.0
    %195 = vmatpush1.msra.mxu0 0.0
    %196 = vmatprep.subr.mxu0 0.0
    %197 = vmatpush1.msra.mxu0 0.0
    %198 = vmatprep.subr.mxu0 0.0
    %199 = vmatpush1.msra.mxu0 0.0
    %200 = vmatprep.subr.mxu0 0.0
    %201 = vmatpush1.msra.mxu0 0.0
    %202 = vmatprep.subr.mxu0 0.0
    %203 = vmatpush1.msra.mxu0 0.0
    %204 = vmatprep.subr.mxu0 0.0
    %205 = vmatpush1.msra.mxu0 0.0
    %206 = vmatprep.subr.mxu0 0.0
    %207 = vmatpush1.msra.mxu0 0.0
    %208 = vmatprep.subr.mxu0 0.0
    %209 = vmatpush1.msra.mxu0 0.0
    %210 = vmatprep.subr.mxu0 0.0
    %211 = vmatpush1.msra.mxu0 0.0
    %212 = vmatprep.subr.mxu0 0.0
    %213 = vmatpush1.msra.mxu0 0.0
    %214 = vmatprep.subr.mxu0 0.0
    %215 = vmatpush1.msra.mxu0 0.0
    %216 = vmatprep.subr.mxu0 0.0
    %217 = vmatpush1.msra.mxu0 0.0
    %218 = vmatprep.subr.mxu0 0.0
    %219 = vmatpush1.msra.mxu0 0.0
    %220 = vmatprep.subr.mxu0 0.0
    %221 = vmatpush1.msra.mxu0 0.0
    %222 = vmatprep.subr.mxu0 0.0
    %223 = vmatpush1.msra.mxu0 0.0
    %224 = vmatprep.mubr.f32.mxu0 0.0
    %225 = vmatmul.mubr.f32.gmra.mrb[0].mxu0 %v114
    %v226 = vpop.f32.mrb[0].mxu0
    %v227 = vadd.f32 %v153, %v226
    %v228 = vpop.f32.mrb[0].mxu0
    %v229 = vadd.f32 %v157, %v228
    %230 = vmatprep.mubr.f32.mxu0 0.0
    %231 = vmatmul.mubr.f32.gmra.mrb[0].mxu0 %v115
    %v232 = vpop.f32.mrb[0].mxu0
    %v233 = vadd.f32 %v153, %v232
    %v234 = vpop.f32.mrb[0].mxu0
    %v235 = vadd.f32 %v157, %v234
    %236 = vdwg.mxu0
    %v237 = vmax.f32 %v227, 0.0
    %v238 = vmax.f32 %v229, 0.0
    %v239 = vmax.f32 %v233, 0.0
    %v240 = vmax.f32 %v235, 0.0
    %v241 = vld [vmem:[#allocation8] sm:$0xff]
    %v242 = vld [vmem:[#allocation8 + $0x8] sm:$0xff]
    %v243 = vld [vmem:[#allocation8 + $0x10] sm:$0xff]
    %v244 = vld [vmem:[#allocation8 + $0x18] sm:$0xff]
    %v245 = vld [vmem:[#allocation8 + $0x20] sm:$0xff]
    %v246 = vld [vmem:[#allocation8 + $0x28] sm:$0xff]
    %v247 = vld [vmem:[#allocation8 + $0x30] sm:$0xff]
    %v248 = vld [vmem:[#allocation8 + $0x38] sm:$0xff]
    %v249 = vld [vmem:[#allocation8 + $0x40] sm:$0xff]
    %v250 = vld [vmem:[#allocation8 + $0x48] sm:$0xff]
    %v251 = vld [vmem:[#allocation8 + $0x50] sm:$0xff]
    %v252 = vld [vmem:[#allocation8 + $0x58] sm:$0xff]
    %v253 = vld [vmem:[#allocation8 + $0x60] sm:$0xff]
    %v254 = vld [vmem:[#allocation8 + $0x68] sm:$0xff]
    %v255 = vld [vmem:[#allocation8 + $0x70] sm:$0xff]
    %v256 = vld [vmem:[#allocation8 + $0x78] sm:$0xff]
    %v257 = vld [vmem:[#allocation8 + $0x80] sm:$0xff]
    %v258 = vld [vmem:[#allocation8 + $0x88] sm:$0xff]
    %v259 = vld [vmem:[#allocation8 + $0x90] sm:$0xff]
    %v260 = vld [vmem:[#allocation8 + $0x98] sm:$0xff]
    %v261 = vld [vmem:[#allocation8 + $0xa0] sm:$0xff]
    %v262 = vld [vmem:[#allocation8 + $0xa8] sm:$0xff]
    %v263 = vld [vmem:[#allocation8 + $0xb0] sm:$0xff]
    %v264 = vld [vmem:[#allocation8 + $0xb8] sm:$0xff]
    %v265 = vld [vmem:[#allocation8 + $0xc0] sm:$0xff]
    %v266 = vld [vmem:[#allocation8 + $0xc8] sm:$0xff]
    %v267 = vld [vmem:[#allocation8 + $0xd0] sm:$0xff]
    %v268 = vld [vmem:[#allocation8 + $0xd8] sm:$0xff]
    %v269 = vld [vmem:[#allocation8 + $0xe0] sm:$0xff]
    %v270 = vld [vmem:[#allocation8 + $0xe8] sm:$0xff]
    %v271 = vld [vmem:[#allocation8 + $0xf0] sm:$0xff]
    %v272 = vld [vmem:[#allocation8 + $0xf8] sm:$0xff]
    %v273 = vld [vmem:[#allocation10] sm:$0x1]
    %v275 = vlaneseq
    %v276 = vshrl.u32 %v275, 7
    %v277 = vsub.s32 0, %v276
    %v278 = vrot.slane %v273, %v277
    %280 = vmatprep.subr.mxu0 0.0
    %281 = vmatpush1.msra.mxu0 %v241
    %282 = vmatprep.subr.mxu0 0.0
    %283 = vmatpush1.msra.mxu0 %v242
    %284 = vmatprep.subr.mxu0 0.0
    %285 = vmatpush1.msra.mxu0 %v243
    %286 = vmatprep.subr.mxu0 0.0
    %287 = vmatpush1.msra.mxu0 %v244
    %288 = vmatprep.subr.mxu0 0.0
    %289 = vmatpush1.msra.mxu0 %v245
    %290 = vmatprep.subr.mxu0 0.0
    %291 = vmatpush1.msra.mxu0 %v246
    %292 = vmatprep.subr.mxu0 0.0
    %293 = vmatpush1.msra.mxu0 %v247
    %294 = vmatprep.subr.mxu0 0.0
    %295 = vmatpush1.msra.mxu0 %v248
    %296 = vmatprep.subr.mxu0 0.0
    %297 = vmatpush1.msra.mxu0 %v249
    %298 = vmatprep.subr.mxu0 0.0
    %299 = vmatpush1.msra.mxu0 %v250
    %300 = vmatprep.subr.mxu0 0.0
    %301 = vmatpush1.msra.mxu0 %v251
    %302 = vmatprep.subr.mxu0 0.0
    %303 = vmatpush1.msra.mxu0 %v252
    %304 = vmatprep.subr.mxu0 0.0
    %305 = vmatpush1.msra.mxu0 %v253
    %306 = vmatprep.subr.mxu0 0.0
    %307 = vmatpush1.msra.mxu0 %v254
    %308 = vmatprep.subr.mxu0 0.0
    %309 = vmatpush1.msra.mxu0 %v255
    %310 = vmatprep.subr.mxu0 0.0
    %311 = vmatpush1.msra.mxu0 %v256
    %312 = vmatprep.subr.mxu0 0.0
    %313 = vmatpush1.msra.mxu0 %v257
    %314 = vmatprep.subr.mxu0 0.0
    %315 = vmatpush1.msra.mxu0 %v258
    %316 = vmatprep.subr.mxu0 0.0
    %317 = vmatpush1.msra.mxu0 %v259
    %318 = vmatprep.subr.mxu0 0.0
    %319 = vmatpush1.msra.mxu0 %v260
    %320 = vmatprep.subr.mxu0 0.0
    %321 = vmatpush1.msra.mxu0 %v261
    %322 = vmatprep.subr.mxu0 0.0
    %323 = vmatpush1.msra.mxu0 %v262
    %324 = vmatprep.subr.mxu0 0.0
    %325 = vmatpush1.msra.mxu0 %v263
    %326 = vmatprep.subr.mxu0 0.0
    %327 = vmatpush1.msra.mxu0 %v264
    %328 = vmatprep.subr.mxu0 0.0
    %329 = vmatpush1.msra.mxu0 %v265
    %330 = vmatprep.subr.mxu0 0.0
    %331 = vmatpush1.msra.mxu0 %v266
    %332 = vmatprep.subr.mxu0 0.0
    %333 = vmatpush1.msra.mxu0 %v267
    %334 = vmatprep.subr.mxu0 0.0
    %335 = vmatpush1.msra.mxu0 %v268
    %336 = vmatprep.subr.mxu0 0.0
    %337 = vmatpush1.msra.mxu0 %v269
    %338 = vmatprep.subr.mxu0 0.0
    %339 = vmatpush1.msra.mxu0 %v270
    %340 = vmatprep.subr.mxu0 0.0
    %341 = vmatpush1.msra.mxu0 %v271
    %342 = vmatprep.subr.mxu0 0.0
    %343 = vmatpush1.msra.mxu0 %v272
    %344 = vmatprep.mubr.f32.mxu0 %v238
    %345 = vmatmul.mubr.f32.gmra.mrb[0].mxu0 %v237
    %v346 = vpop.f32.mrb[0].mxu0
    %v347 = vadd.f32 %v278, %v346
    %v348 = vpop.f32.mrb[0].mxu0
    %349 = vmatprep.mubr.f32.mxu0 %v240
    %350 = vmatmul.mubr.f32.gmra.mrb[0].mxu0 %v239
    %v351 = vpop.f32.mrb[0].mxu0
    %v352 = vadd.f32 %v278, %v351
    %v353 = vpop.f32.mrb[0].mxu0
    %354 = vdwg.mxu0
    %v355 = vadd.f32 %v114, %v347
    %v356 = vadd.f32 %v115, %v352
    %357 = vadd.xlane.f32.xlu0 %v355
    %v358 = vpop.xlane.xlu0 %357
    %359 = vadd.xlane.f32.xlu0 %v356
    %v360 = vpop.xlane.xlu0 %359
    %v361 = vrcp.pop 128.0
    %v362 = vmul.f32 %v358, %v361
    %v363 = vmul.f32 %v360, %v361
    %v364 = vsub.f32 %v355, %v362
    %v365 = vsub.f32 %v356, %v363
    %v366 = vmul.f32 %v364, %v364
    %v367 = vmul.f32 %v365, %v365
    %368 = vadd.xlane.f32.xlu0 %v366
    %v369 = vpop.xlane.xlu0 %368
    %370 = vadd.xlane.f32.xlu0 %v367
    %v371 = vpop.xlane.xlu0 %370
    %v372 = vmul.f32 %v369, %v361
    %v373 = vmul.f32 %v371, %v361
    %v374 = vadd.f32 %v372, 1e-05
    %v375 = vadd.f32 %v373, 1e-05
    %v376 = vrsqrt.pop %v374
    %v377 = vrsqrt.pop %v375
    %v378 = vmul.f32 %v364, %v376
    %v379 = vmul.f32 %v365, %v377
    %v380 = vld [vmem:[#allocation11] sm:$0x1]
    %v382 = vlaneseq
    %v383 = vshrl.u32 %v382, 7
    %v384 = vsub.s32 0, %v383
    %v385 = vrot.slane %v380, %v384
    %v387 = vmul.f32 %v378, %v385
    %v388 = vmul.f32 %v379, %v385
    %v389 = vld [vmem:[#allocation13] sm:$0x1]
    %v391 = vlaneseq
    %v392 = vshrl.u32 %v391, 7
    %v393 = vsub.s32 0, %v392
    %v394 = vrot.slane %v389, %v393
    %v396 = vadd.f32 %v387, %v394
    %v397 = vadd.f32 %v388, %v394
    %398 = vst [vmem:[#allocation14] sm:$0xff] %v396
    %399 = vst [vmem:[#allocation14 + $0x8] sm:$0xff] %v397
    // Predicated region
    $region58: #{forward.12} parent=1 // pred_check
      _
    $region59: #{forward.12} parent=1 // pred_check_branch
      %401 = sbr.rel (0) target = $region61
    $region60: #{forward.12} parent=1 // pred_region
      %s403 = ssub.s32 256, 256
      %404 = vsyncadd [#allocation4], %s403
      %s405 = sshll.u32 [#allocation14], 4
      %s406 = int_to_ptr.vmem [resolvable:$true] %s405
      %411 = dma.vmem_to_hbm [thread:$0]  %s406, 256, %s7, [#allocation4], 128, 128, 8
    $region61: #{forward.12} parent=1 // pred_fallthru
      _
    // Predicated region
    $region62: #{forward.12} parent=1 // pred_check
      _
    $region63: #{forward.12} parent=1 // pred_check_branch
      %413 = sbr.rel (0) target = $region65
    $region64: #{forward.12} parent=1 // pred_region
      %414 = dma.done [#allocation4], 256
    $region65: #{forward.12} parent=1 // pred_fallthru
      _
    %415 = vsyncpa [#allocation3], 1
    %416 = vsyncpa [#allocation6], 1
    %417 = vsyncpa [#allocation9], 1
    %418 = vsyncpa [#allocation12], 1
    %419 = vsyncpa [#allocation4], 1

// kernel: forward.11
$region0: #{forward.11}
  #allocation0 [shape = 'u32[]', space=smem, size = 0x4, offset = 0x4, fixed_abs, tag = 'smem constant byte address 0x4 - core index']
  #allocation1 [shape = 'u32[144,128]{1,0:T(1,128)}', space=vmem, size = 0x12000, scoped, tag = 'internal scratch']
  #allocation2 [shape = 'f32[8,128]{1,0:T(8,128)}', space=vmem, size = 0x1000, scoped, tag = 'scratch operand']
  %s0 = inlined_call_operand.hbm [shape: f32[16,128], index: 0, kind: input, shape index: {}]
  %s1 = inlined_call_operand.hbm [shape: f32[128,128], index: 1, kind: input, shape index: {}]
  %s2 = inlined_call_operand.hbm [shape: f32[1,128], index: 2, kind: input, shape index: {}]
  %s3 = inlined_call_operand.hbm [shape: f32[128,128], index: 3, kind: input, shape index: {}]
  %s4 = inlined_call_operand.hbm [shape: f32[1,128], index: 4, kind: input, shape index: {}]
  %s5 = inlined_call_operand.hbm [shape: f32[128,128], index: 5, kind: input, shape index: {}]
  %s6 = inlined_call_operand.hbm [shape: f32[1,128], index: 6, kind: input, shape index: {}]
  %s7 = inlined_call_operand.hbm [shape: f32[128,128], index: 7, kind: input, shape index: {}]
  %s8 = inlined_call_operand.hbm [shape: f32[1,128], index: 8, kind: input, shape index: {}]
  %s9 = inlined_call_operand.hbm [shape: f32[1,128], index: 9, kind: input, shape index: {}]
  %s10 = inlined_call_operand.hbm [shape: f32[1,128], index: 10, kind: input, shape index: {}]
  %s11 = inlined_call_operand.hbm [shape: f32[16,128], index: 11, kind: output, shape index: {}]
  %s12 = sld [smem:[#allocation0]]
  $region121: #{forward.11} parent=0
    _
  %s14 = ssub.s32 1, %s12
  %s15 = scalar_select 0, %s14, %s12
  $region1: #{forward.11} parent=0
    #allocation3 [shape = 'u8[8192]{0}', space=vmem, size = 0x2000, scoped, tag = 'input window, operand 0']
    #allocation4 [shape = 's32[2]{0}', space=sflag, size = 0x8, scoped, tag = 'scoped memory for forward.11']
    #allocation5 [shape = 's32[2]{0}', space=sflag, size = 0x8, scoped, tag = 'scoped memory for forward.11']
    #allocation6 [shape = 'u8[65536]{0}', space=vmem, size = 0x10000, scoped, tag = 'input window, operand 1, single buffered']
    #allocation7 [shape = 's32[1]{0}', space=sflag, size = 0x4, scoped, tag = 'scoped memory for forward.11']
    #allocation8 [shape = 'u8[512]{0}', space=vmem, size = 0x400, scoped, tag = 'input window, operand 2, single buffered']
    #allocation9 [shape = 'u8[65536]{0}', space=vmem, size = 0x10000, scoped, tag = 'input window, operand 3, single buffered']
    #allocation10 [shape = 's32[1]{0}', space=sflag, size = 0x4, scoped, tag = 'scoped memory for forward.11']
    #allocation11 [shape = 'u8[512]{0}', space=vmem, size = 0x400, scoped, tag = 'input window, operand 4, single buffered']
    #allocation12 [shape = 'u8[65536]{0}', space=vmem, size = 0x10000, scoped, tag = 'input window, operand 5, single buffered']
    #allocation13 [shape = 's32[1]{0}', space=sflag, size = 0x4, scoped, tag = 'scoped memory for forward.11']
    #allocation14 [shape = 'u8[512]{0}', space=vmem, size = 0x400, scoped, tag = 'input window, operand 6, single buffered']
    #allocation15 [shape = 'u8[65536]{0}', space=vmem, size = 0x10000, scoped, tag = 'input window, operand 7, single buffered']
    #allocation16 [shape = 's32[1]{0}', space=sflag, size = 0x4, scoped, tag = 'scoped memory for forward.11']
    #allocation17 [shape = 'u8[512]{0}', space=vmem, size = 0x400, scoped, tag = 'input window, operand 8, single buffered']
    #allocation18 [shape = 'u8[512]{0}', space=vmem, size = 0x400, scoped, tag = 'input window, operand 9, single buffered']
    #allocation19 [shape = 's32[1]{0}', space=sflag, size = 0x4, scoped, tag = 'scoped memory for forward.11']
    #allocation20 [shape = 'u8[512]{0}', space=vmem, size = 0x400, scoped, tag = 'input window, operand 10, single buffered']
    #allocation21 [shape = 'u8[8192]{0}', space=vmem, size = 0x2000, scoped, tag = 'output window, operand 0']
    %16 = vsyncpa [#allocation4], 0
    %s17 = scalar_lea.sflag [#allocation4], 1
    %18 = vsyncpa %s17, 0
    %19 = vsyncpa [#allocation7], 0
    %20 = vsyncpa [#allocation10], 0
    %21 = vsyncpa [#allocation13], 0
    %22 = vsyncpa [#allocation16], 0
    %23 = vsyncpa [#allocation19], 0
    %24 = vsyncpa [#allocation5], 0
    %s25 = scalar_lea.sflag [#allocation5], 1
    %26 = vsyncpa %s25, 0
    loop: start=0, step=1, limit=4
    $region2: #{forward.11} parent=1 // loop_pre_header
      _
    $region3: #{forward.11} parent=1 // loop_header
      %s28 = sphi 0, %s32
      %p29 = scmp.ge.s32.totalorder %s28, 4
      %s38 = sphi 0, %s40
      %s41 = sphi 0, %s38
      %s42 = sphi 0, %s41
      %s58 = sphi 0, %s42
      %s62 = sphi 0, %s62
      %s64 = sphi 0, %s62
      %s65 = sphi 0, %s64
      %s79 = sphi 0, %s65
      %s83 = sphi 0, %s83
      %s85 = sphi 0, %s83
      %s86 = sphi 0, %s85
      %s100 = sphi 0, %s86
      %s104 = sphi 0, %s104
      %s106 = sphi 0, %s104
      %s107 = sphi 0, %s106
      %s121 = sphi 0, %s107
      %s125 = sphi 0, %s125
      %s127 = sphi 0, %s125
      %s128 = sphi 0, %s127
      %s142 = sphi 0, %s128
      %s146 = sphi 0, %s146
      %s148 = sphi 0, %s146
      %s149 = sphi 0, %s148
      %s163 = sphi 0, %s149
      %s167 = sphi 0, %s167
      %s169 = sphi 0, %s167
      %s170 = sphi 0, %s169
      %s184 = sphi 0, %s170
      %s188 = sphi 0, %s188
      %s190 = sphi 0, %s188
      %s191 = sphi 0, %s190
      %s205 = sphi 0, %s191
      %s209 = sphi 0, %s209
      %s211 = sphi 0, %s209
      %s212 = sphi 0, %s211
      %s226 = sphi 0, %s212
      %s230 = sphi 0, %s230
      %s232 = sphi 0, %s230
      %s233 = sphi 0, %s232
      %s247 = sphi 0, %s233
      %s251 = sphi 0, %s251
      %s253 = sphi 0, %s251
      %s254 = sphi 0, %s253
      %s268 = sphi 0, %s254
      %s274 = sphi 0, %s276
      %s277 = sphi 0, %s274
      %s278 = sphi 0, %s277
      %s294 = sphi 0, %s278
    $region4: #{forward.11} parent=1 // loop_header_branch
      %31 = sbr.rel (%p29) target = $region8
    $region5: #{forward.11} parent=1 // loop_body
      %s33 = ssub.s32 %s28, 1
      %s34 = ssub.s32 %s28, 2
      %s35 = sadd.s32 %s28, 1
      %s36 = ssub.s32 %s28, %s35
      %p37 = scmp.eq.s32.totalorder %s36, 0
      %s39 = sadd.s32 %s38, 1
      %s40 = scalar_select %p37, %s38, %s39
      %p43 = pneg %p37
      %p44 = scmp.eq.s32.totalorder %s28, 1
      %p45 = por %p43, %p44
      %p46 = scmp.ne.s32.totalorder %s38, %s41
      %p47 = scmp.eq.s32.totalorder %s28, 0
      %p48 = por %p46, %p47
      %p49 = scmp.ne.s32.totalorder %s38, %s41
      %p50 = scmp.eq.s32.totalorder %s33, 1
      %p51 = por %p49, %p50
      %p52 = scmp.ne.s32.totalorder %s41, %s42
      %p53 = scmp.eq.s32.totalorder %s33, 0
      %p54 = por %p52, %p53
      %p55 = scmp.ne.s32.totalorder %s41, %s42
      %p56 = scmp.eq.s32.totalorder %s34, 1
      %p57 = por %p55, %p56
      %p59 = scmp.ne.s32.totalorder %s42, %s58
      %p60 = scmp.eq.s32.totalorder %s34, 0
      %p61 = por %p59, %p60
      %s63 = sadd.s32 %s62, 1
      %p66 = scmp.eq.s32.totalorder %s28, 1
      %p67 = scmp.ne.s32.totalorder %s62, %s64
      %p68 = scmp.eq.s32.totalorder %s28, 0
      %p69 = por %p67, %p68
      %p70 = scmp.ne.s32.totalorder %s62, %s64
      %p71 = scmp.eq.s32.totalorder %s33, 1
      %p72 = por %p70, %p71
      %p73 = scmp.ne.s32.totalorder %s64, %s65
      %p74 = scmp.eq.s32.totalorder %s33, 0
      %p75 = por %p73, %p74
      %p76 = scmp.ne.s32.totalorder %s64, %s65
      %p77 = scmp.eq.s32.totalorder %s34, 1
      %p78 = por %p76, %p77
      %p80 = scmp.ne.s32.totalorder %s65, %s79
      %p81 = scmp.eq.s32.totalorder %s34, 0
      %p82 = por %p80, %p81
      %s84 = sadd.s32 %s83, 1
      %p87 = scmp.eq.s32.totalorder %s28, 1
      %p88 = scmp.ne.s32.totalorder %s83, %s85
      %p89 = scmp.eq.s32.totalorder %s28, 0
      %p90 = por %p88, %p89
      %p91 = scmp.ne.s32.totalorder %s83, %s85
      %p92 = scmp.eq.s32.totalorder %s33, 1
      %p93 = por %p91, %p92
      %p94 = scmp.ne.s32.totalorder %s85, %s86
      %p95 = scmp.eq.s32.totalorder %s33, 0
      %p96 = por %p94, %p95
      %p97 = scmp.ne.s32.totalorder %s85, %s86
      %p98 = scmp.eq.s32.totalorder %s34, 1
      %p99 = por %p97, %p98
      %p101 = scmp.ne.s32.totalorder %s86, %s100
      %p102 = scmp.eq.s32.totalorder %s34, 0
      %p103 = por %p101, %p102
      %s105 = sadd.s32 %s104, 1
      %p108 = scmp.eq.s32.totalorder %s28, 1
      %p109 = scmp.ne.s32.totalorder %s104, %s106
      %p110 = scmp.eq.s32.totalorder %s28, 0
      %p111 = por %p109, %p110
      %p112 = scmp.ne.s32.totalorder %s104, %s106
      %p113 = scmp.eq.s32.totalorder %s33, 1
      %p114 = por %p112, %p113
      %p115 = scmp.ne.s32.totalorder %s106, %s107
      %p116 = scmp.eq.s32.totalorder %s33, 0
      %p117 = por %p115, %p116
      %p118 = scmp.ne.s32.totalorder %s106, %s107
      %p119 = scmp.eq.s32.totalorder %s34, 1
      %p120 = por %p118, %p119
      %p122 = scmp.ne.s32.totalorder %s107, %s121
      %p123 = scmp.eq.s32.totalorder %s34, 0
      %p124 = por %p122, %p123
      %s126 = sadd.s32 %s125, 1
      %p129 = scmp.eq.s32.totalorder %s28, 1
      %p130 = scmp.ne.s32.totalorder %s125, %s127
      %p131 = scmp.eq.s32.totalorder %s28, 0
      %p132 = por %p130, %p131
      %p133 = scmp.ne.s32.totalorder %s125, %s127
      %p134 = scmp.eq.s32.totalorder %s33, 1
      %p135 = por %p133, %p134
      %p136 = scmp.ne.s32.totalorder %s127, %s128
      %p137 = scmp.eq.s32.totalorder %s33, 0
      %p138 = por %p136, %p137
      %p139 = scmp.ne.s32.totalorder %s127, %s128
      %p140 = scmp.eq.s32.totalorder %s34, 1
      %p141 = por %p139, %p140
      %p143 = scmp.ne.s32.totalorder %s128, %s142
      %p144 = scmp.eq.s32.totalorder %s34, 0
      %p145 = por %p143, %p144
      %s147 = sadd.s32 %s146, 1
      %p150 = scmp.eq.s32.totalorder %s28, 1
      %p151 = scmp.ne.s32.totalorder %s146, %s148
      %p152 = scmp.eq.s32.totalorder %s28, 0
      %p153 = por %p151, %p152
      %p154 = scmp.ne.s32.totalorder %s146, %s148
      %p155 = scmp.eq.s32.totalorder %s33, 1
      %p156 = por %p154, %p155
      %p157 = scmp.ne.s32.totalorder %s148, %s149
      %p158 = scmp.eq.s32.totalorder %s33, 0
      %p159 = por %p157, %p158
      %p160 = scmp.ne.s32.totalorder %s148, %s149
      %p161 = scmp.eq.s32.totalorder %s34, 1
      %p162 = por %p160, %p161
      %p164 = scmp.ne.s32.totalorder %s149, %s163
      %p165 = scmp.eq.s32.totalorder %s34, 0
      %p166 = por %p164, %p165
      %s168 = sadd.s32 %s167, 1
      %p171 = scmp.eq.s32.totalorder %s28, 1
      %p172 = scmp.ne.s32.totalorder %s167, %s169
      %p173 = scmp.eq.s32.totalorder %s28, 0
      %p174 = por %p172, %p173
      %p175 = scmp.ne.s32.totalorder %s167, %s169
      %p176 = scmp.eq.s32.totalorder %s33, 1
      %p177 = por %p175, %p176
      %p178 = scmp.ne.s32.totalorder %s169, %s170
      %p179 = scmp.eq.s32.totalorder %s33, 0
      %p180 = por %p178, %p179
      %p181 = scmp.ne.s32.totalorder %s169, %s170
      %p182 = scmp.eq.s32.totalorder %s34, 1
      %p183 = por %p181, %p182
      %p185 = scmp.ne.s32.totalorder %s170, %s184
      %p186 = scmp.eq.s32.totalorder %s34, 0
      %p187 = por %p185, %p186
      %s189 = sadd.s32 %s188, 1
      %p192 = scmp.eq.s32.totalorder %s28, 1
      %p193 = scmp.ne.s32.totalorder %s188, %s190
      %p194 = scmp.eq.s32.totalorder %s28, 0
      %p195 = por %p193, %p194
      %p196 = scmp.ne.s32.totalorder %s188, %s190
      %p197 = scmp.eq.s32.totalorder %s33, 1
      %p198 = por %p196, %p197
      %p199 = scmp.ne.s32.totalorder %s190, %s191
      %p200 = scmp.eq.s32.totalorder %s33, 0
      %p201 = por %p199, %p200
      %p202 = scmp.ne.s32.totalorder %s190, %s191
      %p203 = scmp.eq.s32.totalorder %s34, 1
      %p204 = por %p202, %p203
      %p206 = scmp.ne.s32.totalorder %s191, %s205
      %p207 = scmp.eq.s32.totalorder %s34, 0
      %p208 = por %p206, %p207
      %s210 = sadd.s32 %s209, 1
      %p213 = scmp.eq.s32.totalorder %s28, 1
      %p214 = scmp.ne.s32.totalorder %s209, %s211
      %p215 = scmp.eq.s32.totalorder %s28, 0
      %p216 = por %p214, %p215
      %p217 = scmp.ne.s32.totalorder %s209, %s211
      %p218 = scmp.eq.s32.totalorder %s33, 1
      %p219 = por %p217, %p218
      %p220 = scmp.ne.s32.totalorder %s211, %s212
      %p221 = scmp.eq.s32.totalorder %s33, 0
      %p222 = por %p220, %p221
      %p223 = scmp.ne.s32.totalorder %s211, %s212
      %p224 = scmp.eq.s32.totalorder %s34, 1
      %p225 = por %p223, %p224
      %p227 = scmp.ne.s32.totalorder %s212, %s226
      %p228 = scmp.eq.s32.totalorder %s34, 0
      %p229 = por %p227, %p228
      %s231 = sadd.s32 %s230, 1
      %p234 = scmp.eq.s32.totalorder %s28, 1
      %p235 = scmp.ne.s32.totalorder %s230, %s232
      %p236 = scmp.eq.s32.totalorder %s28, 0
      %p237 = por %p235, %p236
      %p238 = scmp.ne.s32.totalorder %s230, %s232
      %p239 = scmp.eq.s32.totalorder %s33, 1
      %p240 = por %p238, %p239
      %p241 = scmp.ne.s32.totalorder %s232, %s233
      %p242 = scmp.eq.s32.totalorder %s33, 0
      %p243 = por %p241, %p242
      %p244 = scmp.ne.s32.totalorder %s232, %s233
      %p245 = scmp.eq.s32.totalorder %s34, 1
      %p246 = por %p244, %p245
      %p248 = scmp.ne.s32.totalorder %s233, %s247
      %p249 = scmp.eq.s32.totalorder %s34, 0
      %p250 = por %p248, %p249
      %s252 = sadd.s32 %s251, 1
      %p255 = scmp.eq.s32.totalorder %s28, 1
      %p256 = scmp.ne.s32.totalorder %s251, %s253
      %p257 = scmp.eq.s32.totalorder %s28, 0
      %p258 = por %p256, %p257
      %p259 = scmp.ne.s32.totalorder %s251, %s253
      %p260 = scmp.eq.s32.totalorder %s33, 1
      %p261 = por %p259, %p260
      %p262 = scmp.ne.s32.totalorder %s253, %s254
      %p263 = scmp.eq.s32.totalorder %s33, 0
      %p264 = por %p262, %p263
      %p265 = scmp.ne.s32.totalorder %s253, %s254
      %p266 = scmp.eq.s32.totalorder %s34, 1
      %p267 = por %p265, %p266
      %p269 = scmp.ne.s32.totalorder %s254, %s268
      %p270 = scmp.eq.s32.totalorder %s34, 0
      %p271 = por %p269, %p270
      %s272 = ssub.s32 %s28, %s35
      %p273 = scmp.eq.s32.totalorder %s272, 0
      %s275 = sadd.s32 %s274, 1
      %s276 = scalar_select %p273, %s274, %s275
      %p279 = pneg %p273
      %p280 = scmp.eq.s32.totalorder %s28, 1
      %p281 = por %p279, %p280
      %p282 = scmp.ne.s32.totalorder %s274, %s277
      %p283 = scmp.eq.s32.totalorder %s28, 0
      %p284 = por %p282, %p283
      %p285 = scmp.ne.s32.totalorder %s274, %s277
      %p286 = scmp.eq.s32.totalorder %s33, 1
      %p287 = por %p285, %p286
      %p288 = scmp.ne.s32.totalorder %s277, %s278
      %p289 = scmp.eq.s32.totalorder %s33, 0
      %p290 = por %p288, %p289
      %p291 = scmp.ne.s32.totalorder %s277, %s278
      %p292 = scmp.eq.s32.totalorder %s34, 1
      %p293 = por %p291, %p292
      %p295 = scmp.ne.s32.totalorder %s278, %s294
      %p296 = scmp.eq.s32.totalorder %s34, 0
      %p297 = por %p295, %p296
      %p298 = scmp.le.s32.totalorder 1, %s28
      %p299 = scmp.lt.s32.totalorder %s28, 3
      %p300 = pnand %p298, %p299
      %p301 = pneg %p300
      // Predicated region
      $region9: #{forward.11} parent=5 // pred_check
        _
      $region10: #{forward.11} parent=5 // pred_check_branch
        %303 = sbr.rel (%p300) target = $region12
      $region11: #{forward.11} parent=5 // pred_region
        %s304 = ssub.s32 %s28, 1
        // Predicated region
        $region13: #{forward.11} parent=11 // pred_check
          %p305 = pneg %p75
        $region14: #{forward.11} parent=11 // pred_check_branch
          %307 = sbr.rel (%p305) target = $region16
        $region15: #{forward.11} parent=11 // pred_region
          %s309 = ssub.s32 2048, 2048
          %310 = vsyncadd [#allocation7], %s309
          %s311 = sshll.u32 [#allocation6], 4
          %s312 = int_to_ptr.vmem [resolvable:$true] %s311
          %317 = dma.hbm_to_vmem [thread:$0]  %s1, 2048, %s312, [#allocation7], 128, 128, 8
        $region16: #{forward.11} parent=11 // pred_fallthru
          _
        // Predicated region
        $region17: #{forward.11} parent=11 // pred_check
          %p318 = pneg %p96
        $region18: #{forward.11} parent=11 // pred_check_branch
          %320 = sbr.rel (%p318) target = $region20
        $region19: #{forward.11} parent=11 // pred_region
          %s322 = ssub.s32 16, 16
          %323 = vsyncadd [#allocation7], %s322
          %s325 = sshll.u32 [#allocation8], 4
          %s326 = int_to_ptr.vmem [resolvable:$true] %s325
          %328 = dma.hbm_to_vmem [thread:$0]  %s2, 16, %s326, [#allocation7]
        $region20: #{forward.11} parent=11 // pred_fallthru
          _
        // Predicated region
        $region21: #{forward.11} parent=11 // pred_check
          %p329 = pneg %p117
        $region22: #{forward.11} parent=11 // pred_check_branch
          %331 = sbr.rel (%p329) target = $region24
        $region23: #{forward.11} parent=11 // pred_region
          %s333 = ssub.s32 2048, 2048
          %334 = vsyncadd [#allocation10], %s333
          %s335 = sshll.u32 [#allocation9], 4
          %s336 = int_to_ptr.vmem [resolvable:$true] %s335
          %341 = dma.hbm_to_vmem [thread:$0]  %s3, 2048, %s336, [#allocation10], 128, 128, 8
        $region24: #{forward.11} parent=11 // pred_fallthru
          _
        // Predicated region
        $region25: #{forward.11} parent=11 // pred_check
          %p342 = pneg %p138
        $region26: #{forward.11} parent=11 // pred_check_branch
          %344 = sbr.rel (%p342) target = $region28
        $region27: #{forward.11} parent=11 // pred_region
          %s346 = ssub.s32 16, 16
          %347 = vsyncadd [#allocation10], %s346
          %s349 = sshll.u32 [#allocation11], 4
          %s350 = int_to_ptr.vmem [resolvable:$true] %s349
          %352 = dma.hbm_to_vmem [thread:$0]  %s4, 16, %s350, [#allocation10]
        $region28: #{forward.11} parent=11 // pred_fallthru
          _
        // Predicated region
        $region29: #{forward.11} parent=11 // pred_check
          %p353 = pneg %p159
        $region30: #{forward.11} parent=11 // pred_check_branch
          %355 = sbr.rel (%p353) target = $region32
        $region31: #{forward.11} parent=11 // pred_region
          %s357 = ssub.s32 2048, 2048
          %358 = vsyncadd [#allocation13], %s357
          %s359 = sshll.u32 [#allocation12], 4
          %s360 = int_to_ptr.vmem [resolvable:$true] %s359
          %365 = dma.hbm_to_vmem [thread:$0]  %s5, 2048, %s360, [#allocation13], 128, 128, 8
        $region32: #{forward.11} parent=11 // pred_fallthru
          _
        // Predicated region
        $region33: #{forward.11} parent=11 // pred_check
          %p366 = pneg %p180
        $region34: #{forward.11} parent=11 // pred_check_branch
          %368 = sbr.rel (%p366) target = $region36
        $region35: #{forward.11} parent=11 // pred_region
          %s370 = ssub.s32 16, 16
          %371 = vsyncadd [#allocation13], %s370
          %s373 = sshll.u32 [#allocation14], 4
          %s374 = int_to_ptr.vmem [resolvable:$true] %s373
          %376 = dma.hbm_to_vmem [thread:$0]  %s6, 16, %s374, [#allocation13]
        $region36: #{forward.11} parent=11 // pred_fallthru
          _
        // Predicated region
        $region37: #{forward.11} parent=11 // pred_check
          %p377 = pneg %p201
        $region38: #{forward.11} parent=11 // pred_check_branch
          %379 = sbr.rel (%p377) target = $region40
        $region39: #{forward.11} parent=11 // pred_region
          %s381 = ssub.s32 2048, 2048
          %382 = vsyncadd [#allocation16], %s381
          %s383 = sshll.u32 [#allocation15], 4
          %s384 = int_to_ptr.vmem [resolvable:$true] %s383
          %389 = dma.hbm_to_vmem [thread:$0]  %s7, 2048, %s384, [#allocation16], 128, 128, 8
        $region40: #{forward.11} parent=11 // pred_fallthru
          _
        // Predicated region
        $region41: #{forward.11} parent=11 // pred_check
          %p390 = pneg %p222
        $region42: #{forward.11} parent=11 // pred_check_branch
          %392 = sbr.rel (%p390) target = $region44
        $region43: #{forward.11} parent=11 // pred_region
          %s394 = ssub.s32 16, 16
          %395 = vsyncadd [#allocation16], %s394
          %s397 = sshll.u32 [#allocation17], 4
          %s398 = int_to_ptr.vmem [resolvable:$true] %s397
          %400 = dma.hbm_to_vmem [thread:$0]  %s8, 16, %s398, [#allocation16]
        $region44: #{forward.11} parent=11 // pred_fallthru
          _
        // Predicated region
        $region45: #{forward.11} parent=11 // pred_check
          %p401 = pneg %p243
        $region46: #{forward.11} parent=11 // pred_check_branch
          %403 = sbr.rel (%p401) target = $region48
        $region47: #{forward.11} parent=11 // pred_region
          %s405 = ssub.s32 16, 16
          %406 = vsyncadd [#allocation19], %s405
          %s408 = sshll.u32 [#allocation18], 4
          %s409 = int_to_ptr.vmem [resolvable:$true] %s408
          %411 = dma.hbm_to_vmem [thread:$0]  %s9, 16, %s409, [#allocation19]
        $region48: #{forward.11} parent=11 // pred_fallthru
          _
        // Predicated region
        $region49: #{forward.11} parent=11 // pred_check
          %p412 = pneg %p264
        $region50: #{forward.11} parent=11 // pred_check_branch
          %414 = sbr.rel (%p412) target = $region52
        $region51: #{forward.11} parent=11 // pred_region
          %s416 = ssub.s32 16, 16
          %417 = vsyncadd [#allocation19], %s416
          %s419 = sshll.u32 [#allocation20], 4
          %s420 = int_to_ptr.vmem [resolvable:$true] %s419
          %422 = dma.hbm_to_vmem [thread:$0]  %s10, 16, %s420, [#allocation19]
        $region52: #{forward.11} parent=11 // pred_fallthru
          _
      $region12: #{forward.11} parent=5 // pred_fallthru
        _
      %p423 = scmp.lt.s32.totalorder %s28, 2
      // Predicated region
      $region53: #{forward.11} parent=5 // pred_check
        %p424 = pneg %p423
      $region54: #{forward.11} parent=5 // pred_check_branch
        %426 = sbr.rel (%p424) target = $region56
      $region55: #{forward.11} parent=5 // pred_region
        // Predicated region
        $region57: #{forward.11} parent=55 // pred_check
          %p427 = pneg %p48
        $region58: #{forward.11} parent=55 // pred_check_branch
          %429 = sbr.rel (%p427) target = $region60
        $region59: #{forward.11} parent=55 // pred_region
          %s430 = sand.u32 %s38, 1
          %s431 = scalar_lea.sflag [#allocation4], %s430
          %s432 = sand.u32 %s38, 1
          %s433 = smul.addr %s432, 8
          %s434 = scalar_lea.vmem [#allocation3], %s433
          %s436 = ssub.s32 128, 128
          %437 = vsyncadd %s431, %s436
          %s438 = smul.addr %s28, 128
          %s439 = scalar_lea.hbm %s0, %s438
          %s441 = sshll.u32 %s434, 4
          %s442 = int_to_ptr.vmem [resolvable:$true] %s441
          %444 = dma.hbm_to_vmem [thread:$0]  %s439, 128, %s442, %s431
        $region60: #{forward.11} parent=55 // pred_fallthru
          _
      $region56: #{forward.11} parent=5 // pred_fallthru
        _
      %p445 = scmp.le.s32.totalorder 1, %s28
      %p446 = scmp.lt.s32.totalorder %s28, 3
      %p447 = pnand %p445, %p446
      %p448 = pneg %p447
      // Predicated region
      $region61: #{forward.11} parent=5 // pred_check
        _
      $region62: #{forward.11} parent=5 // pred_check_branch
        %450 = sbr.rel (%p447) target = $region64
      $region63: #{forward.11} parent=5 // pred_region
        %s451 = ssub.s32 %s28, 1
        %s452 = sand.u32 %s41, 1
        %s453 = scalar_lea.sflag [#allocation4], %s452
        %s454 = sand.u32 %s41, 1
        %s455 = smul.addr %s454, 8
        %s456 = scalar_lea.vmem [#allocation3], %s455
        // Predicated region
        $region65: #{forward.11} parent=63 // pred_check
          %p457 = pneg %p54
        $region66: #{forward.11} parent=63 // pred_check_branch
          %459 = sbr.rel (%p457) target = $region68
        $region67: #{forward.11} parent=63 // pred_region
          %460 = dma.done %s453, 128
        $region68: #{forward.11} parent=63 // pred_fallthru
          _
        // Predicated region
        $region69: #{forward.11} parent=63 // pred_check
          %p461 = pneg %p75
        $region70: #{forward.11} parent=63 // pred_check_branch
          %463 = sbr.rel (%p461) target = $region72
        $region71: #{forward.11} parent=63 // pred_region
          %464 = dma.done [#allocation7], 2048
        $region72: #{forward.11} parent=63 // pred_fallthru
          _
        // Predicated region
        $region73: #{forward.11} parent=63 // pred_check
          %p465 = pneg %p96
        $region74: #{forward.11} parent=63 // pred_check_branch
          %467 = sbr.rel (%p465) target = $region76
        $region75: #{forward.11} parent=63 // pred_region
          %468 = dma.done [#allocation7], 16
        $region76: #{forward.11} parent=63 // pred_fallthru
          _
        // Predicated region
        $region77: #{forward.11} parent=63 // pred_check
          %p469 = pneg %p117
        $region78: #{forward.11} parent=63 // pred_check_branch
          %471 = sbr.rel (%p469) target = $region80
        $region79: #{forward.11} parent=63 // pred_region
          %472 = dma.done [#allocation10], 2048
        $region80: #{forward.11} parent=63 // pred_fallthru
          _
        // Predicated region
        $region81: #{forward.11} parent=63 // pred_check
          %p473 = pneg %p138
        $region82: #{forward.11} parent=63 // pred_check_branch
          %475 = sbr.rel (%p473) target = $region84
        $region83: #{forward.11} parent=63 // pred_region
          %476 = dma.done [#allocation10], 16
        $region84: #{forward.11} parent=63 // pred_fallthru
          _
        // Predicated region
        $region85: #{forward.11} parent=63 // pred_check
          %p477 = pneg %p159
        $region86: #{forward.11} parent=63 // pred_check_branch
          %479 = sbr.rel (%p477) target = $region88
        $region87: #{forward.11} parent=63 // pred_region
          %480 = dma.done [#allocation13], 2048
        $region88: #{forward.11} parent=63 // pred_fallthru
          _
        // Predicated region
        $region89: #{forward.11} parent=63 // pred_check
          %p481 = pneg %p180
        $region90: #{forward.11} parent=63 // pred_check_branch
          %483 = sbr.rel (%p481) target = $region92
        $region91: #{forward.11} parent=63 // pred_region
          %484 = dma.done [#allocation13], 16
        $region92: #{forward.11} parent=63 // pred_fallthru
          _
        // Predicated region
        $region93: #{forward.11} parent=63 // pred_check
          %p485 = pneg %p201
        $region94: #{forward.11} parent=63 // pred_check_branch
          %487 = sbr.rel (%p485) target = $region96
        $region95: #{forward.11} parent=63 // pred_region
          %488 = dma.done [#allocation16], 2048
        $region96: #{forward.11} parent=63 // pred_fallthru
          _
        // Predicated region
        $region97: #{forward.11} parent=63 // pred_check
          %p489 = pneg %p222
        $region98: #{forward.11} parent=63 // pred_check_branch
          %491 = sbr.rel (%p489) target = $region100
        $region99: #{forward.11} parent=63 // pred_region
          %492 = dma.done [#allocation16], 16
        $region100: #{forward.11} parent=63 // pred_fallthru
          _
        // Predicated region
        $region101: #{forward.11} parent=63 // pred_check
          %p493 = pneg %p243
        $region102: #{forward.11} parent=63 // pred_check_branch
          %495 = sbr.rel (%p493) target = $region104
        $region103: #{forward.11} parent=63 // pred_region
          %496 = dma.done [#allocation19], 16
        $region104: #{forward.11} parent=63 // pred_fallthru
          _
        // Predicated region
        $region105: #{forward.11} parent=63 // pred_check
          %p497 = pneg %p264
        $region106: #{forward.11} parent=63 // pred_check_branch
          %499 = sbr.rel (%p497) target = $region108
        $region107: #{forward.11} parent=63 // pred_region
          %500 = dma.done [#allocation19], 16
        $region108: #{forward.11} parent=63 // pred_fallthru
          _
        %s501 = sand.u32 %s41, 1
        %s502 = scalar_lea.sflag [#allocation4], %s501
        %s503 = sand.u32 %s41, 1
        %s504 = smul.addr %s503, 8
        %s505 = scalar_lea.vmem [#allocation3], %s504
        %p506 = pneg %p54
        %p507 = pneg %p51
        %p508 = pneg %p75
        %p509 = pneg %p72
        %p510 = pneg %p96
        %p511 = pneg %p93
        %p512 = pneg %p117
        %p513 = pneg %p114
        %p514 = pneg %p138
        %p515 = pneg %p135
        %p516 = pneg %p159
        %p517 = pneg %p156
        %p518 = pneg %p180
        %p519 = pneg %p177
        %p520 = pneg %p201
        %p521 = pneg %p198
        %p522 = pneg %p222
        %p523 = pneg %p219
        %p524 = pneg %p243
        %p525 = pneg %p240
        %p526 = pneg %p264
        %p527 = pneg %p261
        %p528 = pneg %p290
        %p529 = pneg %p287
        %s530 = sand.u32 %s277, 1
        %s531 = scalar_lea.sflag [#allocation5], %s530
        %s532 = sand.u32 %s277, 1
        %s533 = smul.addr %s532, 8
        %s534 = scalar_lea.vmem [#allocation21], %s533
        %v535 = vld [vmem:[%s456] sm:$0xff]
        %v536 = vld [vmem:[#allocation6] sm:$0xff]
        %v537 = vld [vmem:[#allocation6 + $0x8] sm:$0xff]
        %v538 = vld [vmem:[#allocation6 + $0x10] sm:$0xff]
        %v539 = vld [vmem:[#allocation6 + $0x18] sm:$0xff]
        %v540 = vld [vmem:[#allocation6 + $0x20] sm:$0xff]
        %v541 = vld [vmem:[#allocation6 + $0x28] sm:$0xff]
        %v542 = vld [vmem:[#allocation6 + $0x30] sm:$0xff]
        %v543 = vld [vmem:[#allocation6 + $0x38] sm:$0xff]
        %v544 = vld [vmem:[#allocation6 + $0x40] sm:$0xff]
        %v545 = vld [vmem:[#allocation6 + $0x48] sm:$0xff]
        %v546 = vld [vmem:[#allocation6 + $0x50] sm:$0xff]
        %v547 = vld [vmem:[#allocation6 + $0x58] sm:$0xff]
        %v548 = vld [vmem:[#allocation6 + $0x60] sm:$0xff]
        %v549 = vld [vmem:[#allocation6 + $0x68] sm:$0xff]
        %v550 = vld [vmem:[#allocation6 + $0x70] sm:$0xff]
        %v551 = vld [vmem:[#allocation6 + $0x78] sm:$0xff]
        %v552 = vld [vmem:[#allocation8] sm:$0x1]
        %v554 = vlaneseq
        %v555 = vshrl.u32 %v554, 7
        %v556 = vsub.s32 0, %v555
        %v557 = vrot.slane %v552, %v556
        %559 = vmatprep.subr.mxu0 0.0
        %560 = vmatpush1.msra.mxu0 %v536
        %561 = vmatprep.subr.mxu0 0.0
        %562 = vmatpush1.msra.mxu0 %v537
        %563 = vmatprep.subr.mxu0 0.0
        %564 = vmatpush1.msra.mxu0 %v538
        %565 = vmatprep.subr.mxu0 0.0
        %566 = vmatpush1.msra.mxu0 %v539
        %567 = vmatprep.subr.mxu0 0.0
        %568 = vmatpush1.msra.mxu0 %v540
        %569 = vmatprep.subr.mxu0 0.0
        %570 = vmatpush1.msra.mxu0 %v541
        %571 = vmatprep.subr.mxu0 0.0
        %572 = vmatpush1.msra.mxu0 %v542
        %573 = vmatprep.subr.mxu0 0.0
        %574 = vmatpush1.msra.mxu0 %v543
        %575 = vmatprep.subr.mxu0 0.0
        %576 = vmatpush1.msra.mxu0 %v544
        %577 = vmatprep.subr.mxu0 0.0
        %578 = vmatpush1.msra.mxu0 %v545
        %579 = vmatprep.subr.mxu0 0.0
        %580 = vmatpush1.msra.mxu0 %v546
        %581 = vmatprep.subr.mxu0 0.0
        %582 = vmatpush1.msra.mxu0 %v547
        %583 = vmatprep.subr.mxu0 0.0
        %584 = vmatpush1.msra.mxu0 %v548
        %585 = vmatprep.subr.mxu0 0.0
        %586 = vmatpush1.msra.mxu0 %v549
        %587 = vmatprep.subr.mxu0 0.0
        %588 = vmatpush1.msra.mxu0 %v550
        %589 = vmatprep.subr.mxu0 0.0
        %590 = vmatpush1.msra.mxu0 %v551
        %591 = vmatprep.subr.mxu0 0.0
        %592 = vmatpush1.msra.mxu0 0.0
        %593 = vmatprep.subr.mxu0 0.0
        %594 = vmatpush1.msra.mxu0 0.0
        %595 = vmatprep.subr.mxu0 0.0
        %596 = vmatpush1.msra.mxu0 0.0
        %597 = vmatprep.subr.mxu0 0.0
        %598 = vmatpush1.msra.mxu0 0.0
        %599 = vmatprep.subr.mxu0 0.0
        %600 = vmatpush1.msra.mxu0 0.0
        %601 = vmatprep.subr.mxu0 0.0
        %602 = vmatpush1.msra.mxu0 0.0
        %603 = vmatprep.subr.mxu0 0.0
        %604 = vmatpush1.msra.mxu0 0.0
        %605 = vmatprep.subr.mxu0 0.0
        %606 = vmatpush1.msra.mxu0 0.0
        %607 = vmatprep.subr.mxu0 0.0
        %608 = vmatpush1.msra.mxu0 0.0
        %609 = vmatprep.subr.mxu0 0.0
        %610 = vmatpush1.msra.mxu0 0.0
        %611 = vmatprep.subr.mxu0 0.0
        %612 = vmatpush1.msra.mxu0 0.0
        %613 = vmatprep.subr.mxu0 0.0
        %614 = vmatpush1.msra.mxu0 0.0
        %615 = vmatprep.subr.mxu0 0.0
        %616 = vmatpush1.msra.mxu0 0.0
        %617 = vmatprep.subr.mxu0 0.0
        %618 = vmatpush1.msra.mxu0 0.0
        %619 = vmatprep.subr.mxu0 0.0
        %620 = vmatpush1.msra.mxu0 0.0
        %621 = vmatprep.subr.mxu0 0.0
        %622 = vmatpush1.msra.mxu0 0.0
        %623 = vmatprep.mubr.f32.mxu0 0.0
        %624 = vmatmul.mubr.f32.gmra.mrb[0].mxu0 %v535
        %v625 = vpop.f32.mrb[0].mxu0
        %v626 = vadd.f32 %v557, %v625
        %v627 = vpop.f32.mrb[0].mxu0
        %628 = vdwg.mxu0
        %v629 = vmul.f32 %v626, 0.17677669
        %v630 = vld [vmem:[#allocation9] sm:$0xff]
        %v631 = vld [vmem:[#allocation9 + $0x8] sm:$0xff]
        %v632 = vld [vmem:[#allocation9 + $0x10] sm:$0xff]
        %v633 = vld [vmem:[#allocation9 + $0x18] sm:$0xff]
        %v634 = vld [vmem:[#allocation9 + $0x20] sm:$0xff]
        %v635 = vld [vmem:[#allocation9 + $0x28] sm:$0xff]
        %v636 = vld [vmem:[#allocation9 + $0x30] sm:$0xff]
        %v637 = vld [vmem:[#allocation9 + $0x38] sm:$0xff]
        %v638 = vld [vmem:[#allocation9 + $0x40] sm:$0xff]
        %v639 = vld [vmem:[#allocation9 + $0x48] sm:$0xff]
        %v640 = vld [vmem:[#allocation9 + $0x50] sm:$0xff]
        %v641 = vld [vmem:[#allocation9 + $0x58] sm:$0xff]
        %v642 = vld [vmem:[#allocation9 + $0x60] sm:$0xff]
        %v643 = vld [vmem:[#allocation9 + $0x68] sm:$0xff]
        %v644 = vld [vmem:[#allocation9 + $0x70] sm:$0xff]
        %v645 = vld [vmem:[#allocation9 + $0x78] sm:$0xff]
        %v646 = vld [vmem:[#allocation11] sm:$0x1]
        %v648 = vlaneseq
        %v649 = vshrl.u32 %v648, 7
        %v650 = vsub.s32 0, %v649
        %v651 = vrot.slane %v646, %v650
        %653 = vmatprep.subr.mxu0 0.0
        %654 = vmatpush1.msra.mxu0 %v630
        %655 = vmatprep.subr.mxu0 0.0
        %656 = vmatpush1.msra.mxu0 %v631
        %657 = vmatprep.subr.mxu0 0.0
        %658 = vmatpush1.msra.mxu0 %v632
        %659 = vmatprep.subr.mxu0 0.0
        %660 = vmatpush1.msra.mxu0 %v633
        %661 = vmatprep.subr.mxu0 0.0
        %662 = vmatpush1.msra.mxu0 %v634
        %663 = vmatprep.subr.mxu0 0.0
        %664 = vmatpush1.msra.mxu0 %v635
        %665 = vmatprep.subr.mxu0 0.0
        %666 = vmatpush1.msra.mxu0 %v636
        %667 = vmatprep.subr.mxu0 0.0
        %668 = vmatpush1.msra.mxu0 %v637
        %669 = vmatprep.subr.mxu0 0.0
        %670 = vmatpush1.msra.mxu0 %v638
        %671 = vmatprep.subr.mxu0 0.0
        %672 = vmatpush1.msra.mxu0 %v639
        %673 = vmatprep.subr.mxu0 0.0
        %674 = vmatpush1.msra.mxu0 %v640
        %675 = vmatprep.subr.mxu0 0.0
        %676 = vmatpush1.msra.mxu0 %v641
        %677 = vmatprep.subr.mxu0 0.0
        %678 = vmatpush1.msra.mxu0 %v642
        %679 = vmatprep.subr.mxu0 0.0
        %680 = vmatpush1.msra.mxu0 %v643
        %681 = vmatprep.subr.mxu0 0.0
        %682 = vmatpush1.msra.mxu0 %v644
        %683 = vmatprep.subr.mxu0 0.0
        %684 = vmatpush1.msra.mxu0 %v645
        %685 = vmatprep.subr.mxu0 0.0
        %686 = vmatpush1.msra.mxu0 0.0
        %687 = vmatprep.subr.mxu0 0.0
        %688 = vmatpush1.msra.mxu0 0.0
        %689 = vmatprep.subr.mxu0 0.0
        %690 = vmatpush1.msra.mxu0 0.0
        %691 = vmatprep.subr.mxu0 0.0
        %692 = vmatpush1.msra.mxu0 0.0
        %693 = vmatprep.subr.mxu0 0.0
        %694 = vmatpush1.msra.mxu0 0.0
        %695 = vmatprep.subr.mxu0 0.0
        %696 = vmatpush1.msra.mxu0 0.0
        %697 = vmatprep.subr.mxu0 0.0
        %698 = vmatpush1.msra.mxu0 0.0
        %699 = vmatprep.subr.mxu0 0.0
        %700 = vmatpush1.msra.mxu0 0.0
        %701 = vmatprep.subr.mxu0 0.0
        %702 = vmatpush1.msra.mxu0 0.0
        %703 = vmatprep.subr.mxu0 0.0
        %704 = vmatpush1.msra.mxu0 0.0
        %705 = vmatprep.subr.mxu0 0.0
        %706 = vmatpush1.msra.mxu0 0.0
        %707 = vmatprep.subr.mxu0 0.0
        %708 = vmatpush1.msra.mxu0 0.0
        %709 = vmatprep.subr.mxu0 0.0
        %710 = vmatpush1.msra.mxu0 0.0
        %711 = vmatprep.subr.mxu0 0.0
        %712 = vmatpush1.msra.mxu0 0.0
        %713 = vmatprep.subr.mxu0 0.0
        %714 = vmatpush1.msra.mxu0 0.0
        %715 = vmatprep.subr.mxu0 0.0
        %716 = vmatpush1.msra.mxu0 0.0
        %717 = vmatprep.mubr.f32.mxu0 0.0
        %718 = vmatmul.mubr.f32.gmra.mrb[0].mxu0 %v535
        %v719 = vpop.f32.mrb[0].mxu0
        %v720 = vadd.f32 %v651, %v719
        %v721 = vpop.f32.mrb[0].mxu0
        %722 = vdwg.mxu0
        %v723 = vld [vmem:[#allocation12] sm:$0xff]
        %v724 = vld [vmem:[#allocation12 + $0x8] sm:$0xff]
        %v725 = vld [vmem:[#allocation12 + $0x10] sm:$0xff]
        %v726 = vld [vmem:[#allocation12 + $0x18] sm:$0xff]
        %v727 = vld [vmem:[#allocation12 + $0x20] sm:$0xff]
        %v728 = vld [vmem:[#allocation12 + $0x28] sm:$0xff]
        %v729 = vld [vmem:[#allocation12 + $0x30] sm:$0xff]
        %v730 = vld [vmem:[#allocation12 + $0x38] sm:$0xff]
        %v731 = vld [vmem:[#allocation12 + $0x40] sm:$0xff]
        %v732 = vld [vmem:[#allocation12 + $0x48] sm:$0xff]
        %v733 = vld [vmem:[#allocation12 + $0x50] sm:$0xff]
        %v734 = vld [vmem:[#allocation12 + $0x58] sm:$0xff]
        %v735 = vld [vmem:[#allocation12 + $0x60] sm:$0xff]
        %v736 = vld [vmem:[#allocation12 + $0x68] sm:$0xff]
        %v737 = vld [vmem:[#allocation12 + $0x70] sm:$0xff]
        %v738 = vld [vmem:[#allocation12 + $0x78] sm:$0xff]
        %v739 = vld [vmem:[#allocation14] sm:$0x1]
        %v741 = vlaneseq
        %v742 = vshrl.u32 %v741, 7
        %v743 = vsub.s32 0, %v742
        %v744 = vrot.slane %v739, %v743
        %746 = vmatprep.subr.mxu0 0.0
        %747 = vmatpush1.msra.mxu0 %v723
        %748 = vmatprep.subr.mxu0 0.0
        %749 = vmatpush1.msra.mxu0 %v724
        %750 = vmatprep.subr.mxu0 0.0
        %751 = vmatpush1.msra.mxu0 %v725
        %752 = vmatprep.subr.mxu0 0.0
        %753 = vmatpush1.msra.mxu0 %v726
        %754 = vmatprep.subr.mxu0 0.0
        %755 = vmatpush1.msra.mxu0 %v727
        %756 = vmatprep.subr.mxu0 0.0
        %757 = vmatpush1.msra.mxu0 %v728
        %758 = vmatprep.subr.mxu0 0.0
        %759 = vmatpush1.msra.mxu0 %v729
        %760 = vmatprep.subr.mxu0 0.0
        %761 = vmatpush1.msra.mxu0 %v730
        %762 = vmatprep.subr.mxu0 0.0
        %763 = vmatpush1.msra.mxu0 %v731
        %764 = vmatprep.subr.mxu0 0.0
        %765 = vmatpush1.msra.mxu0 %v732
        %766 = vmatprep.subr.mxu0 0.0
        %767 = vmatpush1.msra.mxu0 %v733
        %768 = vmatprep.subr.mxu0 0.0
        %769 = vmatpush1.msra.mxu0 %v734
        %770 = vmatprep.subr.mxu0 0.0
        %771 = vmatpush1.msra.mxu0 %v735
        %772 = vmatprep.subr.mxu0 0.0
        %773 = vmatpush1.msra.mxu0 %v736
        %774 = vmatprep.subr.mxu0 0.0
        %775 = vmatpush1.msra.mxu0 %v737
        %776 = vmatprep.subr.mxu0 0.0
        %777 = vmatpush1.msra.mxu0 %v738
        %778 = vmatprep.subr.mxu0 0.0
        %779 = vmatpush1.msra.mxu0 0.0
        %780 = vmatprep.subr.mxu0 0.0
        %781 = vmatpush1.msra.mxu0 0.0
        %782 = vmatprep.subr.mxu0 0.0
        %783 = vmatpush1.msra.mxu0 0.0
        %784 = vmatprep.subr.mxu0 0.0
        %785 = vmatpush1.msra.mxu0 0.0
        %786 = vmatprep.subr.mxu0 0.0
        %787 = vmatpush1.msra.mxu0 0.0
        %788 = vmatprep.subr.mxu0 0.0
        %789 = vmatpush1.msra.mxu0 0.0
        %790 = vmatprep.subr.mxu0 0.0
        %791 = vmatpush1.msra.mxu0 0.0
        %792 = vmatprep.subr.mxu0 0.0
        %793 = vmatpush1.msra.mxu0 0.0
        %794 = vmatprep.subr.mxu0 0.0
        %795 = vmatpush1.msra.mxu0 0.0
        %796 = vmatprep.subr.mxu0 0.0
        %797 = vmatpush1.msra.mxu0 0.0
        %798 = vmatprep.subr.mxu0 0.0
        %799 = vmatpush1.msra.mxu0 0.0
        %800 = vmatprep.subr.mxu0 0.0
        %801 = vmatpush1.msra.mxu0 0.0
        %802 = vmatprep.subr.mxu0 0.0
        %803 = vmatpush1.msra.mxu0 0.0
        %804 = vmatprep.subr.mxu0 0.0
        %805 = vmatpush1.msra.mxu0 0.0
        %806 = vmatprep.subr.mxu0 0.0
        %807 = vmatpush1.msra.mxu0 0.0
        %808 = vmatprep.subr.mxu0 0.0
        %809 = vmatpush1.msra.mxu0 0.0
        %810 = vmatprep.mubr.f32.mxu0 0.0
        %811 = vmatmul.mubr.f32.gmra.mrb[0].mxu0 %v535
        %v812 = vpop.f32.mrb[0].mxu0
        %v813 = vadd.f32 %v744, %v812
        %v814 = vpop.f32.mrb[0].mxu0
        %815 = vdwg.mxu0
        %vm816 = vcmask 261120
        %v818 = vsel %vm816, %v629, 0
        %v821 = vsel %vm816, %v720, 0
        %823 = vmatprep.subr.mxu0 0.0
        %824 = vmatpush1.xpose.msra.mxu0 %v821
        %825 = vmatprep.subr.mxu0 0.0
        %826 = vmatpush1.xpose.msra.mxu0 0.0
        %827 = vmatprep.subr.mxu0 0.0
        %828 = vmatpush1.xpose.msra.mxu0 0.0
        %829 = vmatprep.subr.mxu0 0.0
        %830 = vmatpush1.xpose.msra.mxu0 0.0
        %831 = vmatprep.subr.mxu0 0.0
        %832 = vmatpush1.xpose.msra.mxu0 0.0
        %833 = vmatprep.subr.mxu0 0.0
        %834 = vmatpush1.xpose.msra.mxu0 0.0
        %835 = vmatprep.subr.mxu0 0.0
        %836 = vmatpush1.xpose.msra.mxu0 0.0
        %837 = vmatprep.subr.mxu0 0.0
        %838 = vmatpush1.xpose.msra.mxu0 0.0
        %839 = vmatprep.subr.mxu0 0.0
        %840 = vmatpush1.xpose.msra.mxu0 0.0
        %841 = vmatprep.subr.mxu0 0.0
        %842 = vmatpush1.xpose.msra.mxu0 0.0
        %843 = vmatprep.subr.mxu0 0.0
        %844 = vmatpush1.xpose.msra.mxu0 0.0
        %845 = vmatprep.subr.mxu0 0.0
        %846 = vmatpush1.xpose.msra.mxu0 0.0
        %847 = vmatprep.subr.mxu0 0.0
        %848 = vmatpush1.xpose.msra.mxu0 0.0
        %849 = vmatprep.subr.mxu0 0.0
        %850 = vmatpush1.xpose.msra.mxu0 0.0
        %851 = vmatprep.subr.mxu0 0.0
        %852 = vmatpush1.xpose.msra.mxu0 0.0
        %853 = vmatprep.subr.mxu0 0.0
        %854 = vmatpush1.xpose.msra.mxu0 0.0
        %855 = vmatprep.subr.mxu0 0.0
        %856 = vmatpush1.xpose.msra.mxu0 0.0
        %857 = vmatprep.subr.mxu0 0.0
        %858 = vmatpush1.xpose.msra.mxu0 0.0
        %859 = vmatprep.subr.mxu0 0.0
        %860 = vmatpush1.xpose.msra.mxu0 0.0
        %861 = vmatprep.subr.mxu0 0.0
        %862 = vmatpush1.xpose.msra.mxu0 0.0
        %863 = vmatprep.subr.mxu0 0.0
        %864 = vmatpush1.xpose.msra.mxu0 0.0
        %865 = vmatprep.subr.mxu0 0.0
        %866 = vmatpush1.xpose.msra.mxu0 0.0
        %867 = vmatprep.subr.mxu0 0.0
        %868 = vmatpush1.xpose.msra.mxu0 0.0
        %869 = vmatprep.subr.mxu0 0.0
        %870 = vmatpush1.xpose.msra.mxu0 0.0
        %871 = vmatprep.subr.mxu0 0.0
        %872 = vmatpush1.xpose.msra.mxu0 0.0
        %873 = vmatprep.subr.mxu0 0.0
        %874 = vmatpush1.xpose.msra.mxu0 0.0
        %875 = vmatprep.subr.mxu0 0.0
        %876 = vmatpush1.xpose.msra.mxu0 0.0
        %877 = vmatprep.subr.mxu0 0.0
        %878 = vmatpush1.xpose.msra.mxu0 0.0
        %879 = vmatprep.subr.mxu0 0.0
        %880 = vmatpush1.xpose.msra.mxu0 0.0
        %881 = vmatprep.subr.mxu0 0.0
        %882 = vmatpush1.xpose.msra.mxu0 0.0
        %883 = vmatprep.subr.mxu0 0.0
        %884 = vmatpush1.xpose.msra.mxu0 0.0
        %885 = vmatprep.subr.mxu0 0.0
        %886 = vmatpush1.xpose.msra.mxu0 0.0
        %887 = vmatprep.mubr.f32.mxu0 0.0
        %888 = vmatmul.mubr.f32.gmra.mrb[0].mxu0 %v818
        %v889 = vpop.f32.mrb[0].mxu0
        %v890 = vadd.f32 0.0, %v889
        %v891 = vpop.f32.mrb[0].mxu0
        %892 = vdwg.mxu0
        %vm893 = vcmask 64512
        %v894 = vsel %vm893, %v890, -inf
        %895 = vmax.xlane.f32.xlu0 %v894
        %v896 = vpop.xlane.xlu0 %895
        %v897 = vsub.f32 %v890, %v896
        %v898 = vmul.f32 %v897, 1.442695
        %v899 = vpow.pop %v898
        %v900 = vsel %vm893, %v899, 0.0
        %901 = vadd.xlane.f32.xlu0 %v900
        %v902 = vpop.xlane.xlu0 %901
        %v903 = vrcp.pop %v902
        %v904 = vmul.f32 %v899, %v903
        %v906 = vsel %vm893, %v904, 0
        %908 = vmatprep.subr.mxu0 0.0
        %909 = vmatpush1.msra.mxu0 %v813
        %910 = vmatprep.subr.mxu0 0.0
        %911 = vmatpush1.msra.mxu0 0.0
        %912 = vmatprep.subr.mxu0 0.0
        %913 = vmatpush1.msra.mxu0 0.0
        %914 = vmatprep.subr.mxu0 0.0
        %915 = vmatpush1.msra.mxu0 0.0
        %916 = vmatprep.subr.mxu0 0.0
        %917 = vmatpush1.msra.mxu0 0.0
        %918 = vmatprep.subr.mxu0 0.0
        %919 = vmatpush1.msra.mxu0 0.0
        %920 = vmatprep.subr.mxu0 0.0
        %921 = vmatpush1.msra.mxu0 0.0
        %922 = vmatprep.subr.mxu0 0.0
        %923 = vmatpush1.msra.mxu0 0.0
        %924 = vmatprep.subr.mxu0 0.0
        %925 = vmatpush1.msra.mxu0 0.0
        %926 = vmatprep.subr.mxu0 0.0
        %927 = vmatpush1.msra.mxu0 0.0
        %928 = vmatprep.subr.mxu0 0.0
        %929 = vmatpush1.msra.mxu0 0.0
        %930 = vmatprep.subr.mxu0 0.0
        %931 = vmatpush1.msra.mxu0 0.0
        %932 = vmatprep.subr.mxu0 0.0
        %933 = vmatpush1.msra.mxu0 0.0
        %934 = vmatprep.subr.mxu0 0.0
        %935 = vmatpush1.msra.mxu0 0.0
        %936 = vmatprep.subr.mxu0 0.0
        %937 = vmatpush1.msra.mxu0 0.0
        %938 = vmatprep.subr.mxu0 0.0
        %939 = vmatpush1.msra.mxu0 0.0
        %940 = vmatprep.subr.mxu0 0.0
        %941 = vmatpush1.msra.mxu0 0.0
        %942 = vmatprep.subr.mxu0 0.0
        %943 = vmatpush1.msra.mxu0 0.0
        %944 = vmatprep.subr.mxu0 0.0
        %945 = vmatpush1.msra.mxu0 0.0
        %946 = vmatprep.subr.mxu0 0.0
        %947 = vmatpush1.msra.mxu0 0.0
        %948 = vmatprep.subr.mxu0 0.0
        %949 = vmatpush1.msra.mxu0 0.0
        %950 = vmatprep.subr.mxu0 0.0
        %951 = vmatpush1.msra.mxu0 0.0
        %952 = vmatprep.subr.mxu0 0.0
        %953 = vmatpush1.msra.mxu0 0.0
        %954 = vmatprep.subr.mxu0 0.0
        %955 = vmatpush1.msra.mxu0 0.0
        %956 = vmatprep.subr.mxu0 0.0
        %957 = vmatpush1.msra.mxu0 0.0
        %958 = vmatprep.subr.mxu0 0.0
        %959 = vmatpush1.msra.mxu0 0.0
        %960 = vmatprep.subr.mxu0 0.0
        %961 = vmatpush1.msra.mxu0 0.0
        %962 = vmatprep.subr.mxu0 0.0
        %963 = vmatpush1.msra.mxu0 0.0
        %964 = vmatprep.subr.mxu0 0.0
        %965 = vmatpush1.msra.mxu0 0.0
        %966 = vmatprep.subr.mxu0 0.0
        %967 = vmatpush1.msra.mxu0 0.0
        %968 = vmatprep.subr.mxu0 0.0
        %969 = vmatpush1.msra.mxu0 0.0
        %970 = vmatprep.subr.mxu0 0.0
        %971 = vmatpush1.msra.mxu0 0.0
        %972 = vmatprep.mubr.f32.mxu0 0.0
        %973 = vmatmul.mubr.f32.gmra.mrb[0].mxu0 %v906
        %v974 = vpop.f32.mrb[0].mxu0
        %v975 = vadd.f32 0.0, %v974
        %v976 = vpop.f32.mrb[0].mxu0
        %977 = vdwg.mxu0
        %978 = vst.msk [vmem:[#allocation2] sm:$0xff] %vm816, %v975
        %979 = vrot.lane.b32.xlu0 %v629, 96
        %v980 = vpop.permute.xlu0 %979
        %981 = vrot.lane.b32.xlu0 %v720, 96
        %v982 = vpop.permute.xlu0 %981
        %v983 = vsel %vm816, %v980, 0
        %v985 = vsel %vm816, %v982, 0
        %987 = vmatprep.subr.mxu0 0.0
        %988 = vmatpush1.xpose.msra.mxu0 %v985
        %989 = vmatprep.subr.mxu0 0.0
        %990 = vmatpush1.xpose.msra.mxu0 0.0
        %991 = vmatprep.subr.mxu0 0.0
        %992 = vmatpush1.xpose.msra.mxu0 0.0
        %993 = vmatprep.subr.mxu0 0.0
        %994 = vmatpush1.xpose.msra.mxu0 0.0
        %995 = vmatprep.subr.mxu0 0.0
        %996 = vmatpush1.xpose.msra.mxu0 0.0
        %997 = vmatprep.subr.mxu0 0.0
        %998 = vmatpush1.xpose.msra.mxu0 0.0
        %999 = vmatprep.subr.mxu0 0.0
        %1000 = vmatpush1.xpose.msra.mxu0 0.0
        %1001 = vmatprep.subr.mxu0 0.0
        %1002 = vmatpush1.xpose.msra.mxu0 0.0
        %1003 = vmatprep.subr.mxu0 0.0
        %1004 = vmatpush1.xpose.msra.mxu0 0.0
        %1005 = vmatprep.subr.mxu0 0.0
        %1006 = vmatpush1.xpose.msra.mxu0 0.0
        %1007 = vmatprep.subr.mxu0 0.0
        %1008 = vmatpush1.xpose.msra.mxu0 0.0
        %1009 = vmatprep.subr.mxu0 0.0
        %1010 = vmatpush1.xpose.msra.mxu0 0.0
        %1011 = vmatprep.subr.mxu0 0.0
        %1012 = vmatpush1.xpose.msra.mxu0 0.0
        %1013 = vmatprep.subr.mxu0 0.0
        %1014 = vmatpush1.xpose.msra.mxu0 0.0
        %1015 = vmatprep.subr.mxu0 0.0
        %1016 = vmatpush1.xpose.msra.mxu0 0.0
        %1017 = vmatprep.subr.mxu0 0.0
        %1018 = vmatpush1.xpose.msra.mxu0 0.0
        %1019 = vmatprep.subr.mxu0 0.0
        %1020 = vmatpush1.xpose.msra.mxu0 0.0
        %1021 = vmatprep.subr.mxu0 0.0
        %1022 = vmatpush1.xpose.msra.mxu0 0.0
        %1023 = vmatprep.subr.mxu0 0.0
        %1024 = vmatpush1.xpose.msra.mxu0 0.0
        %1025 = vmatprep.subr.mxu0 0.0
        %1026 = vmatpush1.xpose.msra.mxu0 0.0
        %1027 = vmatprep.subr.mxu0 0.0
        %1028 = vmatpush1.xpose.msra.mxu0 0.0
        %1029 = vmatprep.subr.mxu0 0.0
        %1030 = vmatpush1.xpose.msra.mxu0 0.0
        %1031 = vmatprep.subr.mxu0 0.0
        %1032 = vmatpush1.xpose.msra.mxu0 0.0
        %1033 = vmatprep.subr.mxu0 0.0
        %1034 = vmatpush1.xpose.msra.mxu0 0.0
        %1035 = vmatprep.subr.mxu0 0.0
        %1036 = vmatpush1.xpose.msra.mxu0 0.0
        %1037 = vmatprep.subr.mxu0 0.0
        %1038 = vmatpush1.xpose.msra.mxu0 0.0
        %1039 = vmatprep.subr.mxu0 0.0
        %1040 = vmatpush1.xpose.msra.mxu0 0.0
        %1041 = vmatprep.subr.mxu0 0.0
        %1042 = vmatpush1.xpose.msra.mxu0 0.0
        %1043 = vmatprep.subr.mxu0 0.0
        %1044 = vmatpush1.xpose.msra.mxu0 0.0
        %1045 = vmatprep.subr.mxu0 0.0
        %1046 = vmatpush1.xpose.msra.mxu0 0.0
        %1047 = vmatprep.subr.mxu0 0.0
        %1048 = vmatpush1.xpose.msra.mxu0 0.0
        %1049 = vmatprep.subr.mxu0 0.0
        %1050 = vmatpush1.xpose.msra.mxu0 0.0
        %1051 = vmatprep.mubr.f32.mxu0 0.0
        %1052 = vmatmul.mubr.f32.gmra.mrb[0].mxu0 %v983
        %v1053 = vpop.f32.mrb[0].mxu0
        %v1054 = vadd.f32 0.0, %v1053
        %v1055 = vpop.f32.mrb[0].mxu0
        %1056 = vdwg.mxu0
        %v1057 = vsel %vm893, %v1054, -inf
        %1058 = vmax.xlane.f32.xlu0 %v1057
        %v1059 = vpop.xlane.xlu0 %1058
        %v1060 = vsub.f32 %v1054, %v1059
        %v1061 = vmul.f32 %v1060, 1.442695
        %v1062 = vpow.pop %v1061
        %v1063 = vsel %vm893, %v1062, 0.0
        %1064 = vadd.xlane.f32.xlu0 %v1063
        %v1065 = vpop.xlane.xlu0 %1064
        %v1066 = vrcp.pop %v1065
        %v1067 = vmul.f32 %v1062, %v1066
        %1069 = vrot.lane.b32.xlu0 %v813, 96
        %v1070 = vpop.permute.xlu0 %1069
        %v1073 = vsel %vm893, %v1067, 0
        %1075 = vmatprep.subr.mxu0 0.0
        %1076 = vmatpush1.msra.mxu0 %v1070
        %1077 = vmatprep.subr.mxu0 0.0
        %1078 = vmatpush1.msra.mxu0 0.0
        %1079 = vmatprep.subr.mxu0 0.0
        %1080 = vmatpush1.msra.mxu0 0.0
        %1081 = vmatprep.subr.mxu0 0.0
        %1082 = vmatpush1.msra.mxu0 0.0
        %1083 = vmatprep.subr.mxu0 0.0
        %1084 = vmatpush1.msra.mxu0 0.0
        %1085 = vmatprep.subr.mxu0 0.0
        %1086 = vmatpush1.msra.mxu0 0.0
        %1087 = vmatprep.subr.mxu0 0.0
        %1088 = vmatpush1.msra.mxu0 0.0
        %1089 = vmatprep.subr.mxu0 0.0
        %1090 = vmatpush1.msra.mxu0 0.0
        %1091 = vmatprep.subr.mxu0 0.0
        %1092 = vmatpush1.msra.mxu0 0.0
        %1093 = vmatprep.subr.mxu0 0.0
        %1094 = vmatpush1.msra.mxu0 0.0
        %1095 = vmatprep.subr.mxu0 0.0
        %1096 = vmatpush1.msra.mxu0 0.0
        %1097 = vmatprep.subr.mxu0 0.0
        %1098 = vmatpush1.msra.mxu0 0.0
        %1099 = vmatprep.subr.mxu0 0.0
        %1100 = vmatpush1.msra.mxu0 0.0
        %1101 = vmatprep.subr.mxu0 0.0
        %1102 = vmatpush1.msra.mxu0 0.0
        %1103 = vmatprep.subr.mxu0 0.0
        %1104 = vmatpush1.msra.mxu0 0.0
        %1105 = vmatprep.subr.mxu0 0.0
        %1106 = vmatpush1.msra.mxu0 0.0
        %1107 = vmatprep.subr.mxu0 0.0
        %1108 = vmatpush1.msra.mxu0 0.0
        %1109 = vmatprep.subr.mxu0 0.0
        %1110 = vmatpush1.msra.mxu0 0.0
        %1111 = vmatprep.subr.mxu0 0.0
        %1112 = vmatpush1.msra.mxu0 0.0
        %1113 = vmatprep.subr.mxu0 0.0
        %1114 = vmatpush1.msra.mxu0 0.0
        %1115 = vmatprep.subr.mxu0 0.0
        %1116 = vmatpush1.msra.mxu0 0.0
        %1117 = vmatprep.subr.mxu0 0.0
        %1118 = vmatpush1.msra.mxu0 0.0
        %1119 = vmatprep.subr.mxu0 0.0
        %1120 = vmatpush1.msra.mxu0 0.0
        %1121 = vmatprep.subr.mxu0 0.0
        %1122 = vmatpush1.msra.mxu0 0.0
        %1123 = vmatprep.subr.mxu0 0.0
        %1124 = vmatpush1.msra.mxu0 0.0
        %1125 = vmatprep.subr.mxu0 0.0
        %1126 = vmatpush1.msra.mxu0 0.0
        %1127 = vmatprep.subr.mxu0 0.0
        %1128 = vmatpush1.msra.mxu0 0.0
        %1129 = vmatprep.subr.mxu0 0.0
        %1130 = vmatpush1.msra.mxu0 0.0
        %1131 = vmatprep.subr.mxu0 0.0
        %1132 = vmatpush1.msra.mxu0 0.0
        %1133 = vmatprep.subr.mxu0 0.0
        %1134 = vmatpush1.msra.mxu0 0.0
        %1135 = vmatprep.subr.mxu0 0.0
        %1136 = vmatpush1.msra.mxu0 0.0
        %1137 = vmatprep.subr.mxu0 0.0
        %1138 = vmatpush1.msra.mxu0 0.0
        %1139 = vmatprep.mubr.f32.mxu0 0.0
        %1140 = vmatmul.mubr.f32.gmra.mrb[0].mxu0 %v1073
        %v1141 = vpop.f32.mrb[0].mxu0
        %v1142 = vadd.f32 0.0, %v1141
        %v1143 = vpop.f32.mrb[0].mxu0
        %1144 = vdwg.mxu0
        %1146 = vrot.lane.b32.xlu0 %v1142, 32
        %v1147 = vpop.permute.xlu0 %1146
        %vm1149 = vcmask 523520
        %1150 = vst.msk [vmem:[#allocation2] sm:$0xff] %vm1149, %v1147
        %1151 = vrot.lane.b32.xlu0 %v629, 64
        %v1152 = vpop.permute.xlu0 %1151
        %1153 = vrot.lane.b32.xlu0 %v720, 64
        %v1154 = vpop.permute.xlu0 %1153
        %v1155 = vsel %vm816, %v1152, 0
        %v1157 = vsel %vm816, %v1154, 0
        %1159 = vmatprep.subr.mxu0 0.0
        %1160 = vmatpush1.xpose.msra.mxu0 %v1157
        %1161 = vmatprep.subr.mxu0 0.0
        %1162 = vmatpush1.xpose.msra.mxu0 0.0
        %1163 = vmatprep.subr.mxu0 0.0
        %1164 = vmatpush1.xpose.msra.mxu0 0.0
        %1165 = vmatprep.subr.mxu0 0.0
        %1166 = vmatpush1.xpose.msra.mxu0 0.0
        %1167 = vmatprep.subr.mxu0 0.0
        %1168 = vmatpush1.xpose.msra.mxu0 0.0
        %1169 = vmatprep.subr.mxu0 0.0
        %1170 = vmatpush1.xpose.msra.mxu0 0.0
        %1171 = vmatprep.subr.mxu0 0.0
        %1172 = vmatpush1.xpose.msra.mxu0 0.0
        %1173 = vmatprep.subr.mxu0 0.0
        %1174 = vmatpush1.xpose.msra.mxu0 0.0
        %1175 = vmatprep.subr.mxu0 0.0
        %1176 = vmatpush1.xpose.msra.mxu0 0.0
        %1177 = vmatprep.subr.mxu0 0.0
        %1178 = vmatpush1.xpose.msra.mxu0 0.0
        %1179 = vmatprep.subr.mxu0 0.0
        %1180 = vmatpush1.xpose.msra.mxu0 0.0
        %1181 = vmatprep.subr.mxu0 0.0
        %1182 = vmatpush1.xpose.msra.mxu0 0.0
        %1183 = vmatprep.subr.mxu0 0.0
        %1184 = vmatpush1.xpose.msra.mxu0 0.0
        %1185 = vmatprep.subr.mxu0 0.0
        %1186 = vmatpush1.xpose.msra.mxu0 0.0
        %1187 = vmatprep.subr.mxu0 0.0
        %1188 = vmatpush1.xpose.msra.mxu0 0.0
        %1189 = vmatprep.subr.mxu0 0.0
        %1190 = vmatpush1.xpose.msra.mxu0 0.0
        %1191 = vmatprep.subr.mxu0 0.0
        %1192 = vmatpush1.xpose.msra.mxu0 0.0
        %1193 = vmatprep.subr.mxu0 0.0
        %1194 = vmatpush1.xpose.msra.mxu0 0.0
        %1195 = vmatprep.subr.mxu0 0.0
        %1196 = vmatpush1.xpose.msra.mxu0 0.0
        %1197 = vmatprep.subr.mxu0 0.0
        %1198 = vmatpush1.xpose.msra.mxu0 0.0
        %1199 = vmatprep.subr.mxu0 0.0
        %1200 = vmatpush1.xpose.msra.mxu0 0.0
        %1201 = vmatprep.subr.mxu0 0.0
        %1202 = vmatpush1.xpose.msra.mxu0 0.0
        %1203 = vmatprep.subr.mxu0 0.0
        %1204 = vmatpush1.xpose.msra.mxu0 0.0
        %1205 = vmatprep.subr.mxu0 0.0
        %1206 = vmatpush1.xpose.msra.mxu0 0.0
        %1207 = vmatprep.subr.mxu0 0.0
        %1208 = vmatpush1.xpose.msra.mxu0 0.0
        %1209 = vmatprep.subr.mxu0 0.0
        %1210 = vmatpush1.xpose.msra.mxu0 0.0
        %1211 = vmatprep.subr.mxu0 0.0
        %1212 = vmatpush1.xpose.msra.mxu0 0.0
        %1213 = vmatprep.subr.mxu0 0.0
        %1214 = vmatpush1.xpose.msra.mxu0 0.0
        %1215 = vmatprep.subr.mxu0 0.0
        %1216 = vmatpush1.xpose.msra.mxu0 0.0
        %1217 = vmatprep.subr.mxu0 0.0
        %1218 = vmatpush1.xpose.msra.mxu0 0.0
        %1219 = vmatprep.subr.mxu0 0.0
        %1220 = vmatpush1.xpose.msra.mxu0 0.0
        %1221 = vmatprep.subr.mxu0 0.0
        %1222 = vmatpush1.xpose.msra.mxu0 0.0
        %1223 = vmatprep.mubr.f32.mxu0 0.0
        %1224 = vmatmul.mubr.f32.gmra.mrb[0].mxu0 %v1155
        %v1225 = vpop.f32.mrb[0].mxu0
        %v1226 = vadd.f32 0.0, %v1225
        %v1227 = vpop.f32.mrb[0].mxu0
        %1228 = vdwg.mxu0
        %v1229 = vsel %vm893, %v1226, -inf
        %1230 = vmax.xlane.f32.xlu0 %v1229
        %v1231 = vpop.xlane.xlu0 %1230
        %v1232 = vsub.f32 %v1226, %v1231
        %v1233 = vmul.f32 %v1232, 1.442695
        %v1234 = vpow.pop %v1233
        %v1235 = vsel %vm893, %v1234, 0.0
        %1236 = vadd.xlane.f32.xlu0 %v1235
        %v1237 = vpop.xlane.xlu0 %1236
        %v1238 = vrcp.pop %v1237
        %v1239 = vmul.f32 %v1234, %v1238
        %1240 = vrot.lane.b32.xlu0 %v813, 64
        %v1241 = vpop.permute.xlu0 %1240
        %v1244 = vsel %vm893, %v1239, 0
        %1246 = vmatprep.subr.mxu0 0.0
        %1247 = vmatpush1.msra.mxu0 %v1241
        %1248 = vmatprep.subr.mxu0 0.0
        %1249 = vmatpush1.msra.mxu0 0.0
        %1250 = vmatprep.subr.mxu0 0.0
        %1251 = vmatpush1.msra.mxu0 0.0
        %1252 = vmatprep.subr.mxu0 0.0
        %1253 = vmatpush1.msra.mxu0 0.0
        %1254 = vmatprep.subr.mxu0 0.0
        %1255 = vmatpush1.msra.mxu0 0.0
        %1256 = vmatprep.subr.mxu0 0.0
        %1257 = vmatpush1.msra.mxu0 0.0
        %1258 = vmatprep.subr.mxu0 0.0
        %1259 = vmatpush1.msra.mxu0 0.0
        %1260 = vmatprep.subr.mxu0 0.0
        %1261 = vmatpush1.msra.mxu0 0.0
        %1262 = vmatprep.subr.mxu0 0.0
        %1263 = vmatpush1.msra.mxu0 0.0
        %1264 = vmatprep.subr.mxu0 0.0
        %1265 = vmatpush1.msra.mxu0 0.0
        %1266 = vmatprep.subr.mxu0 0.0
        %1267 = vmatpush1.msra.mxu0 0.0
        %1268 = vmatprep.subr.mxu0 0.0
        %1269 = vmatpush1.msra.mxu0 0.0
        %1270 = vmatprep.subr.mxu0 0.0
        %1271 = vmatpush1.msra.mxu0 0.0
        %1272 = vmatprep.subr.mxu0 0.0
        %1273 = vmatpush1.msra.mxu0 0.0
        %1274 = vmatprep.subr.mxu0 0.0
        %1275 = vmatpush1.msra.mxu0 0.0
        %1276 = vmatprep.subr.mxu0 0.0
        %1277 = vmatpush1.msra.mxu0 0.0
        %1278 = vmatprep.subr.mxu0 0.0
        %1279 = vmatpush1.msra.mxu0 0.0
        %1280 = vmatprep.subr.mxu0 0.0
        %1281 = vmatpush1.msra.mxu0 0.0
        %1282 = vmatprep.subr.mxu0 0.0
        %1283 = vmatpush1.msra.mxu0 0.0
        %1284 = vmatprep.subr.mxu0 0.0
        %1285 = vmatpush1.msra.mxu0 0.0
        %1286 = vmatprep.subr.mxu0 0.0
        %1287 = vmatpush1.msra.mxu0 0.0
        %1288 = vmatprep.subr.mxu0 0.0
        %1289 = vmatpush1.msra.mxu0 0.0
        %1290 = vmatprep.subr.mxu0 0.0
        %1291 = vmatpush1.msra.mxu0 0.0
        %1292 = vmatprep.subr.mxu0 0.0
        %1293 = vmatpush1.msra.mxu0 0.0
        %1294 = vmatprep.subr.mxu0 0.0
        %1295 = vmatpush1.msra.mxu0 0.0
        %1296 = vmatprep.subr.mxu0 0.0
        %1297 = vmatpush1.msra.mxu0 0.0
        %1298 = vmatprep.subr.mxu0 0.0
        %1299 = vmatpush1.msra.mxu0 0.0
        %1300 = vmatprep.subr.mxu0 0.0
        %1301 = vmatpush1.msra.mxu0 0.0
        %1302 = vmatprep.subr.mxu0 0.0
        %1303 = vmatpush1.msra.mxu0 0.0
        %1304 = vmatprep.subr.mxu0 0.0
        %1305 = vmatpush1.msra.mxu0 0.0
        %1306 = vmatprep.subr.mxu0 0.0
        %1307 = vmatpush1.msra.mxu0 0.0
        %1308 = vmatprep.subr.mxu0 0.0
        %1309 = vmatpush1.msra.mxu0 0.0
        %1310 = vmatprep.mubr.f32.mxu0 0.0
        %1311 = vmatmul.mubr.f32.gmra.mrb[0].mxu0 %v1244
        %v1312 = vpop.f32.mrb[0].mxu0
        %v1313 = vadd.f32 0.0, %v1312
        %v1314 = vpop.f32.mrb[0].mxu0
        %1315 = vdwg.mxu0
        %1317 = vrot.lane.b32.xlu0 %v1313, 64
        %v1318 = vpop.permute.xlu0 %1317
        %vm1320 = vcmask 785920
        %1321 = vst.msk [vmem:[#allocation2] sm:$0xff] %vm1320, %v1318
        %1322 = vrot.lane.b32.xlu0 %v629, 32
        %v1323 = vpop.permute.xlu0 %1322
        %1324 = vrot.lane.b32.xlu0 %v720, 32
        %v1325 = vpop.permute.xlu0 %1324
        %v1326 = vsel %vm816, %v1323, 0
        %v1328 = vsel %vm816, %v1325, 0
        %1330 = vmatprep.subr.mxu0 0.0
        %1331 = vmatpush1.xpose.msra.mxu0 %v1328
        %1332 = vmatprep.subr.mxu0 0.0
        %1333 = vmatpush1.xpose.msra.mxu0 0.0
        %1334 = vmatprep.subr.mxu0 0.0
        %1335 = vmatpush1.xpose.msra.mxu0 0.0
        %1336 = vmatprep.subr.mxu0 0.0
        %1337 = vmatpush1.xpose.msra.mxu0 0.0
        %1338 = vmatprep.subr.mxu0 0.0
        %1339 = vmatpush1.xpose.msra.mxu0 0.0
        %1340 = vmatprep.subr.mxu0 0.0
        %1341 = vmatpush1.xpose.msra.mxu0 0.0
        %1342 = vmatprep.subr.mxu0 0.0
        %1343 = vmatpush1.xpose.msra.mxu0 0.0
        %1344 = vmatprep.subr.mxu0 0.0
        %1345 = vmatpush1.xpose.msra.mxu0 0.0
        %1346 = vmatprep.subr.mxu0 0.0
        %1347 = vmatpush1.xpose.msra.mxu0 0.0
        %1348 = vmatprep.subr.mxu0 0.0
        %1349 = vmatpush1.xpose.msra.mxu0 0.0
        %1350 = vmatprep.subr.mxu0 0.0
        %1351 = vmatpush1.xpose.msra.mxu0 0.0
        %1352 = vmatprep.subr.mxu0 0.0
        %1353 = vmatpush1.xpose.msra.mxu0 0.0
        %1354 = vmatprep.subr.mxu0 0.0
        %1355 = vmatpush1.xpose.msra.mxu0 0.0
        %1356 = vmatprep.subr.mxu0 0.0
        %1357 = vmatpush1.xpose.msra.mxu0 0.0
        %1358 = vmatprep.subr.mxu0 0.0
        %1359 = vmatpush1.xpose.msra.mxu0 0.0
        %1360 = vmatprep.subr.mxu0 0.0
        %1361 = vmatpush1.xpose.msra.mxu0 0.0
        %1362 = vmatprep.subr.mxu0 0.0
        %1363 = vmatpush1.xpose.msra.mxu0 0.0
        %1364 = vmatprep.subr.mxu0 0.0
        %1365 = vmatpush1.xpose.msra.mxu0 0.0
        %1366 = vmatprep.subr.mxu0 0.0
        %1367 = vmatpush1.xpose.msra.mxu0 0.0
        %1368 = vmatprep.subr.mxu0 0.0
        %1369 = vmatpush1.xpose.msra.mxu0 0.0
        %1370 = vmatprep.subr.mxu0 0.0
        %1371 = vmatpush1.xpose.msra.mxu0 0.0
        %1372 = vmatprep.subr.mxu0 0.0
        %1373 = vmatpush1.xpose.msra.mxu0 0.0
        %1374 = vmatprep.subr.mxu0 0.0
        %1375 = vmatpush1.xpose.msra.mxu0 0.0
        %1376 = vmatprep.subr.mxu0 0.0
        %1377 = vmatpush1.xpose.msra.mxu0 0.0
        %1378 = vmatprep.subr.mxu0 0.0
        %1379 = vmatpush1.xpose.msra.mxu0 0.0
        %1380 = vmatprep.subr.mxu0 0.0
        %1381 = vmatpush1.xpose.msra.mxu0 0.0
        %1382 = vmatprep.subr.mxu0 0.0
        %1383 = vmatpush1.xpose.msra.mxu0 0.0
        %1384 = vmatprep.subr.mxu0 0.0
        %1385 = vmatpush1.xpose.msra.mxu0 0.0
        %1386 = vmatprep.subr.mxu0 0.0
        %1387 = vmatpush1.xpose.msra.mxu0 0.0
        %1388 = vmatprep.subr.mxu0 0.0
        %1389 = vmatpush1.xpose.msra.mxu0 0.0
        %1390 = vmatprep.subr.mxu0 0.0
        %1391 = vmatpush1.xpose.msra.mxu0 0.0
        %1392 = vmatprep.subr.mxu0 0.0
        %1393 = vmatpush1.xpose.msra.mxu0 0.0
        %1394 = vmatprep.mubr.f32.mxu0 0.0
        %1395 = vmatmul.mubr.f32.gmra.mrb[0].mxu0 %v1326
        %v1396 = vpop.f32.mrb[0].mxu0
        %v1397 = vadd.f32 0.0, %v1396
        %v1398 = vpop.f32.mrb[0].mxu0
        %1399 = vdwg.mxu0
        %v1400 = vsel %vm893, %v1397, -inf
        %1401 = vmax.xlane.f32.xlu0 %v1400
        %v1402 = vpop.xlane.xlu0 %1401
        %v1403 = vsub.f32 %v1397, %v1402
        %v1404 = vmul.f32 %v1403, 1.442695
        %v1405 = vpow.pop %v1404
        %v1406 = vsel %vm893, %v1405, 0.0
        %1407 = vadd.xlane.f32.xlu0 %v1406
        %v1408 = vpop.xlane.xlu0 %1407
        %v1409 = vrcp.pop %v1408
        %v1410 = vmul.f32 %v1405, %v1409
        %1411 = vrot.lane.b32.xlu0 %v813, 32
        %v1412 = vpop.permute.xlu0 %1411
        %v1415 = vsel %vm893, %v1410, 0
        %1417 = vmatprep.subr.mxu0 0.0
        %1418 = vmatpush1.msra.mxu0 %v1412
        %1419 = vmatprep.subr.mxu0 0.0
        %1420 = vmatpush1.msra.mxu0 0.0
        %1421 = vmatprep.subr.mxu0 0.0
        %1422 = vmatpush1.msra.mxu0 0.0
        %1423 = vmatprep.subr.mxu0 0.0
        %1424 = vmatpush1.msra.mxu0 0.0
        %1425 = vmatprep.subr.mxu0 0.0
        %1426 = vmatpush1.msra.mxu0 0.0
        %1427 = vmatprep.subr.mxu0 0.0
        %1428 = vmatpush1.msra.mxu0 0.0
        %1429 = vmatprep.subr.mxu0 0.0
        %1430 = vmatpush1.msra.mxu0 0.0
        %1431 = vmatprep.subr.mxu0 0.0
        %1432 = vmatpush1.msra.mxu0 0.0
        %1433 = vmatprep.subr.mxu0 0.0
        %1434 = vmatpush1.msra.mxu0 0.0
        %1435 = vmatprep.subr.mxu0 0.0
        %1436 = vmatpush1.msra.mxu0 0.0
        %1437 = vmatprep.subr.mxu0 0.0
        %1438 = vmatpush1.msra.mxu0 0.0
        %1439 = vmatprep.subr.mxu0 0.0
        %1440 = vmatpush1.msra.mxu0 0.0
        %1441 = vmatprep.subr.mxu0 0.0
        %1442 = vmatpush1.msra.mxu0 0.0
        %1443 = vmatprep.subr.mxu0 0.0
        %1444 = vmatpush1.msra.mxu0 0.0
        %1445 = vmatprep.subr.mxu0 0.0
        %1446 = vmatpush1.msra.mxu0 0.0
        %1447 = vmatprep.subr.mxu0 0.0
        %1448 = vmatpush1.msra.mxu0 0.0
        %1449 = vmatprep.subr.mxu0 0.0
        %1450 = vmatpush1.msra.mxu0 0.0
        %1451 = vmatprep.subr.mxu0 0.0
        %1452 = vmatpush1.msra.mxu0 0.0
        %1453 = vmatprep.subr.mxu0 0.0
        %1454 = vmatpush1.msra.mxu0 0.0
        %1455 = vmatprep.subr.mxu0 0.0
        %1456 = vmatpush1.msra.mxu0 0.0
        %1457 = vmatprep.subr.mxu0 0.0
        %1458 = vmatpush1.msra.mxu0 0.0
        %1459 = vmatprep.subr.mxu0 0.0
        %1460 = vmatpush1.msra.mxu0 0.0
        %1461 = vmatprep.subr.mxu0 0.0
        %1462 = vmatpush1.msra.mxu0 0.0
        %1463 = vmatprep.subr.mxu0 0.0
        %1464 = vmatpush1.msra.mxu0 0.0
        %1465 = vmatprep.subr.mxu0 0.0
        %1466 = vmatpush1.msra.mxu0 0.0
        %1467 = vmatprep.subr.mxu0 0.0
        %1468 = vmatpush1.msra.mxu0 0.0
        %1469 = vmatprep.subr.mxu0 0.0
        %1470 = vmatpush1.msra.mxu0 0.0
        %1471 = vmatprep.subr.mxu0 0.0
        %1472 = vmatpush1.msra.mxu0 0.0
        %1473 = vmatprep.subr.mxu0 0.0
        %1474 = vmatpush1.msra.mxu0 0.0
        %1475 = vmatprep.subr.mxu0 0.0
        %1476 = vmatpush1.msra.mxu0 0.0
        %1477 = vmatprep.subr.mxu0 0.0
        %1478 = vmatpush1.msra.mxu0 0.0
        %1479 = vmatprep.subr.mxu0 0.0
        %1480 = vmatpush1.msra.mxu0 0.0
        %1481 = vmatprep.mubr.f32.mxu0 0.0
        %1482 = vmatmul.mubr.f32.gmra.mrb[0].mxu0 %v1415
        %v1483 = vpop.f32.mrb[0].mxu0
        %v1484 = vadd.f32 0.0, %v1483
        %v1485 = vpop.f32.mrb[0].mxu0
        %1486 = vdwg.mxu0
        %1488 = vrot.lane.b32.xlu0 %v1484, 96
        %v1489 = vpop.permute.xlu0 %1488
        %vm1491 = vcmask 1048320
        %1492 = vst.msk [vmem:[#allocation2] sm:$0xff] %vm1491, %v1489
        %v1493 = vld [vmem:[#allocation2] sm:$0xff]
        %v1494 = vld [vmem:[#allocation15] sm:$0xff]
        %v1495 = vld [vmem:[#allocation15 + $0x8] sm:$0xff]
        %v1496 = vld [vmem:[#allocation15 + $0x10] sm:$0xff]
        %v1497 = vld [vmem:[#allocation15 + $0x18] sm:$0xff]
        %v1498 = vld [vmem:[#allocation15 + $0x20] sm:$0xff]
        %v1499 = vld [vmem:[#allocation15 + $0x28] sm:$0xff]
        %v1500 = vld [vmem:[#allocation15 + $0x30] sm:$0xff]
        %v1501 = vld [vmem:[#allocation15 + $0x38] sm:$0xff]
        %v1502 = vld [vmem:[#allocation15 + $0x40] sm:$0xff]
        %v1503 = vld [vmem:[#allocation15 + $0x48] sm:$0xff]
        %v1504 = vld [vmem:[#allocation15 + $0x50] sm:$0xff]
        %v1505 = vld [vmem:[#allocation15 + $0x58] sm:$0xff]
        %v1506 = vld [vmem:[#allocation15 + $0x60] sm:$0xff]
        %v1507 = vld [vmem:[#allocation15 + $0x68] sm:$0xff]
        %v1508 = vld [vmem:[#allocation15 + $0x70] sm:$0xff]
        %v1509 = vld [vmem:[#allocation15 + $0x78] sm:$0xff]
        %v1510 = vld [vmem:[#allocation17] sm:$0x1]
        %v1512 = vlaneseq
        %v1513 = vshrl.u32 %v1512, 7
        %v1514 = vsub.s32 0, %v1513
        %v1515 = vrot.slane %v1510, %v1514
        %1517 = vmatprep.subr.mxu0 0.0
        %1518 = vmatpush1.msra.mxu0 %v1494
        %1519 = vmatprep.subr.mxu0 0.0
        %1520 = vmatpush1.msra.mxu0 %v1495
        %1521 = vmatprep.subr.mxu0 0.0
        %1522 = vmatpush1.msra.mxu0 %v1496
        %1523 = vmatprep.subr.mxu0 0.0
        %1524 = vmatpush1.msra.mxu0 %v1497
        %1525 = vmatprep.subr.mxu0 0.0
        %1526 = vmatpush1.msra.mxu0 %v1498
        %1527 = vmatprep.subr.mxu0 0.0
        %1528 = vmatpush1.msra.mxu0 %v1499
        %1529 = vmatprep.subr.mxu0 0.0
        %1530 = vmatpush1.msra.mxu0 %v1500
        %1531 = vmatprep.subr.mxu0 0.0
        %1532 = vmatpush1.msra.mxu0 %v1501
        %1533 = vmatprep.subr.mxu0 0.0
        %1534 = vmatpush1.msra.mxu0 %v1502
        %1535 = vmatprep.subr.mxu0 0.0
        %1536 = vmatpush1.msra.mxu0 %v1503
        %1537 = vmatprep.subr.mxu0 0.0
        %1538 = vmatpush1.msra.mxu0 %v1504
        %1539 = vmatprep.subr.mxu0 0.0
        %1540 = vmatpush1.msra.mxu0 %v1505
        %1541 = vmatprep.subr.mxu0 0.0
        %1542 = vmatpush1.msra.mxu0 %v1506
        %1543 = vmatprep.subr.mxu0 0.0
        %1544 = vmatpush1.msra.mxu0 %v1507
        %1545 = vmatprep.subr.mxu0 0.0
        %1546 = vmatpush1.msra.mxu0 %v1508
        %1547 = vmatprep.subr.mxu0 0.0
        %1548 = vmatpush1.msra.mxu0 %v1509
        %1549 = vmatprep.subr.mxu0 0.0
        %1550 = vmatpush1.msra.mxu0 0.0
        %1551 = vmatprep.subr.mxu0 0.0
        %1552 = vmatpush1.msra.mxu0 0.0
        %1553 = vmatprep.subr.mxu0 0.0
        %1554 = vmatpush1.msra.mxu0 0.0
        %1555 = vmatprep.subr.mxu0 0.0
        %1556 = vmatpush1.msra.mxu0 0.0
        %1557 = vmatprep.subr.mxu0 0.0
        %1558 = vmatpush1.msra.mxu0 0.0
        %1559 = vmatprep.subr.mxu0 0.0
        %1560 = vmatpush1.msra.mxu0 0.0
        %1561 = vmatprep.subr.mxu0 0.0
        %1562 = vmatpush1.msra.mxu0 0.0
        %1563 = vmatprep.subr.mxu0 0.0
        %1564 = vmatpush1.msra.mxu0 0.0
        %1565 = vmatprep.subr.mxu0 0.0
        %1566 = vmatpush1.msra.mxu0 0.0
        %1567 = vmatprep.subr.mxu0 0.0
        %1568 = vmatpush1.msra.mxu0 0.0
        %1569 = vmatprep.subr.mxu0 0.0
        %1570 = vmatpush1.msra.mxu0 0.0
        %1571 = vmatprep.subr.mxu0 0.0
        %1572 = vmatpush1.msra.mxu0 0.0
        %1573 = vmatprep.subr.mxu0 0.0
        %1574 = vmatpush1.msra.mxu0 0.0
        %1575 = vmatprep.subr.mxu0 0.0
        %1576 = vmatpush1.msra.mxu0 0.0
        %1577 = vmatprep.subr.mxu0 0.0
        %1578 = vmatpush1.msra.mxu0 0.0
        %1579 = vmatprep.subr.mxu0 0.0
        %1580 = vmatpush1.msra.mxu0 0.0
        %1581 = vmatprep.mubr.f32.mxu0 0.0
        %1582 = vmatmul.mubr.f32.gmra.mrb[0].mxu0 %v1493
        %v1583 = vpop.f32.mrb[0].mxu0
        %v1584 = vadd.f32 %v1515, %v1583
        %v1585 = vpop.f32.mrb[0].mxu0
        %1586 = vdwg.mxu0
        %v1587 = vadd.f32 %v535, %v1584
        %1588 = vadd.xlane.f32.xlu0 %v1587
        %v1589 = vpop.xlane.xlu0 %1588
        %v1590 = vrcp.pop 128.0
        %v1591 = vmul.f32 %v1589, %v1590
        %v1592 = vsub.f32 %v1587, %v1591
        %v1593 = vmul.f32 %v1592, %v1592
        %1594 = vadd.xlane.f32.xlu0 %v1593
        %v1595 = vpop.xlane.xlu0 %1594
        %v1596 = vmul.f32 %v1595, %v1590
        %v1597 = vadd.f32 %v1596, 1e-05
        %v1598 = vrsqrt.pop %v1597
        %v1599 = vmul.f32 %v1592, %v1598
        %v1600 = vld [vmem:[#allocation18] sm:$0x1]
        %v1602 = vlaneseq
        %v1603 = vshrl.u32 %v1602, 7
        %v1604 = vsub.s32 0, %v1603
        %v1605 = vrot.slane %v1600, %v1604
        %v1607 = vmul.f32 %v1599, %v1605
        %v1608 = vld [vmem:[#allocation20] sm:$0x1]
        %v1610 = vlaneseq
        %v1611 = vshrl.u32 %v1610, 7
        %v1612 = vsub.s32 0, %v1611
        %v1613 = vrot.slane %v1608, %v1612
        %v1615 = vadd.f32 %v1607, %v1613
        %1616 = vst [vmem:[%s534] sm:$0xff] %v1615
        %s1617 = sand.u32 %s277, 1
        %s1618 = scalar_lea.sflag [#allocation5], %s1617
        %s1619 = sand.u32 %s277, 1
        %s1620 = smul.addr %s1619, 8
        %s1621 = scalar_lea.vmem [#allocation21], %s1620
        // Predicated region
        $region109: #{forward.11} parent=63 // pred_check
          %p1622 = pneg %p287
        $region110: #{forward.11} parent=63 // pred_check_branch
          %1624 = sbr.rel (%p1622) target = $region112
        $region111: #{forward.11} parent=63 // pred_region
          %s1626 = ssub.s32 128, 128
          %1627 = vsyncadd %s1618, %s1626
          %s1628 = smul.addr %s33, 128
          %s1629 = scalar_lea.hbm %s11, %s1628
          %s1631 = sshll.u32 %s1621, 4
          %s1632 = int_to_ptr.vmem [resolvable:$true] %s1631
          %1634 = dma.vmem_to_hbm [thread:$0]  %s1632, 128, %s1629, %s1618
        $region112: #{forward.11} parent=63 // pred_fallthru
          _
      $region64: #{forward.11} parent=5 // pred_fallthru
        _
      %p1635 = scmp.le.s32.totalorder 2, %s28
      // Predicated region
      $region113: #{forward.11} parent=5 // pred_check
        %p1636 = pneg %p1635
      $region114: #{forward.11} parent=5 // pred_check_branch
        %1638 = sbr.rel (%p1636) target = $region116
      $region115: #{forward.11} parent=5 // pred_region
        %s1639 = ssub.s32 %s28, 2
        // Predicated region
        $region117: #{forward.11} parent=115 // pred_check
          %p1640 = pneg %p293
        $region118: #{forward.11} parent=115 // pred_check_branch
          %1642 = sbr.rel (%p1640) target = $region120
        $region119: #{forward.11} parent=115 // pred_region
          %s1643 = sand.u32 %s278, 1
          %s1644 = scalar_lea.sflag [#allocation5], %s1643
          %s1645 = sand.u32 %s278, 1
          %s1646 = smul.addr %s1645, 8
          %s1647 = scalar_lea.vmem [#allocation21], %s1646
          %1648 = dma.done %s1644, 128
        $region120: #{forward.11} parent=115 // pred_fallthru
          _
      $region116: #{forward.11} parent=5 // pred_fallthru
        _
    $region6: #{forward.11} parent=1 // loop_footer
      %s32 = sadd.s32 1, %s28
    $region7: #{forward.11} parent=1 // loop_footer_branch
      %27 = sbr.rel target = $region3
    $region8: #{forward.11} parent=1 // loop_exit
      _
    %1649 = vsyncpa [#allocation4], 1
    %s1650 = scalar_lea.sflag [#allocation4], 1
    %1651 = vsyncpa %s1650, 1
    %1652 = vsyncpa [#allocation7], 1
    %1653 = vsyncpa [#allocation10], 1
    %1654 = vsyncpa [#allocation13], 1
    %1655 = vsyncpa [#allocation16], 1
    %1656 = vsyncpa [#allocation19], 1
    %1657 = vsyncpa [#allocation5], 1
    %s1658 = scalar_lea.sflag [#allocation5], 1
    %1659 = vsyncpa %s1658, 1

// kernel: forward.16
$region0: #{forward.16}
  #allocation0 [shape = 'u32[]', space=smem, size = 0x4, offset = 0x4, fixed_abs, tag = 'smem constant byte address 0x4 - core index']
  #allocation1 [shape = 'u32[144,128]{1,0:T(1,128)}', space=vmem, size = 0x12000, scoped, tag = 'internal scratch']
  #allocation2 [shape = 'f32[8,128]{1,0:T(8,128)}', space=vmem, size = 0x1000, scoped, tag = 'scratch operand']
  %s0 = inlined_call_operand.hbm [shape: f32[16,128], index: 0, kind: input, shape index: {}]
  %s1 = inlined_call_operand.hbm [shape: f32[16,128], index: 1, kind: input, shape index: {}]
  %s2 = inlined_call_operand.hbm [shape: f32[128,128], index: 2, kind: input, shape index: {}]
  %s3 = inlined_call_operand.hbm [shape: f32[1,128], index: 3, kind: input, shape index: {}]
  %s4 = inlined_call_operand.hbm [shape: f32[128,128], index: 4, kind: input, shape index: {}]
  %s5 = inlined_call_operand.hbm [shape: f32[1,128], index: 5, kind: input, shape index: {}]
  %s6 = inlined_call_operand.hbm [shape: f32[128,128], index: 6, kind: input, shape index: {}]
  %s7 = inlined_call_operand.hbm [shape: f32[1,128], index: 7, kind: input, shape index: {}]
  %s8 = inlined_call_operand.hbm [shape: f32[128,128], index: 8, kind: input, shape index: {}]
  %s9 = inlined_call_operand.hbm [shape: f32[1,128], index: 9, kind: input, shape index: {}]
  %s10 = inlined_call_operand.hbm [shape: f32[1,128], index: 10, kind: input, shape index: {}]
  %s11 = inlined_call_operand.hbm [shape: f32[1,128], index: 11, kind: input, shape index: {}]
  %s12 = inlined_call_operand.hbm [shape: f32[16,128], index: 12, kind: output, shape index: {}]
  %s13 = sld [smem:[#allocation0]]
  $region129: #{forward.16} parent=0
    _
  %s15 = ssub.s32 1, %s13
  %s16 = scalar_select 0, %s15, %s13
  $region1: #{forward.16} parent=0
    #allocation3 [shape = 'u8[8192]{0}', space=vmem, size = 0x2000, scoped, tag = 'input window, operand 0']
    #allocation4 [shape = 's32[2]{0}', space=sflag, size = 0x8, scoped, tag = 'scoped memory for forward.16']
    #allocation5 [shape = 's32[2]{0}', space=sflag, size = 0x8, scoped, tag = 'scoped memory for forward.16']
    #allocation6 [shape = 'u8[8192]{0}', space=vmem, size = 0x2000, scoped, tag = 'input window, operand 1']
    #allocation7 [shape = 's32[2]{0}', space=sflag, size = 0x8, scoped, tag = 'scoped memory for forward.16']
    #allocation8 [shape = 'u8[65536]{0}', space=vmem, size = 0x10000, scoped, tag = 'input window, operand 2, single buffered']
    #allocation9 [shape = 'u8[512]{0}', space=vmem, size = 0x400, scoped, tag = 'input window, operand 3, single buffered']
    #allocation10 [shape = 's32[1]{0}', space=sflag, size = 0x4, scoped, tag = 'scoped memory for forward.16']
    #allocation11 [shape = 'u8[65536]{0}', space=vmem, size = 0x10000, scoped, tag = 'input window, operand 4, single buffered']
    #allocation12 [shape = 'u8[512]{0}', space=vmem, size = 0x400, scoped, tag = 'input window, operand 5, single buffered']
    #allocation13 [shape = 's32[1]{0}', space=sflag, size = 0x4, scoped, tag = 'scoped memory for forward.16']
    #allocation14 [shape = 'u8[65536]{0}', space=vmem, size = 0x10000, scoped, tag = 'input window, operand 6, single buffered']
    #allocation15 [shape = 'u8[512]{0}', space=vmem, size = 0x400, scoped, tag = 'input window, operand 7, single buffered']
    #allocation16 [shape = 's32[1]{0}', space=sflag, size = 0x4, scoped, tag = 'scoped memory for forward.16']
    #allocation17 [shape = 'u8[65536]{0}', space=vmem, size = 0x10000, scoped, tag = 'input window, operand 8, single buffered']
    #allocation18 [shape = 'u8[512]{0}', space=vmem, size = 0x400, scoped, tag = 'input window, operand 9, single buffered']
    #allocation19 [shape = 's32[1]{0}', space=sflag, size = 0x4, scoped, tag = 'scoped memory for forward.16']
    #allocation20 [shape = 'u8[512]{0}', space=vmem, size = 0x400, scoped, tag = 'input window, operand 10, single buffered']
    #allocation21 [shape = 'u8[512]{0}', space=vmem, size = 0x400, scoped, tag = 'input window, operand 11, single buffered']
    #allocation22 [shape = 's32[1]{0}', space=sflag, size = 0x4, scoped, tag = 'scoped memory for forward.16']
    #allocation23 [shape = 'u8[8192]{0}', space=vmem, size = 0x2000, scoped, tag = 'output window, operand 0']
    %17 = vsyncpa [#allocation4], 0
    %s18 = scalar_lea.sflag [#allocation4], 1
    %19 = vsyncpa %s18, 0
    %20 = vsyncpa [#allocation7], 0
    %s21 = scalar_lea.sflag [#allocation7], 1
    %22 = vsyncpa %s21, 0
    %23 = vsyncpa [#allocation10], 0
    %24 = vsyncpa [#allocation13], 0
    %25 = vsyncpa [#allocation16], 0
    %26 = vsyncpa [#allocation19], 0
    %27 = vsyncpa [#allocation22], 0
    %28 = vsyncpa [#allocation5], 0
    %s29 = scalar_lea.sflag [#allocation5], 1
    %30 = vsyncpa %s29, 0
    loop: start=0, step=1, limit=4
    $region2: #{forward.16} parent=1 // loop_pre_header
      _
    $region3: #{forward.16} parent=1 // loop_header
      %s32 = sphi 0, %s36
      %p33 = scmp.ge.s32.totalorder %s32, 4
      %s42 = sphi 0, %s44
      %s45 = sphi 0, %s42
      %s46 = sphi 0, %s45
      %s62 = sphi 0, %s46
      %s68 = sphi 0, %s70
      %s71 = sphi 0, %s68
      %s72 = sphi 0, %s71
      %s88 = sphi 0, %s72
      %s92 = sphi 0, %s92
      %s94 = sphi 0, %s92
      %s95 = sphi 0, %s94
      %s109 = sphi 0, %s95
      %s113 = sphi 0, %s113
      %s115 = sphi 0, %s113
      %s116 = sphi 0, %s115
      %s130 = sphi 0, %s116
      %s134 = sphi 0, %s134
      %s136 = sphi 0, %s134
      %s137 = sphi 0, %s136
      %s151 = sphi 0, %s137
      %s155 = sphi 0, %s155
      %s157 = sphi 0, %s155
      %s158 = sphi 0, %s157
      %s172 = sphi 0, %s158
      %s176 = sphi 0, %s176
      %s178 = sphi 0, %s176
      %s179 = sphi 0, %s178
      %s193 = sphi 0, %s179
      %s197 = sphi 0, %s197
      %s199 = sphi 0, %s197
      %s200 = sphi 0, %s199
      %s214 = sphi 0, %s200
      %s218 = sphi 0, %s218
      %s220 = sphi 0, %s218
      %s221 = sphi 0, %s220
      %s235 = sphi 0, %s221
      %s239 = sphi 0, %s239
      %s241 = sphi 0, %s239
      %s242 = sphi 0, %s241
      %s256 = sphi 0, %s242
      %s260 = sphi 0, %s260
      %s262 = sphi 0, %s260
      %s263 = sphi 0, %s262
      %s277 = sphi 0, %s263
      %s281 = sphi 0, %s281
      %s283 = sphi 0, %s281
      %s284 = sphi 0, %s283
      %s298 = sphi 0, %s284
      %s304 = sphi 0, %s306
      %s307 = sphi 0, %s304
      %s308 = sphi 0, %s307
      %s324 = sphi 0, %s308
    $region4: #{forward.16} parent=1 // loop_header_branch
      %35 = sbr.rel (%p33) target = $region8
    $region5: #{forward.16} parent=1 // loop_body
      %s37 = ssub.s32 %s32, 1
      %s38 = ssub.s32 %s32, 2
      %s39 = sadd.s32 %s32, 1
      %s40 = ssub.s32 %s32, %s39
      %p41 = scmp.eq.s32.totalorder %s40, 0
      %s43 = sadd.s32 %s42, 1
      %s44 = scalar_select %p41, %s42, %s43
      %p47 = pneg %p41
      %p48 = scmp.eq.s32.totalorder %s32, 1
      %p49 = por %p47, %p48
      %p50 = scmp.ne.s32.totalorder %s42, %s45
      %p51 = scmp.eq.s32.totalorder %s32, 0
      %p52 = por %p50, %p51
      %p53 = scmp.ne.s32.totalorder %s42, %s45
      %p54 = scmp.eq.s32.totalorder %s37, 1
      %p55 = por %p53, %p54
      %p56 = scmp.ne.s32.totalorder %s45, %s46
      %p57 = scmp.eq.s32.totalorder %s37, 0
      %p58 = por %p56, %p57
      %p59 = scmp.ne.s32.totalorder %s45, %s46
      %p60 = scmp.eq.s32.totalorder %s38, 1
      %p61 = por %p59, %p60
      %p63 = scmp.ne.s32.totalorder %s46, %s62
      %p64 = scmp.eq.s32.totalorder %s38, 0
      %p65 = por %p63, %p64
      %s66 = ssub.s32 %s32, %s39
      %p67 = scmp.eq.s32.totalorder %s66, 0
      %s69 = sadd.s32 %s68, 1
      %s70 = scalar_select %p67, %s68, %s69
      %p73 = pneg %p67
      %p74 = scmp.eq.s32.totalorder %s32, 1
      %p75 = por %p73, %p74
      %p76 = scmp.ne.s32.totalorder %s68, %s71
      %p77 = scmp.eq.s32.totalorder %s32, 0
      %p78 = por %p76, %p77
      %p79 = scmp.ne.s32.totalorder %s68, %s71
      %p80 = scmp.eq.s32.totalorder %s37, 1
      %p81 = por %p79, %p80
      %p82 = scmp.ne.s32.totalorder %s71, %s72
      %p83 = scmp.eq.s32.totalorder %s37, 0
      %p84 = por %p82, %p83
      %p85 = scmp.ne.s32.totalorder %s71, %s72
      %p86 = scmp.eq.s32.totalorder %s38, 1
      %p87 = por %p85, %p86
      %p89 = scmp.ne.s32.totalorder %s72, %s88
      %p90 = scmp.eq.s32.totalorder %s38, 0
      %p91 = por %p89, %p90
      %s93 = sadd.s32 %s92, 1
      %p96 = scmp.eq.s32.totalorder %s32, 1
      %p97 = scmp.ne.s32.totalorder %s92, %s94
      %p98 = scmp.eq.s32.totalorder %s32, 0
      %p99 = por %p97, %p98
      %p100 = scmp.ne.s32.totalorder %s92, %s94
      %p101 = scmp.eq.s32.totalorder %s37, 1
      %p102 = por %p100, %p101
      %p103 = scmp.ne.s32.totalorder %s94, %s95
      %p104 = scmp.eq.s32.totalorder %s37, 0
      %p105 = por %p103, %p104
      %p106 = scmp.ne.s32.totalorder %s94, %s95
      %p107 = scmp.eq.s32.totalorder %s38, 1
      %p108 = por %p106, %p107
      %p110 = scmp.ne.s32.totalorder %s95, %s109
      %p111 = scmp.eq.s32.totalorder %s38, 0
      %p112 = por %p110, %p111
      %s114 = sadd.s32 %s113, 1
      %p117 = scmp.eq.s32.totalorder %s32, 1
      %p118 = scmp.ne.s32.totalorder %s113, %s115
      %p119 = scmp.eq.s32.totalorder %s32, 0
      %p120 = por %p118, %p119
      %p121 = scmp.ne.s32.totalorder %s113, %s115
      %p122 = scmp.eq.s32.totalorder %s37, 1
      %p123 = por %p121, %p122
      %p124 = scmp.ne.s32.totalorder %s115, %s116
      %p125 = scmp.eq.s32.totalorder %s37, 0
      %p126 = por %p124, %p125
      %p127 = scmp.ne.s32.totalorder %s115, %s116
      %p128 = scmp.eq.s32.totalorder %s38, 1
      %p129 = por %p127, %p128
      %p131 = scmp.ne.s32.totalorder %s116, %s130
      %p132 = scmp.eq.s32.totalorder %s38, 0
      %p133 = por %p131, %p132
      %s135 = sadd.s32 %s134, 1
      %p138 = scmp.eq.s32.totalorder %s32, 1
      %p139 = scmp.ne.s32.totalorder %s134, %s136
      %p140 = scmp.eq.s32.totalorder %s32, 0
      %p141 = por %p139, %p140
      %p142 = scmp.ne.s32.totalorder %s134, %s136
      %p143 = scmp.eq.s32.totalorder %s37, 1
      %p144 = por %p142, %p143
      %p145 = scmp.ne.s32.totalorder %s136, %s137
      %p146 = scmp.eq.s32.totalorder %s37, 0
      %p147 = por %p145, %p146
      %p148 = scmp.ne.s32.totalorder %s136, %s137
      %p149 = scmp.eq.s32.totalorder %s38, 1
      %p150 = por %p148, %p149
      %p152 = scmp.ne.s32.totalorder %s137, %s151
      %p153 = scmp.eq.s32.totalorder %s38, 0
      %p154 = por %p152, %p153
      %s156 = sadd.s32 %s155, 1
      %p159 = scmp.eq.s32.totalorder %s32, 1
      %p160 = scmp.ne.s32.totalorder %s155, %s157
      %p161 = scmp.eq.s32.totalorder %s32, 0
      %p162 = por %p160, %p161
      %p163 = scmp.ne.s32.totalorder %s155, %s157
      %p164 = scmp.eq.s32.totalorder %s37, 1
      %p165 = por %p163, %p164
      %p166 = scmp.ne.s32.totalorder %s157, %s158
      %p167 = scmp.eq.s32.totalorder %s37, 0
      %p168 = por %p166, %p167
      %p169 = scmp.ne.s32.totalorder %s157, %s158
      %p170 = scmp.eq.s32.totalorder %s38, 1
      %p171 = por %p169, %p170
      %p173 = scmp.ne.s32.totalorder %s158, %s172
      %p174 = scmp.eq.s32.totalorder %s38, 0
      %p175 = por %p173, %p174
      %s177 = sadd.s32 %s176, 1
      %p180 = scmp.eq.s32.totalorder %s32, 1
      %p181 = scmp.ne.s32.totalorder %s176, %s178
      %p182 = scmp.eq.s32.totalorder %s32, 0
      %p183 = por %p181, %p182
      %p184 = scmp.ne.s32.totalorder %s176, %s178
      %p185 = scmp.eq.s32.totalorder %s37, 1
      %p186 = por %p184, %p185
      %p187 = scmp.ne.s32.totalorder %s178, %s179
      %p188 = scmp.eq.s32.totalorder %s37, 0
      %p189 = por %p187, %p188
      %p190 = scmp.ne.s32.totalorder %s178, %s179
      %p191 = scmp.eq.s32.totalorder %s38, 1
      %p192 = por %p190, %p191
      %p194 = scmp.ne.s32.totalorder %s179, %s193
      %p195 = scmp.eq.s32.totalorder %s38, 0
      %p196 = por %p194, %p195
      %s198 = sadd.s32 %s197, 1
      %p201 = scmp.eq.s32.totalorder %s32, 1
      %p202 = scmp.ne.s32.totalorder %s197, %s199
      %p203 = scmp.eq.s32.totalorder %s32, 0
      %p204 = por %p202, %p203
      %p205 = scmp.ne.s32.totalorder %s197, %s199
      %p206 = scmp.eq.s32.totalorder %s37, 1
      %p207 = por %p205, %p206
      %p208 = scmp.ne.s32.totalorder %s199, %s200
      %p209 = scmp.eq.s32.totalorder %s37, 0
      %p210 = por %p208, %p209
      %p211 = scmp.ne.s32.totalorder %s199, %s200
      %p212 = scmp.eq.s32.totalorder %s38, 1
      %p213 = por %p211, %p212
      %p215 = scmp.ne.s32.totalorder %s200, %s214
      %p216 = scmp.eq.s32.totalorder %s38, 0
      %p217 = por %p215, %p216
      %s219 = sadd.s32 %s218, 1
      %p222 = scmp.eq.s32.totalorder %s32, 1
      %p223 = scmp.ne.s32.totalorder %s218, %s220
      %p224 = scmp.eq.s32.totalorder %s32, 0
      %p225 = por %p223, %p224
      %p226 = scmp.ne.s32.totalorder %s218, %s220
      %p227 = scmp.eq.s32.totalorder %s37, 1
      %p228 = por %p226, %p227
      %p229 = scmp.ne.s32.totalorder %s220, %s221
      %p230 = scmp.eq.s32.totalorder %s37, 0
      %p231 = por %p229, %p230
      %p232 = scmp.ne.s32.totalorder %s220, %s221
      %p233 = scmp.eq.s32.totalorder %s38, 1
      %p234 = por %p232, %p233
      %p236 = scmp.ne.s32.totalorder %s221, %s235
      %p237 = scmp.eq.s32.totalorder %s38, 0
      %p238 = por %p236, %p237
      %s240 = sadd.s32 %s239, 1
      %p243 = scmp.eq.s32.totalorder %s32, 1
      %p244 = scmp.ne.s32.totalorder %s239, %s241
      %p245 = scmp.eq.s32.totalorder %s32, 0
      %p246 = por %p244, %p245
      %p247 = scmp.ne.s32.totalorder %s239, %s241
      %p248 = scmp.eq.s32.totalorder %s37, 1
      %p249 = por %p247, %p248
      %p250 = scmp.ne.s32.totalorder %s241, %s242
      %p251 = scmp.eq.s32.totalorder %s37, 0
      %p252 = por %p250, %p251
      %p253 = scmp.ne.s32.totalorder %s241, %s242
      %p254 = scmp.eq.s32.totalorder %s38, 1
      %p255 = por %p253, %p254
      %p257 = scmp.ne.s32.totalorder %s242, %s256
      %p258 = scmp.eq.s32.totalorder %s38, 0
      %p259 = por %p257, %p258
      %s261 = sadd.s32 %s260, 1
      %p264 = scmp.eq.s32.totalorder %s32, 1
      %p265 = scmp.ne.s32.totalorder %s260, %s262
      %p266 = scmp.eq.s32.totalorder %s32, 0
      %p267 = por %p265, %p266
      %p268 = scmp.ne.s32.totalorder %s260, %s262
      %p269 = scmp.eq.s32.totalorder %s37, 1
      %p270 = por %p268, %p269
      %p271 = scmp.ne.s32.totalorder %s262, %s263
      %p272 = scmp.eq.s32.totalorder %s37, 0
      %p273 = por %p271, %p272
      %p274 = scmp.ne.s32.totalorder %s262, %s263
      %p275 = scmp.eq.s32.totalorder %s38, 1
      %p276 = por %p274, %p275
      %p278 = scmp.ne.s32.totalorder %s263, %s277
      %p279 = scmp.eq.s32.totalorder %s38, 0
      %p280 = por %p278, %p279
      %s282 = sadd.s32 %s281, 1
      %p285 = scmp.eq.s32.totalorder %s32, 1
      %p286 = scmp.ne.s32.totalorder %s281, %s283
      %p287 = scmp.eq.s32.totalorder %s32, 0
      %p288 = por %p286, %p287
      %p289 = scmp.ne.s32.totalorder %s281, %s283
      %p290 = scmp.eq.s32.totalorder %s37, 1
      %p291 = por %p289, %p290
      %p292 = scmp.ne.s32.totalorder %s283, %s284
      %p293 = scmp.eq.s32.totalorder %s37, 0
      %p294 = por %p292, %p293
      %p295 = scmp.ne.s32.totalorder %s283, %s284
      %p296 = scmp.eq.s32.totalorder %s38, 1
      %p297 = por %p295, %p296
      %p299 = scmp.ne.s32.totalorder %s284, %s298
      %p300 = scmp.eq.s32.totalorder %s38, 0
      %p301 = por %p299, %p300
      %s302 = ssub.s32 %s32, %s39
      %p303 = scmp.eq.s32.totalorder %s302, 0
      %s305 = sadd.s32 %s304, 1
      %s306 = scalar_select %p303, %s304, %s305
      %p309 = pneg %p303
      %p310 = scmp.eq.s32.totalorder %s32, 1
      %p311 = por %p309, %p310
      %p312 = scmp.ne.s32.totalorder %s304, %s307
      %p313 = scmp.eq.s32.totalorder %s32, 0
      %p314 = por %p312, %p313
      %p315 = scmp.ne.s32.totalorder %s304, %s307
      %p316 = scmp.eq.s32.totalorder %s37, 1
      %p317 = por %p315, %p316
      %p318 = scmp.ne.s32.totalorder %s307, %s308
      %p319 = scmp.eq.s32.totalorder %s37, 0
      %p320 = por %p318, %p319
      %p321 = scmp.ne.s32.totalorder %s307, %s308
      %p322 = scmp.eq.s32.totalorder %s38, 1
      %p323 = por %p321, %p322
      %p325 = scmp.ne.s32.totalorder %s308, %s324
      %p326 = scmp.eq.s32.totalorder %s38, 0
      %p327 = por %p325, %p326
      %p328 = scmp.le.s32.totalorder 1, %s32
      %p329 = scmp.lt.s32.totalorder %s32, 3
      %p330 = pnand %p328, %p329
      %p331 = pneg %p330
      // Predicated region
      $region9: #{forward.16} parent=5 // pred_check
        _
      $region10: #{forward.16} parent=5 // pred_check_branch
        %333 = sbr.rel (%p330) target = $region12
      $region11: #{forward.16} parent=5 // pred_region
        %s334 = ssub.s32 %s32, 1
        // Predicated region
        $region13: #{forward.16} parent=11 // pred_check
          %p335 = pneg %p105
        $region14: #{forward.16} parent=11 // pred_check_branch
          %337 = sbr.rel (%p335) target = $region16
        $region15: #{forward.16} parent=11 // pred_region
          %s339 = ssub.s32 2048, 2048
          %340 = vsyncadd [#allocation7], %s339
          %s341 = sshll.u32 [#allocation8], 4
          %s342 = int_to_ptr.vmem [resolvable:$true] %s341
          %347 = dma.hbm_to_vmem [thread:$0]  %s2, 2048, %s342, [#allocation7], 128, 128, 8
        $region16: #{forward.16} parent=11 // pred_fallthru
          _
        // Predicated region
        $region17: #{forward.16} parent=11 // pred_check
          %p348 = pneg %p126
        $region18: #{forward.16} parent=11 // pred_check_branch
          %350 = sbr.rel (%p348) target = $region20
        $region19: #{forward.16} parent=11 // pred_region
          %s352 = ssub.s32 16, 16
          %353 = vsyncadd [#allocation10], %s352
          %s355 = sshll.u32 [#allocation9], 4
          %s356 = int_to_ptr.vmem [resolvable:$true] %s355
          %358 = dma.hbm_to_vmem [thread:$0]  %s3, 16, %s356, [#allocation10]
        $region20: #{forward.16} parent=11 // pred_fallthru
          _
        // Predicated region
        $region21: #{forward.16} parent=11 // pred_check
          %p359 = pneg %p147
        $region22: #{forward.16} parent=11 // pred_check_branch
          %361 = sbr.rel (%p359) target = $region24
        $region23: #{forward.16} parent=11 // pred_region
          %s363 = ssub.s32 2048, 2048
          %364 = vsyncadd [#allocation10], %s363
          %s365 = sshll.u32 [#allocation11], 4
          %s366 = int_to_ptr.vmem [resolvable:$true] %s365
          %371 = dma.hbm_to_vmem [thread:$0]  %s4, 2048, %s366, [#allocation10], 128, 128, 8
        $region24: #{forward.16} parent=11 // pred_fallthru
          _
        // Predicated region
        $region25: #{forward.16} parent=11 // pred_check
          %p372 = pneg %p168
        $region26: #{forward.16} parent=11 // pred_check_branch
          %374 = sbr.rel (%p372) target = $region28
        $region27: #{forward.16} parent=11 // pred_region
          %s376 = ssub.s32 16, 16
          %377 = vsyncadd [#allocation13], %s376
          %s379 = sshll.u32 [#allocation12], 4
          %s380 = int_to_ptr.vmem [resolvable:$true] %s379
          %382 = dma.hbm_to_vmem [thread:$0]  %s5, 16, %s380, [#allocation13]
        $region28: #{forward.16} parent=11 // pred_fallthru
          _
        // Predicated region
        $region29: #{forward.16} parent=11 // pred_check
          %p383 = pneg %p189
        $region30: #{forward.16} parent=11 // pred_check_branch
          %385 = sbr.rel (%p383) target = $region32
        $region31: #{forward.16} parent=11 // pred_region
          %s387 = ssub.s32 2048, 2048
          %388 = vsyncadd [#allocation13], %s387
          %s389 = sshll.u32 [#allocation14], 4
          %s390 = int_to_ptr.vmem [resolvable:$true] %s389
          %395 = dma.hbm_to_vmem [thread:$0]  %s6, 2048, %s390, [#allocation13], 128, 128, 8
        $region32: #{forward.16} parent=11 // pred_fallthru
          _
        // Predicated region
        $region33: #{forward.16} parent=11 // pred_check
          %p396 = pneg %p210
        $region34: #{forward.16} parent=11 // pred_check_branch
          %398 = sbr.rel (%p396) target = $region36
        $region35: #{forward.16} parent=11 // pred_region
          %s400 = ssub.s32 16, 16
          %401 = vsyncadd [#allocation16], %s400
          %s403 = sshll.u32 [#allocation15], 4
          %s404 = int_to_ptr.vmem [resolvable:$true] %s403
          %406 = dma.hbm_to_vmem [thread:$0]  %s7, 16, %s404, [#allocation16]
        $region36: #{forward.16} parent=11 // pred_fallthru
          _
        // Predicated region
        $region37: #{forward.16} parent=11 // pred_check
          %p407 = pneg %p231
        $region38: #{forward.16} parent=11 // pred_check_branch
          %409 = sbr.rel (%p407) target = $region40
        $region39: #{forward.16} parent=11 // pred_region
          %s411 = ssub.s32 2048, 2048
          %412 = vsyncadd [#allocation16], %s411
          %s413 = sshll.u32 [#allocation17], 4
          %s414 = int_to_ptr.vmem [resolvable:$true] %s413
          %419 = dma.hbm_to_vmem [thread:$0]  %s8, 2048, %s414, [#allocation16], 128, 128, 8
        $region40: #{forward.16} parent=11 // pred_fallthru
          _
        // Predicated region
        $region41: #{forward.16} parent=11 // pred_check
          %p420 = pneg %p252
        $region42: #{forward.16} parent=11 // pred_check_branch
          %422 = sbr.rel (%p420) target = $region44
        $region43: #{forward.16} parent=11 // pred_region
          %s424 = ssub.s32 16, 16
          %425 = vsyncadd [#allocation19], %s424
          %s427 = sshll.u32 [#allocation18], 4
          %s428 = int_to_ptr.vmem [resolvable:$true] %s427
          %430 = dma.hbm_to_vmem [thread:$0]  %s9, 16, %s428, [#allocation19]
        $region44: #{forward.16} parent=11 // pred_fallthru
          _
        // Predicated region
        $region45: #{forward.16} parent=11 // pred_check
          %p431 = pneg %p273
        $region46: #{forward.16} parent=11 // pred_check_branch
          %433 = sbr.rel (%p431) target = $region48
        $region47: #{forward.16} parent=11 // pred_region
          %s435 = ssub.s32 16, 16
          %436 = vsyncadd [#allocation19], %s435
          %s438 = sshll.u32 [#allocation20], 4
          %s439 = int_to_ptr.vmem [resolvable:$true] %s438
          %441 = dma.hbm_to_vmem [thread:$0]  %s10, 16, %s439, [#allocation19]
        $region48: #{forward.16} parent=11 // pred_fallthru
          _
        // Predicated region
        $region49: #{forward.16} parent=11 // pred_check
          %p442 = pneg %p294
        $region50: #{forward.16} parent=11 // pred_check_branch
          %444 = sbr.rel (%p442) target = $region52
        $region51: #{forward.16} parent=11 // pred_region
          %s446 = ssub.s32 16, 16
          %447 = vsyncadd [#allocation22], %s446
          %s449 = sshll.u32 [#allocation21], 4
          %s450 = int_to_ptr.vmem [resolvable:$true] %s449
          %452 = dma.hbm_to_vmem [thread:$0]  %s11, 16, %s450, [#allocation22]
        $region52: #{forward.16} parent=11 // pred_fallthru
          _
      $region12: #{forward.16} parent=5 // pred_fallthru
        _
      %p453 = scmp.lt.s32.totalorder %s32, 2
      // Predicated region
      $region53: #{forward.16} parent=5 // pred_check
        %p454 = pneg %p453
      $region54: #{forward.16} parent=5 // pred_check_branch
        %456 = sbr.rel (%p454) target = $region56
      $region55: #{forward.16} parent=5 // pred_region
        // Predicated region
        $region57: #{forward.16} parent=55 // pred_check
          %p457 = pneg %p52
        $region58: #{forward.16} parent=55 // pred_check_branch
          %459 = sbr.rel (%p457) target = $region60
        $region59: #{forward.16} parent=55 // pred_region
          %s460 = sand.u32 %s42, 1
          %s461 = scalar_lea.sflag [#allocation4], %s460
          %s462 = sand.u32 %s42, 1
          %s463 = smul.addr %s462, 8
          %s464 = scalar_lea.vmem [#allocation3], %s463
          %s466 = ssub.s32 128, 128
          %467 = vsyncadd %s461, %s466
          %s468 = smul.addr %s32, 128
          %s469 = scalar_lea.hbm %s0, %s468
          %s471 = sshll.u32 %s464, 4
          %s472 = int_to_ptr.vmem [resolvable:$true] %s471
          %474 = dma.hbm_to_vmem [thread:$0]  %s469, 128, %s472, %s461
        $region60: #{forward.16} parent=55 // pred_fallthru
          _
        // Predicated region
        $region61: #{forward.16} parent=55 // pred_check
          %p475 = pneg %p78
        $region62: #{forward.16} parent=55 // pred_check_branch
          %477 = sbr.rel (%p475) target = $region64
        $region63: #{forward.16} parent=55 // pred_region
          %s478 = sand.u32 %s32, 1
          %s479 = scalar_lea.sflag [#allocation7], %s478
          %s480 = sand.u32 %s68, 1
          %s481 = smul.addr %s480, 8
          %s482 = scalar_lea.vmem [#allocation6], %s481
          %s484 = ssub.s32 128, 128
          %485 = vsyncadd %s479, %s484
          %s486 = smul.addr %s32, 128
          %s487 = scalar_lea.hbm %s1, %s486
          %s489 = sshll.u32 %s482, 4
          %s490 = int_to_ptr.vmem [resolvable:$true] %s489
          %492 = dma.hbm_to_vmem [thread:$0]  %s487, 128, %s490, %s479
        $region64: #{forward.16} parent=55 // pred_fallthru
          _
      $region56: #{forward.16} parent=5 // pred_fallthru
        _
      %p493 = scmp.le.s32.totalorder 1, %s32
      %p494 = scmp.lt.s32.totalorder %s32, 3
      %p495 = pnand %p493, %p494
      %p496 = pneg %p495
      // Predicated region
      $region65: #{forward.16} parent=5 // pred_check
        _
      $region66: #{forward.16} parent=5 // pred_check_branch
        %498 = sbr.rel (%p495) target = $region68
      $region67: #{forward.16} parent=5 // pred_region
        %s499 = ssub.s32 %s32, 1
        %s500 = sand.u32 %s45, 1
        %s501 = scalar_lea.sflag [#allocation4], %s500
        %s502 = sand.u32 %s45, 1
        %s503 = smul.addr %s502, 8
        %s504 = scalar_lea.vmem [#allocation3], %s503
        // Predicated region
        $region69: #{forward.16} parent=67 // pred_check
          %p505 = pneg %p58
        $region70: #{forward.16} parent=67 // pred_check_branch
          %507 = sbr.rel (%p505) target = $region72
        $region71: #{forward.16} parent=67 // pred_region
          %508 = dma.done %s501, 128
        $region72: #{forward.16} parent=67 // pred_fallthru
          _
        %s509 = sand.u32 %s37, 1
        %s510 = scalar_lea.sflag [#allocation7], %s509
        %s511 = sand.u32 %s71, 1
        %s512 = smul.addr %s511, 8
        %s513 = scalar_lea.vmem [#allocation6], %s512
        // Predicated region
        $region73: #{forward.16} parent=67 // pred_check
          %p514 = pneg %p84
        $region74: #{forward.16} parent=67 // pred_check_branch
          %516 = sbr.rel (%p514) target = $region76
        $region75: #{forward.16} parent=67 // pred_region
          %517 = dma.done %s510, 128
        $region76: #{forward.16} parent=67 // pred_fallthru
          _
        // Predicated region
        $region77: #{forward.16} parent=67 // pred_check
          %p518 = pneg %p105
        $region78: #{forward.16} parent=67 // pred_check_branch
          %520 = sbr.rel (%p518) target = $region80
        $region79: #{forward.16} parent=67 // pred_region
          %521 = dma.done [#allocation7], 2048
        $region80: #{forward.16} parent=67 // pred_fallthru
          _
        // Predicated region
        $region81: #{forward.16} parent=67 // pred_check
          %p522 = pneg %p126
        $region82: #{forward.16} parent=67 // pred_check_branch
          %524 = sbr.rel (%p522) target = $region84
        $region83: #{forward.16} parent=67 // pred_region
          %525 = dma.done [#allocation10], 16
        $region84: #{forward.16} parent=67 // pred_fallthru
          _
        // Predicated region
        $region85: #{forward.16} parent=67 // pred_check
          %p526 = pneg %p147
        $region86: #{forward.16} parent=67 // pred_check_branch
          %528 = sbr.rel (%p526) target = $region88
        $region87: #{forward.16} parent=67 // pred_region
          %529 = dma.done [#allocation10], 2048
        $region88: #{forward.16} parent=67 // pred_fallthru
          _
        // Predicated region
        $region89: #{forward.16} parent=67 // pred_check
          %p530 = pneg %p168
        $region90: #{forward.16} parent=67 // pred_check_branch
          %532 = sbr.rel (%p530) target = $region92
        $region91: #{forward.16} parent=67 // pred_region
          %533 = dma.done [#allocation13], 16
        $region92: #{forward.16} parent=67 // pred_fallthru
          _
        // Predicated region
        $region93: #{forward.16} parent=67 // pred_check
          %p534 = pneg %p189
        $region94: #{forward.16} parent=67 // pred_check_branch
          %536 = sbr.rel (%p534) target = $region96
        $region95: #{forward.16} parent=67 // pred_region
          %537 = dma.done [#allocation13], 2048
        $region96: #{forward.16} parent=67 // pred_fallthru
          _
        // Predicated region
        $region97: #{forward.16} parent=67 // pred_check
          %p538 = pneg %p210
        $region98: #{forward.16} parent=67 // pred_check_branch
          %540 = sbr.rel (%p538) target = $region100
        $region99: #{forward.16} parent=67 // pred_region
          %541 = dma.done [#allocation16], 16
        $region100: #{forward.16} parent=67 // pred_fallthru
          _
        // Predicated region
        $region101: #{forward.16} parent=67 // pred_check
          %p542 = pneg %p231
        $region102: #{forward.16} parent=67 // pred_check_branch
          %544 = sbr.rel (%p542) target = $region104
        $region103: #{forward.16} parent=67 // pred_region
          %545 = dma.done [#allocation16], 2048
        $region104: #{forward.16} parent=67 // pred_fallthru
          _
        // Predicated region
        $region105: #{forward.16} parent=67 // pred_check
          %p546 = pneg %p252
        $region106: #{forward.16} parent=67 // pred_check_branch
          %548 = sbr.rel (%p546) target = $region108
        $region107: #{forward.16} parent=67 // pred_region
          %549 = dma.done [#allocation19], 16
        $region108: #{forward.16} parent=67 // pred_fallthru
          _
        // Predicated region
        $region109: #{forward.16} parent=67 // pred_check
          %p550 = pneg %p273
        $region110: #{forward.16} parent=67 // pred_check_branch
          %552 = sbr.rel (%p550) target = $region112
        $region111: #{forward.16} parent=67 // pred_region
          %553 = dma.done [#allocation19], 16
        $region112: #{forward.16} parent=67 // pred_fallthru
          _
        // Predicated region
        $region113: #{forward.16} parent=67 // pred_check
          %p554 = pneg %p294
        $region114: #{forward.16} parent=67 // pred_check_branch
          %556 = sbr.rel (%p554) target = $region116
        $region115: #{forward.16} parent=67 // pred_region
          %557 = dma.done [#allocation22], 16
        $region116: #{forward.16} parent=67 // pred_fallthru
          _
        %s558 = sand.u32 %s45, 1
        %s559 = scalar_lea.sflag [#allocation4], %s558
        %s560 = sand.u32 %s45, 1
        %s561 = smul.addr %s560, 8
        %s562 = scalar_lea.vmem [#allocation3], %s561
        %p563 = pneg %p58
        %p564 = pneg %p55
        %s565 = sand.u32 %s37, 1
        %s566 = scalar_lea.sflag [#allocation7], %s565
        %s567 = sand.u32 %s71, 1
        %s568 = smul.addr %s567, 8
        %s569 = scalar_lea.vmem [#allocation6], %s568
        %p570 = pneg %p84
        %p571 = pneg %p81
        %p572 = pneg %p105
        %p573 = pneg %p102
        %p574 = pneg %p126
        %p575 = pneg %p123
        %p576 = pneg %p147
        %p577 = pneg %p144
        %p578 = pneg %p168
        %p579 = pneg %p165
        %p580 = pneg %p189
        %p581 = pneg %p186
        %p582 = pneg %p210
        %p583 = pneg %p207
        %p584 = pneg %p231
        %p585 = pneg %p228
        %p586 = pneg %p252
        %p587 = pneg %p249
        %p588 = pneg %p273
        %p589 = pneg %p270
        %p590 = pneg %p294
        %p591 = pneg %p291
        %p592 = pneg %p320
        %p593 = pneg %p317
        %s594 = sand.u32 %s307, 1
        %s595 = scalar_lea.sflag [#allocation5], %s594
        %s596 = sand.u32 %s307, 1
        %s597 = smul.addr %s596, 8
        %s598 = scalar_lea.vmem [#allocation23], %s597
        %v599 = vld [vmem:[%s504] sm:$0xff]
        %v600 = vld [vmem:[%s513] sm:$0xff]
        %v601 = vld [vmem:[#allocation8] sm:$0xff]
        %v602 = vld [vmem:[#allocation8 + $0x8] sm:$0xff]
        %v603 = vld [vmem:[#allocation8 + $0x10] sm:$0xff]
        %v604 = vld [vmem:[#allocation8 + $0x18] sm:$0xff]
        %v605 = vld [vmem:[#allocation8 + $0x20] sm:$0xff]
        %v606 = vld [vmem:[#allocation8 + $0x28] sm:$0xff]
        %v607 = vld [vmem:[#allocation8 + $0x30] sm:$0xff]
        %v608 = vld [vmem:[#allocation8 + $0x38] sm:$0xff]
        %v609 = vld [vmem:[#allocation8 + $0x40] sm:$0xff]
        %v610 = vld [vmem:[#allocation8 + $0x48] sm:$0xff]
        %v611 = vld [vmem:[#allocation8 + $0x50] sm:$0xff]
        %v612 = vld [vmem:[#allocation8 + $0x58] sm:$0xff]
        %v613 = vld [vmem:[#allocation8 + $0x60] sm:$0xff]
        %v614 = vld [vmem:[#allocation8 + $0x68] sm:$0xff]
        %v615 = vld [vmem:[#allocation8 + $0x70] sm:$0xff]
        %v616 = vld [vmem:[#allocation8 + $0x78] sm:$0xff]
        %v617 = vld [vmem:[#allocation9] sm:$0x1]
        %v619 = vlaneseq
        %v620 = vshrl.u32 %v619, 7
        %v621 = vsub.s32 0, %v620
        %v622 = vrot.slane %v617, %v621
        %624 = vmatprep.subr.mxu0 0.0
        %625 = vmatpush1.msra.mxu0 %v601
        %626 = vmatprep.subr.mxu0 0.0
        %627 = vmatpush1.msra.mxu0 %v602
        %628 = vmatprep.subr.mxu0 0.0
        %629 = vmatpush1.msra.mxu0 %v603
        %630 = vmatprep.subr.mxu0 0.0
        %631 = vmatpush1.msra.mxu0 %v604
        %632 = vmatprep.subr.mxu0 0.0
        %633 = vmatpush1.msra.mxu0 %v605
        %634 = vmatprep.subr.mxu0 0.0
        %635 = vmatpush1.msra.mxu0 %v606
        %636 = vmatprep.subr.mxu0 0.0
        %637 = vmatpush1.msra.mxu0 %v607
        %638 = vmatprep.subr.mxu0 0.0
        %639 = vmatpush1.msra.mxu0 %v608
        %640 = vmatprep.subr.mxu0 0.0
        %641 = vmatpush1.msra.mxu0 %v609
        %642 = vmatprep.subr.mxu0 0.0
        %643 = vmatpush1.msra.mxu0 %v610
        %644 = vmatprep.subr.mxu0 0.0
        %645 = vmatpush1.msra.mxu0 %v611
        %646 = vmatprep.subr.mxu0 0.0
        %647 = vmatpush1.msra.mxu0 %v612
        %648 = vmatprep.subr.mxu0 0.0
        %649 = vmatpush1.msra.mxu0 %v613
        %650 = vmatprep.subr.mxu0 0.0
        %651 = vmatpush1.msra.mxu0 %v614
        %652 = vmatprep.subr.mxu0 0.0
        %653 = vmatpush1.msra.mxu0 %v615
        %654 = vmatprep.subr.mxu0 0.0
        %655 = vmatpush1.msra.mxu0 %v616
        %656 = vmatprep.subr.mxu0 0.0
        %657 = vmatpush1.msra.mxu0 0.0
        %658 = vmatprep.subr.mxu0 0.0
        %659 = vmatpush1.msra.mxu0 0.0
        %660 = vmatprep.subr.mxu0 0.0
        %661 = vmatpush1.msra.mxu0 0.0
        %662 = vmatprep.subr.mxu0 0.0
        %663 = vmatpush1.msra.mxu0 0.0
        %664 = vmatprep.subr.mxu0 0.0
        %665 = vmatpush1.msra.mxu0 0.0
        %666 = vmatprep.subr.mxu0 0.0
        %667 = vmatpush1.msra.mxu0 0.0
        %668 = vmatprep.subr.mxu0 0.0
        %669 = vmatpush1.msra.mxu0 0.0
        %670 = vmatprep.subr.mxu0 0.0
        %671 = vmatpush1.msra.mxu0 0.0
        %672 = vmatprep.subr.mxu0 0.0
        %673 = vmatpush1.msra.mxu0 0.0
        %674 = vmatprep.subr.mxu0 0.0
        %675 = vmatpush1.msra.mxu0 0.0
        %676 = vmatprep.subr.mxu0 0.0
        %677 = vmatpush1.msra.mxu0 0.0
        %678 = vmatprep.subr.mxu0 0.0
        %679 = vmatpush1.msra.mxu0 0.0
        %680 = vmatprep.subr.mxu0 0.0
        %681 = vmatpush1.msra.mxu0 0.0
        %682 = vmatprep.subr.mxu0 0.0
        %683 = vmatpush1.msra.mxu0 0.0
        %684 = vmatprep.subr.mxu0 0.0
        %685 = vmatpush1.msra.mxu0 0.0
        %686 = vmatprep.subr.mxu0 0.0
        %687 = vmatpush1.msra.mxu0 0.0
        %688 = vmatprep.mubr.f32.mxu0 0.0
        %689 = vmatmul.mubr.f32.gmra.mrb[0].mxu0 %v599
        %v690 = vpop.f32.mrb[0].mxu0
        %v691 = vadd.f32 %v622, %v690
        %v692 = vpop.f32.mrb[0].mxu0
        %693 = vdwg.mxu0
        %v694 = vmul.f32 %v691, 0.17677669
        %v695 = vld [vmem:[#allocation11] sm:$0xff]
        %v696 = vld [vmem:[#allocation11 + $0x8] sm:$0xff]
        %v697 = vld [vmem:[#allocation11 + $0x10] sm:$0xff]
        %v698 = vld [vmem:[#allocation11 + $0x18] sm:$0xff]
        %v699 = vld [vmem:[#allocation11 + $0x20] sm:$0xff]
        %v700 = vld [vmem:[#allocation11 + $0x28] sm:$0xff]
        %v701 = vld [vmem:[#allocation11 + $0x30] sm:$0xff]
        %v702 = vld [vmem:[#allocation11 + $0x38] sm:$0xff]
        %v703 = vld [vmem:[#allocation11 + $0x40] sm:$0xff]
        %v704 = vld [vmem:[#allocation11 + $0x48] sm:$0xff]
        %v705 = vld [vmem:[#allocation11 + $0x50] sm:$0xff]
        %v706 = vld [vmem:[#allocation11 + $0x58] sm:$0xff]
        %v707 = vld [vmem:[#allocation11 + $0x60] sm:$0xff]
        %v708 = vld [vmem:[#allocation11 + $0x68] sm:$0xff]
        %v709 = vld [vmem:[#allocation11 + $0x70] sm:$0xff]
        %v710 = vld [vmem:[#allocation11 + $0x78] sm:$0xff]
        %v711 = vld [vmem:[#allocation12] sm:$0x1]
        %v713 = vlaneseq
        %v714 = vshrl.u32 %v713, 7
        %v715 = vsub.s32 0, %v714
        %v716 = vrot.slane %v711, %v715
        %718 = vmatprep.subr.mxu0 0.0
        %719 = vmatpush1.msra.mxu0 %v695
        %720 = vmatprep.subr.mxu0 0.0
        %721 = vmatpush1.msra.mxu0 %v696
        %722 = vmatprep.subr.mxu0 0.0
        %723 = vmatpush1.msra.mxu0 %v697
        %724 = vmatprep.subr.mxu0 0.0
        %725 = vmatpush1.msra.mxu0 %v698
        %726 = vmatprep.subr.mxu0 0.0
        %727 = vmatpush1.msra.mxu0 %v699
        %728 = vmatprep.subr.mxu0 0.0
        %729 = vmatpush1.msra.mxu0 %v700
        %730 = vmatprep.subr.mxu0 0.0
        %731 = vmatpush1.msra.mxu0 %v701
        %732 = vmatprep.subr.mxu0 0.0
        %733 = vmatpush1.msra.mxu0 %v702
        %734 = vmatprep.subr.mxu0 0.0
        %735 = vmatpush1.msra.mxu0 %v703
        %736 = vmatprep.subr.mxu0 0.0
        %737 = vmatpush1.msra.mxu0 %v704
        %738 = vmatprep.subr.mxu0 0.0
        %739 = vmatpush1.msra.mxu0 %v705
        %740 = vmatprep.subr.mxu0 0.0
        %741 = vmatpush1.msra.mxu0 %v706
        %742 = vmatprep.subr.mxu0 0.0
        %743 = vmatpush1.msra.mxu0 %v707
        %744 = vmatprep.subr.mxu0 0.0
        %745 = vmatpush1.msra.mxu0 %v708
        %746 = vmatprep.subr.mxu0 0.0
        %747 = vmatpush1.msra.mxu0 %v709
        %748 = vmatprep.subr.mxu0 0.0
        %749 = vmatpush1.msra.mxu0 %v710
        %750 = vmatprep.subr.mxu0 0.0
        %751 = vmatpush1.msra.mxu0 0.0
        %752 = vmatprep.subr.mxu0 0.0
        %753 = vmatpush1.msra.mxu0 0.0
        %754 = vmatprep.subr.mxu0 0.0
        %755 = vmatpush1.msra.mxu0 0.0
        %756 = vmatprep.subr.mxu0 0.0
        %757 = vmatpush1.msra.mxu0 0.0
        %758 = vmatprep.subr.mxu0 0.0
        %759 = vmatpush1.msra.mxu0 0.0
        %760 = vmatprep.subr.mxu0 0.0
        %761 = vmatpush1.msra.mxu0 0.0
        %762 = vmatprep.subr.mxu0 0.0
        %763 = vmatpush1.msra.mxu0 0.0
        %764 = vmatprep.subr.mxu0 0.0
        %765 = vmatpush1.msra.mxu0 0.0
        %766 = vmatprep.subr.mxu0 0.0
        %767 = vmatpush1.msra.mxu0 0.0
        %768 = vmatprep.subr.mxu0 0.0
        %769 = vmatpush1.msra.mxu0 0.0
        %770 = vmatprep.subr.mxu0 0.0
        %771 = vmatpush1.msra.mxu0 0.0
        %772 = vmatprep.subr.mxu0 0.0
        %773 = vmatpush1.msra.mxu0 0.0
        %774 = vmatprep.subr.mxu0 0.0
        %775 = vmatpush1.msra.mxu0 0.0
        %776 = vmatprep.subr.mxu0 0.0
        %777 = vmatpush1.msra.mxu0 0.0
        %778 = vmatprep.subr.mxu0 0.0
        %779 = vmatpush1.msra.mxu0 0.0
        %780 = vmatprep.subr.mxu0 0.0
        %781 = vmatpush1.msra.mxu0 0.0
        %782 = vmatprep.mubr.f32.mxu0 0.0
        %783 = vmatmul.mubr.f32.gmra.mrb[0].mxu0 %v600
        %v784 = vpop.f32.mrb[0].mxu0
        %v785 = vadd.f32 %v716, %v784
        %v786 = vpop.f32.mrb[0].mxu0
        %787 = vdwg.mxu0
        %v788 = vld [vmem:[#allocation14] sm:$0xff]
        %v789 = vld [vmem:[#allocation14 + $0x8] sm:$0xff]
        %v790 = vld [vmem:[#allocation14 + $0x10] sm:$0xff]
        %v791 = vld [vmem:[#allocation14 + $0x18] sm:$0xff]
        %v792 = vld [vmem:[#allocation14 + $0x20] sm:$0xff]
        %v793 = vld [vmem:[#allocation14 + $0x28] sm:$0xff]
        %v794 = vld [vmem:[#allocation14 + $0x30] sm:$0xff]
        %v795 = vld [vmem:[#allocation14 + $0x38] sm:$0xff]
        %v796 = vld [vmem:[#allocation14 + $0x40] sm:$0xff]
        %v797 = vld [vmem:[#allocation14 + $0x48] sm:$0xff]
        %v798 = vld [vmem:[#allocation14 + $0x50] sm:$0xff]
        %v799 = vld [vmem:[#allocation14 + $0x58] sm:$0xff]
        %v800 = vld [vmem:[#allocation14 + $0x60] sm:$0xff]
        %v801 = vld [vmem:[#allocation14 + $0x68] sm:$0xff]
        %v802 = vld [vmem:[#allocation14 + $0x70] sm:$0xff]
        %v803 = vld [vmem:[#allocation14 + $0x78] sm:$0xff]
        %v804 = vld [vmem:[#allocation15] sm:$0x1]
        %v806 = vlaneseq
        %v807 = vshrl.u32 %v806, 7
        %v808 = vsub.s32 0, %v807
        %v809 = vrot.slane %v804, %v808
        %811 = vmatprep.subr.mxu0 0.0
        %812 = vmatpush1.msra.mxu0 %v788
        %813 = vmatprep.subr.mxu0 0.0
        %814 = vmatpush1.msra.mxu0 %v789
        %815 = vmatprep.subr.mxu0 0.0
        %816 = vmatpush1.msra.mxu0 %v790
        %817 = vmatprep.subr.mxu0 0.0
        %818 = vmatpush1.msra.mxu0 %v791
        %819 = vmatprep.subr.mxu0 0.0
        %820 = vmatpush1.msra.mxu0 %v792
        %821 = vmatprep.subr.mxu0 0.0
        %822 = vmatpush1.msra.mxu0 %v793
        %823 = vmatprep.subr.mxu0 0.0
        %824 = vmatpush1.msra.mxu0 %v794
        %825 = vmatprep.subr.mxu0 0.0
        %826 = vmatpush1.msra.mxu0 %v795
        %827 = vmatprep.subr.mxu0 0.0
        %828 = vmatpush1.msra.mxu0 %v796
        %829 = vmatprep.subr.mxu0 0.0
        %830 = vmatpush1.msra.mxu0 %v797
        %831 = vmatprep.subr.mxu0 0.0
        %832 = vmatpush1.msra.mxu0 %v798
        %833 = vmatprep.subr.mxu0 0.0
        %834 = vmatpush1.msra.mxu0 %v799
        %835 = vmatprep.subr.mxu0 0.0
        %836 = vmatpush1.msra.mxu0 %v800
        %837 = vmatprep.subr.mxu0 0.0
        %838 = vmatpush1.msra.mxu0 %v801
        %839 = vmatprep.subr.mxu0 0.0
        %840 = vmatpush1.msra.mxu0 %v802
        %841 = vmatprep.subr.mxu0 0.0
        %842 = vmatpush1.msra.mxu0 %v803
        %843 = vmatprep.subr.mxu0 0.0
        %844 = vmatpush1.msra.mxu0 0.0
        %845 = vmatprep.subr.mxu0 0.0
        %846 = vmatpush1.msra.mxu0 0.0
        %847 = vmatprep.subr.mxu0 0.0
        %848 = vmatpush1.msra.mxu0 0.0
        %849 = vmatprep.subr.mxu0 0.0
        %850 = vmatpush1.msra.mxu0 0.0
        %851 = vmatprep.subr.mxu0 0.0
        %852 = vmatpush1.msra.mxu0 0.0
        %853 = vmatprep.subr.mxu0 0.0
        %854 = vmatpush1.msra.mxu0 0.0
        %855 = vmatprep.subr.mxu0 0.0
        %856 = vmatpush1.msra.mxu0 0.0
        %857 = vmatprep.subr.mxu0 0.0
        %858 = vmatpush1.msra.mxu0 0.0
        %859 = vmatprep.subr.mxu0 0.0
        %860 = vmatpush1.msra.mxu0 0.0
        %861 = vmatprep.subr.mxu0 0.0
        %862 = vmatpush1.msra.mxu0 0.0
        %863 = vmatprep.subr.mxu0 0.0
        %864 = vmatpush1.msra.mxu0 0.0
        %865 = vmatprep.subr.mxu0 0.0
        %866 = vmatpush1.msra.mxu0 0.0
        %867 = vmatprep.subr.mxu0 0.0
        %868 = vmatpush1.msra.mxu0 0.0
        %869 = vmatprep.subr.mxu0 0.0
        %870 = vmatpush1.msra.mxu0 0.0
        %871 = vmatprep.subr.mxu0 0.0
        %872 = vmatpush1.msra.mxu0 0.0
        %873 = vmatprep.subr.mxu0 0.0
        %874 = vmatpush1.msra.mxu0 0.0
        %875 = vmatprep.mubr.f32.mxu0 0.0
        %876 = vmatmul.mubr.f32.gmra.mrb[0].mxu0 %v600
        %v877 = vpop.f32.mrb[0].mxu0
        %v878 = vadd.f32 %v809, %v877
        %v879 = vpop.f32.mrb[0].mxu0
        %880 = vdwg.mxu0
        %vm881 = vcmask 261120
        %v883 = vsel %vm881, %v694, 0
        %v886 = vsel %vm881, %v785, 0
        %888 = vmatprep.subr.mxu0 0.0
        %889 = vmatpush1.xpose.msra.mxu0 %v886
        %890 = vmatprep.subr.mxu0 0.0
        %891 = vmatpush1.xpose.msra.mxu0 0.0
        %892 = vmatprep.subr.mxu0 0.0
        %893 = vmatpush1.xpose.msra.mxu0 0.0
        %894 = vmatprep.subr.mxu0 0.0
        %895 = vmatpush1.xpose.msra.mxu0 0.0
        %896 = vmatprep.subr.mxu0 0.0
        %897 = vmatpush1.xpose.msra.mxu0 0.0
        %898 = vmatprep.subr.mxu0 0.0
        %899 = vmatpush1.xpose.msra.mxu0 0.0
        %900 = vmatprep.subr.mxu0 0.0
        %901 = vmatpush1.xpose.msra.mxu0 0.0
        %902 = vmatprep.subr.mxu0 0.0
        %903 = vmatpush1.xpose.msra.mxu0 0.0
        %904 = vmatprep.subr.mxu0 0.0
        %905 = vmatpush1.xpose.msra.mxu0 0.0
        %906 = vmatprep.subr.mxu0 0.0
        %907 = vmatpush1.xpose.msra.mxu0 0.0
        %908 = vmatprep.subr.mxu0 0.0
        %909 = vmatpush1.xpose.msra.mxu0 0.0
        %910 = vmatprep.subr.mxu0 0.0
        %911 = vmatpush1.xpose.msra.mxu0 0.0
        %912 = vmatprep.subr.mxu0 0.0
        %913 = vmatpush1.xpose.msra.mxu0 0.0
        %914 = vmatprep.subr.mxu0 0.0
        %915 = vmatpush1.xpose.msra.mxu0 0.0
        %916 = vmatprep.subr.mxu0 0.0
        %917 = vmatpush1.xpose.msra.mxu0 0.0
        %918 = vmatprep.subr.mxu0 0.0
        %919 = vmatpush1.xpose.msra.mxu0 0.0
        %920 = vmatprep.subr.mxu0 0.0
        %921 = vmatpush1.xpose.msra.mxu0 0.0
        %922 = vmatprep.subr.mxu0 0.0
        %923 = vmatpush1.xpose.msra.mxu0 0.0
        %924 = vmatprep.subr.mxu0 0.0
        %925 = vmatpush1.xpose.msra.mxu0 0.0
        %926 = vmatprep.subr.mxu0 0.0
        %927 = vmatpush1.xpose.msra.mxu0 0.0
        %928 = vmatprep.subr.mxu0 0.0
        %929 = vmatpush1.xpose.msra.mxu0 0.0
        %930 = vmatprep.subr.mxu0 0.0
        %931 = vmatpush1.xpose.msra.mxu0 0.0
        %932 = vmatprep.subr.mxu0 0.0
        %933 = vmatpush1.xpose.msra.mxu0 0.0
        %934 = vmatprep.subr.mxu0 0.0
        %935 = vmatpush1.xpose.msra.mxu0 0.0
        %936 = vmatprep.subr.mxu0 0.0
        %937 = vmatpush1.xpose.msra.mxu0 0.0
        %938 = vmatprep.subr.mxu0 0.0
        %939 = vmatpush1.xpose.msra.mxu0 0.0
        %940 = vmatprep.subr.mxu0 0.0
        %941 = vmatpush1.xpose.msra.mxu0 0.0
        %942 = vmatprep.subr.mxu0 0.0
        %943 = vmatpush1.xpose.msra.mxu0 0.0
        %944 = vmatprep.subr.mxu0 0.0
        %945 = vmatpush1.xpose.msra.mxu0 0.0
        %946 = vmatprep.subr.mxu0 0.0
        %947 = vmatpush1.xpose.msra.mxu0 0.0
        %948 = vmatprep.subr.mxu0 0.0
        %949 = vmatpush1.xpose.msra.mxu0 0.0
        %950 = vmatprep.subr.mxu0 0.0
        %951 = vmatpush1.xpose.msra.mxu0 0.0
        %952 = vmatprep.mubr.f32.mxu0 0.0
        %953 = vmatmul.mubr.f32.gmra.mrb[0].mxu0 %v883
        %v954 = vpop.f32.mrb[0].mxu0
        %v955 = vadd.f32 0.0, %v954
        %v956 = vpop.f32.mrb[0].mxu0
        %957 = vdwg.mxu0
        %vm958 = vcmask 64512
        %v959 = vsel %vm958, %v955, -inf
        %960 = vmax.xlane.f32.xlu0 %v959
        %v961 = vpop.xlane.xlu0 %960
        %v962 = vsub.f32 %v955, %v961
        %v963 = vmul.f32 %v962, 1.442695
        %v964 = vpow.pop %v963
        %v965 = vsel %vm958, %v964, 0.0
        %966 = vadd.xlane.f32.xlu0 %v965
        %v967 = vpop.xlane.xlu0 %966
        %v968 = vrcp.pop %v967
        %v969 = vmul.f32 %v964, %v968
        %v971 = vsel %vm958, %v969, 0
        %973 = vmatprep.subr.mxu0 0.0
        %974 = vmatpush1.msra.mxu0 %v878
        %975 = vmatprep.subr.mxu0 0.0
        %976 = vmatpush1.msra.mxu0 0.0
        %977 = vmatprep.subr.mxu0 0.0
        %978 = vmatpush1.msra.mxu0 0.0
        %979 = vmatprep.subr.mxu0 0.0
        %980 = vmatpush1.msra.mxu0 0.0
        %981 = vmatprep.subr.mxu0 0.0
        %982 = vmatpush1.msra.mxu0 0.0
        %983 = vmatprep.subr.mxu0 0.0
        %984 = vmatpush1.msra.mxu0 0.0
        %985 = vmatprep.subr.mxu0 0.0
        %986 = vmatpush1.msra.mxu0 0.0
        %987 = vmatprep.subr.mxu0 0.0
        %988 = vmatpush1.msra.mxu0 0.0
        %989 = vmatprep.subr.mxu0 0.0
        %990 = vmatpush1.msra.mxu0 0.0
        %991 = vmatprep.subr.mxu0 0.0
        %992 = vmatpush1.msra.mxu0 0.0
        %993 = vmatprep.subr.mxu0 0.0
        %994 = vmatpush1.msra.mxu0 0.0
        %995 = vmatprep.subr.mxu0 0.0
        %996 = vmatpush1.msra.mxu0 0.0
        %997 = vmatprep.subr.mxu0 0.0
        %998 = vmatpush1.msra.mxu0 0.0
        %999 = vmatprep.subr.mxu0 0.0
        %1000 = vmatpush1.msra.mxu0 0.0
        %1001 = vmatprep.subr.mxu0 0.0
        %1002 = vmatpush1.msra.mxu0 0.0
        %1003 = vmatprep.subr.mxu0 0.0
        %1004 = vmatpush1.msra.mxu0 0.0
        %1005 = vmatprep.subr.mxu0 0.0
        %1006 = vmatpush1.msra.mxu0 0.0
        %1007 = vmatprep.subr.mxu0 0.0
        %1008 = vmatpush1.msra.mxu0 0.0
        %1009 = vmatprep.subr.mxu0 0.0
        %1010 = vmatpush1.msra.mxu0 0.0
        %1011 = vmatprep.subr.mxu0 0.0
        %1012 = vmatpush1.msra.mxu0 0.0
        %1013 = vmatprep.subr.mxu0 0.0
        %1014 = vmatpush1.msra.mxu0 0.0
        %1015 = vmatprep.subr.mxu0 0.0
        %1016 = vmatpush1.msra.mxu0 0.0
        %1017 = vmatprep.subr.mxu0 0.0
        %1018 = vmatpush1.msra.mxu0 0.0
        %1019 = vmatprep.subr.mxu0 0.0
        %1020 = vmatpush1.msra.mxu0 0.0
        %1021 = vmatprep.subr.mxu0 0.0
        %1022 = vmatpush1.msra.mxu0 0.0
        %1023 = vmatprep.subr.mxu0 0.0
        %1024 = vmatpush1.msra.mxu0 0.0
        %1025 = vmatprep.subr.mxu0 0.0
        %1026 = vmatpush1.msra.mxu0 0.0
        %1027 = vmatprep.subr.mxu0 0.0
        %1028 = vmatpush1.msra.mxu0 0.0
        %1029 = vmatprep.subr.mxu0 0.0
        %1030 = vmatpush1.msra.mxu0 0.0
        %1031 = vmatprep.subr.mxu0 0.0
        %1032 = vmatpush1.msra.mxu0 0.0
        %1033 = vmatprep.subr.mxu0 0.0
        %1034 = vmatpush1.msra.mxu0 0.0
        %1035 = vmatprep.subr.mxu0 0.0
        %1036 = vmatpush1.msra.mxu0 0.0
        %1037 = vmatprep.mubr.f32.mxu0 0.0
        %1038 = vmatmul.mubr.f32.gmra.mrb[0].mxu0 %v971
        %v1039 = vpop.f32.mrb[0].mxu0
        %v1040 = vadd.f32 0.0, %v1039
        %v1041 = vpop.f32.mrb[0].mxu0
        %1042 = vdwg.mxu0
        %1043 = vst.msk [vmem:[#allocation2] sm:$0xff] %vm881, %v1040
        %1044 = vrot.lane.b32.xlu0 %v694, 96
        %v1045 = vpop.permute.xlu0 %1044
        %1046 = vrot.lane.b32.xlu0 %v785, 96
        %v1047 = vpop.permute.xlu0 %1046
        %v1048 = vsel %vm881, %v1045, 0
        %v1050 = vsel %vm881, %v1047, 0
        %1052 = vmatprep.subr.mxu0 0.0
        %1053 = vmatpush1.xpose.msra.mxu0 %v1050
        %1054 = vmatprep.subr.mxu0 0.0
        %1055 = vmatpush1.xpose.msra.mxu0 0.0
        %1056 = vmatprep.subr.mxu0 0.0
        %1057 = vmatpush1.xpose.msra.mxu0 0.0
        %1058 = vmatprep.subr.mxu0 0.0
        %1059 = vmatpush1.xpose.msra.mxu0 0.0
        %1060 = vmatprep.subr.mxu0 0.0
        %1061 = vmatpush1.xpose.msra.mxu0 0.0
        %1062 = vmatprep.subr.mxu0 0.0
        %1063 = vmatpush1.xpose.msra.mxu0 0.0
        %1064 = vmatprep.subr.mxu0 0.0
        %1065 = vmatpush1.xpose.msra.mxu0 0.0
        %1066 = vmatprep.subr.mxu0 0.0
        %1067 = vmatpush1.xpose.msra.mxu0 0.0
        %1068 = vmatprep.subr.mxu0 0.0
        %1069 = vmatpush1.xpose.msra.mxu0 0.0
        %1070 = vmatprep.subr.mxu0 0.0
        %1071 = vmatpush1.xpose.msra.mxu0 0.0
        %1072 = vmatprep.subr.mxu0 0.0
        %1073 = vmatpush1.xpose.msra.mxu0 0.0
        %1074 = vmatprep.subr.mxu0 0.0
        %1075 = vmatpush1.xpose.msra.mxu0 0.0
        %1076 = vmatprep.subr.mxu0 0.0
        %1077 = vmatpush1.xpose.msra.mxu0 0.0
        %1078 = vmatprep.subr.mxu0 0.0
        %1079 = vmatpush1.xpose.msra.mxu0 0.0
        %1080 = vmatprep.subr.mxu0 0.0
        %1081 = vmatpush1.xpose.msra.mxu0 0.0
        %1082 = vmatprep.subr.mxu0 0.0
        %1083 = vmatpush1.xpose.msra.mxu0 0.0
        %1084 = vmatprep.subr.mxu0 0.0
        %1085 = vmatpush1.xpose.msra.mxu0 0.0
        %1086 = vmatprep.subr.mxu0 0.0
        %1087 = vmatpush1.xpose.msra.mxu0 0.0
        %1088 = vmatprep.subr.mxu0 0.0
        %1089 = vmatpush1.xpose.msra.mxu0 0.0
        %1090 = vmatprep.subr.mxu0 0.0
        %1091 = vmatpush1.xpose.msra.mxu0 0.0
        %1092 = vmatprep.subr.mxu0 0.0
        %1093 = vmatpush1.xpose.msra.mxu0 0.0
        %1094 = vmatprep.subr.mxu0 0.0
        %1095 = vmatpush1.xpose.msra.mxu0 0.0
        %1096 = vmatprep.subr.mxu0 0.0
        %1097 = vmatpush1.xpose.msra.mxu0 0.0
        %1098 = vmatprep.subr.mxu0 0.0
        %1099 = vmatpush1.xpose.msra.mxu0 0.0
        %1100 = vmatprep.subr.mxu0 0.0
        %1101 = vmatpush1.xpose.msra.mxu0 0.0
        %1102 = vmatprep.subr.mxu0 0.0
        %1103 = vmatpush1.xpose.msra.mxu0 0.0
        %1104 = vmatprep.subr.mxu0 0.0
        %1105 = vmatpush1.xpose.msra.mxu0 0.0
        %1106 = vmatprep.subr.mxu0 0.0
        %1107 = vmatpush1.xpose.msra.mxu0 0.0
        %1108 = vmatprep.subr.mxu0 0.0
        %1109 = vmatpush1.xpose.msra.mxu0 0.0
        %1110 = vmatprep.subr.mxu0 0.0
        %1111 = vmatpush1.xpose.msra.mxu0 0.0
        %1112 = vmatprep.subr.mxu0 0.0
        %1113 = vmatpush1.xpose.msra.mxu0 0.0
        %1114 = vmatprep.subr.mxu0 0.0
        %1115 = vmatpush1.xpose.msra.mxu0 0.0
        %1116 = vmatprep.mubr.f32.mxu0 0.0
        %1117 = vmatmul.mubr.f32.gmra.mrb[0].mxu0 %v1048
        %v1118 = vpop.f32.mrb[0].mxu0
        %v1119 = vadd.f32 0.0, %v1118
        %v1120 = vpop.f32.mrb[0].mxu0
        %1121 = vdwg.mxu0
        %v1122 = vsel %vm958, %v1119, -inf
        %1123 = vmax.xlane.f32.xlu0 %v1122
        %v1124 = vpop.xlane.xlu0 %1123
        %v1125 = vsub.f32 %v1119, %v1124
        %v1126 = vmul.f32 %v1125, 1.442695
        %v1127 = vpow.pop %v1126
        %v1128 = vsel %vm958, %v1127, 0.0
        %1129 = vadd.xlane.f32.xlu0 %v1128
        %v1130 = vpop.xlane.xlu0 %1129
        %v1131 = vrcp.pop %v1130
        %v1132 = vmul.f32 %v1127, %v1131
        %1134 = vrot.lane.b32.xlu0 %v878, 96
        %v1135 = vpop.permute.xlu0 %1134
        %v1138 = vsel %vm958, %v1132, 0
        %1140 = vmatprep.subr.mxu0 0.0
        %1141 = vmatpush1.msra.mxu0 %v1135
        %1142 = vmatprep.subr.mxu0 0.0
        %1143 = vmatpush1.msra.mxu0 0.0
        %1144 = vmatprep.subr.mxu0 0.0
        %1145 = vmatpush1.msra.mxu0 0.0
        %1146 = vmatprep.subr.mxu0 0.0
        %1147 = vmatpush1.msra.mxu0 0.0
        %1148 = vmatprep.subr.mxu0 0.0
        %1149 = vmatpush1.msra.mxu0 0.0
        %1150 = vmatprep.subr.mxu0 0.0
        %1151 = vmatpush1.msra.mxu0 0.0
        %1152 = vmatprep.subr.mxu0 0.0
        %1153 = vmatpush1.msra.mxu0 0.0
        %1154 = vmatprep.subr.mxu0 0.0
        %1155 = vmatpush1.msra.mxu0 0.0
        %1156 = vmatprep.subr.mxu0 0.0
        %1157 = vmatpush1.msra.mxu0 0.0
        %1158 = vmatprep.subr.mxu0 0.0
        %1159 = vmatpush1.msra.mxu0 0.0
        %1160 = vmatprep.subr.mxu0 0.0
        %1161 = vmatpush1.msra.mxu0 0.0
        %1162 = vmatprep.subr.mxu0 0.0
        %1163 = vmatpush1.msra.mxu0 0.0
        %1164 = vmatprep.subr.mxu0 0.0
        %1165 = vmatpush1.msra.mxu0 0.0
        %1166 = vmatprep.subr.mxu0 0.0
        %1167 = vmatpush1.msra.mxu0 0.0
        %1168 = vmatprep.subr.mxu0 0.0
        %1169 = vmatpush1.msra.mxu0 0.0
        %1170 = vmatprep.subr.mxu0 0.0
        %1171 = vmatpush1.msra.mxu0 0.0
        %1172 = vmatprep.subr.mxu0 0.0
        %1173 = vmatpush1.msra.mxu0 0.0
        %1174 = vmatprep.subr.mxu0 0.0
        %1175 = vmatpush1.msra.mxu0 0.0
        %1176 = vmatprep.subr.mxu0 0.0
        %1177 = vmatpush1.msra.mxu0 0.0
        %1178 = vmatprep.subr.mxu0 0.0
        %1179 = vmatpush1.msra.mxu0 0.0
        %1180 = vmatprep.subr.mxu0 0.0
        %1181 = vmatpush1.msra.mxu0 0.0
        %1182 = vmatprep.subr.mxu0 0.0
        %1183 = vmatpush1.msra.mxu0 0.0
        %1184 = vmatprep.subr.mxu0 0.0
        %1185 = vmatpush1.msra.mxu0 0.0
        %1186 = vmatprep.subr.mxu0 0.0
        %1187 = vmatpush1.msra.mxu0 0.0
        %1188 = vmatprep.subr.mxu0 0.0
        %1189 = vmatpush1.msra.mxu0 0.0
        %1190 = vmatprep.subr.mxu0 0.0
        %1191 = vmatpush1.msra.mxu0 0.0
        %1192 = vmatprep.subr.mxu0 0.0
        %1193 = vmatpush1.msra.mxu0 0.0
        %1194 = vmatprep.subr.mxu0 0.0
        %1195 = vmatpush1.msra.mxu0 0.0
        %1196 = vmatprep.subr.mxu0 0.0
        %1197 = vmatpush1.msra.mxu0 0.0
        %1198 = vmatprep.subr.mxu0 0.0
        %1199 = vmatpush1.msra.mxu0 0.0
        %1200 = vmatprep.subr.mxu0 0.0
        %1201 = vmatpush1.msra.mxu0 0.0
        %1202 = vmatprep.subr.mxu0 0.0
        %1203 = vmatpush1.msra.mxu0 0.0
        %1204 = vmatprep.mubr.f32.mxu0 0.0
        %1205 = vmatmul.mubr.f32.gmra.mrb[0].mxu0 %v1138
        %v1206 = vpop.f32.mrb[0].mxu0
        %v1207 = vadd.f32 0.0, %v1206
        %v1208 = vpop.f32.mrb[0].mxu0
        %1209 = vdwg.mxu0
        %1211 = vrot.lane.b32.xlu0 %v1207, 32
        %v1212 = vpop.permute.xlu0 %1211
        %vm1214 = vcmask 523520
        %1215 = vst.msk [vmem:[#allocation2] sm:$0xff] %vm1214, %v1212
        %1216 = vrot.lane.b32.xlu0 %v694, 64
        %v1217 = vpop.permute.xlu0 %1216
        %1218 = vrot.lane.b32.xlu0 %v785, 64
        %v1219 = vpop.permute.xlu0 %1218
        %v1220 = vsel %vm881, %v1217, 0
        %v1222 = vsel %vm881, %v1219, 0
        %1224 = vmatprep.subr.mxu0 0.0
        %1225 = vmatpush1.xpose.msra.mxu0 %v1222
        %1226 = vmatprep.subr.mxu0 0.0
        %1227 = vmatpush1.xpose.msra.mxu0 0.0
        %1228 = vmatprep.subr.mxu0 0.0
        %1229 = vmatpush1.xpose.msra.mxu0 0.0
        %1230 = vmatprep.subr.mxu0 0.0
        %1231 = vmatpush1.xpose.msra.mxu0 0.0
        %1232 = vmatprep.subr.mxu0 0.0
        %1233 = vmatpush1.xpose.msra.mxu0 0.0
        %1234 = vmatprep.subr.mxu0 0.0
        %1235 = vmatpush1.xpose.msra.mxu0 0.0
        %1236 = vmatprep.subr.mxu0 0.0
        %1237 = vmatpush1.xpose.msra.mxu0 0.0
        %1238 = vmatprep.subr.mxu0 0.0
        %1239 = vmatpush1.xpose.msra.mxu0 0.0
        %1240 = vmatprep.subr.mxu0 0.0
        %1241 = vmatpush1.xpose.msra.mxu0 0.0
        %1242 = vmatprep.subr.mxu0 0.0
        %1243 = vmatpush1.xpose.msra.mxu0 0.0
        %1244 = vmatprep.subr.mxu0 0.0
        %1245 = vmatpush1.xpose.msra.mxu0 0.0
        %1246 = vmatprep.subr.mxu0 0.0
        %1247 = vmatpush1.xpose.msra.mxu0 0.0
        %1248 = vmatprep.subr.mxu0 0.0
        %1249 = vmatpush1.xpose.msra.mxu0 0.0
        %1250 = vmatprep.subr.mxu0 0.0
        %1251 = vmatpush1.xpose.msra.mxu0 0.0
        %1252 = vmatprep.subr.mxu0 0.0
        %1253 = vmatpush1.xpose.msra.mxu0 0.0
        %1254 = vmatprep.subr.mxu0 0.0
        %1255 = vmatpush1.xpose.msra.mxu0 0.0
        %1256 = vmatprep.subr.mxu0 0.0
        %1257 = vmatpush1.xpose.msra.mxu0 0.0
        %1258 = vmatprep.subr.mxu0 0.0
        %1259 = vmatpush1.xpose.msra.mxu0 0.0
        %1260 = vmatprep.subr.mxu0 0.0
        %1261 = vmatpush1.xpose.msra.mxu0 0.0
        %1262 = vmatprep.subr.mxu0 0.0
        %1263 = vmatpush1.xpose.msra.mxu0 0.0
        %1264 = vmatprep.subr.mxu0 0.0
        %1265 = vmatpush1.xpose.msra.mxu0 0.0
        %1266 = vmatprep.subr.mxu0 0.0
        %1267 = vmatpush1.xpose.msra.mxu0 0.0
        %1268 = vmatprep.subr.mxu0 0.0
        %1269 = vmatpush1.xpose.msra.mxu0 0.0
        %1270 = vmatprep.subr.mxu0 0.0
        %1271 = vmatpush1.xpose.msra.mxu0 0.0
        %1272 = vmatprep.subr.mxu0 0.0
        %1273 = vmatpush1.xpose.msra.mxu0 0.0
        %1274 = vmatprep.subr.mxu0 0.0
        %1275 = vmatpush1.xpose.msra.mxu0 0.0
        %1276 = vmatprep.subr.mxu0 0.0
        %1277 = vmatpush1.xpose.msra.mxu0 0.0
        %1278 = vmatprep.subr.mxu0 0.0
        %1279 = vmatpush1.xpose.msra.mxu0 0.0
        %1280 = vmatprep.subr.mxu0 0.0
        %1281 = vmatpush1.xpose.msra.mxu0 0.0
        %1282 = vmatprep.subr.mxu0 0.0
        %1283 = vmatpush1.xpose.msra.mxu0 0.0
        %1284 = vmatprep.subr.mxu0 0.0
        %1285 = vmatpush1.xpose.msra.mxu0 0.0
        %1286 = vmatprep.subr.mxu0 0.0
        %1287 = vmatpush1.xpose.msra.mxu0 0.0
        %1288 = vmatprep.mubr.f32.mxu0 0.0
        %1289 = vmatmul.mubr.f32.gmra.mrb[0].mxu0 %v1220
        %v1290 = vpop.f32.mrb[0].mxu0
        %v1291 = vadd.f32 0.0, %v1290
        %v1292 = vpop.f32.mrb[0].mxu0
        %1293 = vdwg.mxu0
        %v1294 = vsel %vm958, %v1291, -inf
        %1295 = vmax.xlane.f32.xlu0 %v1294
        %v1296 = vpop.xlane.xlu0 %1295
        %v1297 = vsub.f32 %v1291, %v1296
        %v1298 = vmul.f32 %v1297, 1.442695
        %v1299 = vpow.pop %v1298
        %v1300 = vsel %vm958, %v1299, 0.0
        %1301 = vadd.xlane.f32.xlu0 %v1300
        %v1302 = vpop.xlane.xlu0 %1301
        %v1303 = vrcp.pop %v1302
        %v1304 = vmul.f32 %v1299, %v1303
        %1305 = vrot.lane.b32.xlu0 %v878, 64
        %v1306 = vpop.permute.xlu0 %1305
        %v1309 = vsel %vm958, %v1304, 0
        %1311 = vmatprep.subr.mxu0 0.0
        %1312 = vmatpush1.msra.mxu0 %v1306
        %1313 = vmatprep.subr.mxu0 0.0
        %1314 = vmatpush1.msra.mxu0 0.0
        %1315 = vmatprep.subr.mxu0 0.0
        %1316 = vmatpush1.msra.mxu0 0.0
        %1317 = vmatprep.subr.mxu0 0.0
        %1318 = vmatpush1.msra.mxu0 0.0
        %1319 = vmatprep.subr.mxu0 0.0
        %1320 = vmatpush1.msra.mxu0 0.0
        %1321 = vmatprep.subr.mxu0 0.0
        %1322 = vmatpush1.msra.mxu0 0.0
        %1323 = vmatprep.subr.mxu0 0.0
        %1324 = vmatpush1.msra.mxu0 0.0
        %1325 = vmatprep.subr.mxu0 0.0
        %1326 = vmatpush1.msra.mxu0 0.0
        %1327 = vmatprep.subr.mxu0 0.0
        %1328 = vmatpush1.msra.mxu0 0.0
        %1329 = vmatprep.subr.mxu0 0.0
        %1330 = vmatpush1.msra.mxu0 0.0
        %1331 = vmatprep.subr.mxu0 0.0
        %1332 = vmatpush1.msra.mxu0 0.0
        %1333 = vmatprep.subr.mxu0 0.0
        %1334 = vmatpush1.msra.mxu0 0.0
        %1335 = vmatprep.subr.mxu0 0.0
        %1336 = vmatpush1.msra.mxu0 0.0
        %1337 = vmatprep.subr.mxu0 0.0
        %1338 = vmatpush1.msra.mxu0 0.0
        %1339 = vmatprep.subr.mxu0 0.0
        %1340 = vmatpush1.msra.mxu0 0.0
        %1341 = vmatprep.subr.mxu0 0.0
        %1342 = vmatpush1.msra.mxu0 0.0
        %1343 = vmatprep.subr.mxu0 0.0
        %1344 = vmatpush1.msra.mxu0 0.0
        %1345 = vmatprep.subr.mxu0 0.0
        %1346 = vmatpush1.msra.mxu0 0.0
        %1347 = vmatprep.subr.mxu0 0.0
        %1348 = vmatpush1.msra.mxu0 0.0
        %1349 = vmatprep.subr.mxu0 0.0
        %1350 = vmatpush1.msra.mxu0 0.0
        %1351 = vmatprep.subr.mxu0 0.0
        %1352 = vmatpush1.msra.mxu0 0.0
        %1353 = vmatprep.subr.mxu0 0.0
        %1354 = vmatpush1.msra.mxu0 0.0
        %1355 = vmatprep.subr.mxu0 0.0
        %1356 = vmatpush1.msra.mxu0 0.0
        %1357 = vmatprep.subr.mxu0 0.0
        %1358 = vmatpush1.msra.mxu0 0.0
        %1359 = vmatprep.subr.mxu0 0.0
        %1360 = vmatpush1.msra.mxu0 0.0
        %1361 = vmatprep.subr.mxu0 0.0
        %1362 = vmatpush1.msra.mxu0 0.0
        %1363 = vmatprep.subr.mxu0 0.0
        %1364 = vmatpush1.msra.mxu0 0.0
        %1365 = vmatprep.subr.mxu0 0.0
        %1366 = vmatpush1.msra.mxu0 0.0
        %1367 = vmatprep.subr.mxu0 0.0
        %1368 = vmatpush1.msra.mxu0 0.0
        %1369 = vmatprep.subr.mxu0 0.0
        %1370 = vmatpush1.msra.mxu0 0.0
        %1371 = vmatprep.subr.mxu0 0.0
        %1372 = vmatpush1.msra.mxu0 0.0
        %1373 = vmatprep.subr.mxu0 0.0
        %1374 = vmatpush1.msra.mxu0 0.0
        %1375 = vmatprep.mubr.f32.mxu0 0.0
        %1376 = vmatmul.mubr.f32.gmra.mrb[0].mxu0 %v1309
        %v1377 = vpop.f32.mrb[0].mxu0
        %v1378 = vadd.f32 0.0, %v1377
        %v1379 = vpop.f32.mrb[0].mxu0
        %1380 = vdwg.mxu0
        %1382 = vrot.lane.b32.xlu0 %v1378, 64
        %v1383 = vpop.permute.xlu0 %1382
        %vm1385 = vcmask 785920
        %1386 = vst.msk [vmem:[#allocation2] sm:$0xff] %vm1385, %v1383
        %1387 = vrot.lane.b32.xlu0 %v694, 32
        %v1388 = vpop.permute.xlu0 %1387
        %1389 = vrot.lane.b32.xlu0 %v785, 32
        %v1390 = vpop.permute.xlu0 %1389
        %v1391 = vsel %vm881, %v1388, 0
        %v1393 = vsel %vm881, %v1390, 0
        %1395 = vmatprep.subr.mxu0 0.0
        %1396 = vmatpush1.xpose.msra.mxu0 %v1393
        %1397 = vmatprep.subr.mxu0 0.0
        %1398 = vmatpush1.xpose.msra.mxu0 0.0
        %1399 = vmatprep.subr.mxu0 0.0
        %1400 = vmatpush1.xpose.msra.mxu0 0.0
        %1401 = vmatprep.subr.mxu0 0.0
        %1402 = vmatpush1.xpose.msra.mxu0 0.0
        %1403 = vmatprep.subr.mxu0 0.0
        %1404 = vmatpush1.xpose.msra.mxu0 0.0
        %1405 = vmatprep.subr.mxu0 0.0
        %1406 = vmatpush1.xpose.msra.mxu0 0.0
        %1407 = vmatprep.subr.mxu0 0.0
        %1408 = vmatpush1.xpose.msra.mxu0 0.0
        %1409 = vmatprep.subr.mxu0 0.0
        %1410 = vmatpush1.xpose.msra.mxu0 0.0
        %1411 = vmatprep.subr.mxu0 0.0
        %1412 = vmatpush1.xpose.msra.mxu0 0.0
        %1413 = vmatprep.subr.mxu0 0.0
        %1414 = vmatpush1.xpose.msra.mxu0 0.0
        %1415 = vmatprep.subr.mxu0 0.0
        %1416 = vmatpush1.xpose.msra.mxu0 0.0
        %1417 = vmatprep.subr.mxu0 0.0
        %1418 = vmatpush1.xpose.msra.mxu0 0.0
        %1419 = vmatprep.subr.mxu0 0.0
        %1420 = vmatpush1.xpose.msra.mxu0 0.0
        %1421 = vmatprep.subr.mxu0 0.0
        %1422 = vmatpush1.xpose.msra.mxu0 0.0
        %1423 = vmatprep.subr.mxu0 0.0
        %1424 = vmatpush1.xpose.msra.mxu0 0.0
        %1425 = vmatprep.subr.mxu0 0.0
        %1426 = vmatpush1.xpose.msra.mxu0 0.0
        %1427 = vmatprep.subr.mxu0 0.0
        %1428 = vmatpush1.xpose.msra.mxu0 0.0
        %1429 = vmatprep.subr.mxu0 0.0
        %1430 = vmatpush1.xpose.msra.mxu0 0.0
        %1431 = vmatprep.subr.mxu0 0.0
        %1432 = vmatpush1.xpose.msra.mxu0 0.0
        %1433 = vmatprep.subr.mxu0 0.0
        %1434 = vmatpush1.xpose.msra.mxu0 0.0
        %1435 = vmatprep.subr.mxu0 0.0
        %1436 = vmatpush1.xpose.msra.mxu0 0.0
        %1437 = vmatprep.subr.mxu0 0.0
        %1438 = vmatpush1.xpose.msra.mxu0 0.0
        %1439 = vmatprep.subr.mxu0 0.0
        %1440 = vmatpush1.xpose.msra.mxu0 0.0
        %1441 = vmatprep.subr.mxu0 0.0
        %1442 = vmatpush1.xpose.msra.mxu0 0.0
        %1443 = vmatprep.subr.mxu0 0.0
        %1444 = vmatpush1.xpose.msra.mxu0 0.0
        %1445 = vmatprep.subr.mxu0 0.0
        %1446 = vmatpush1.xpose.msra.mxu0 0.0
        %1447 = vmatprep.subr.mxu0 0.0
        %1448 = vmatpush1.xpose.msra.mxu0 0.0
        %1449 = vmatprep.subr.mxu0 0.0
        %1450 = vmatpush1.xpose.msra.mxu0 0.0
        %1451 = vmatprep.subr.mxu0 0.0
        %1452 = vmatpush1.xpose.msra.mxu0 0.0
        %1453 = vmatprep.subr.mxu0 0.0
        %1454 = vmatpush1.xpose.msra.mxu0 0.0
        %1455 = vmatprep.subr.mxu0 0.0
        %1456 = vmatpush1.xpose.msra.mxu0 0.0
        %1457 = vmatprep.subr.mxu0 0.0
        %1458 = vmatpush1.xpose.msra.mxu0 0.0
        %1459 = vmatprep.mubr.f32.mxu0 0.0
        %1460 = vmatmul.mubr.f32.gmra.mrb[0].mxu0 %v1391
        %v1461 = vpop.f32.mrb[0].mxu0
        %v1462 = vadd.f32 0.0, %v1461
        %v1463 = vpop.f32.mrb[0].mxu0
        %1464 = vdwg.mxu0
        %v1465 = vsel %vm958, %v1462, -inf
        %1466 = vmax.xlane.f32.xlu0 %v1465
        %v1467 = vpop.xlane.xlu0 %1466
        %v1468 = vsub.f32 %v1462, %v1467
        %v1469 = vmul.f32 %v1468, 1.442695
        %v1470 = vpow.pop %v1469
        %v1471 = vsel %vm958, %v1470, 0.0
        %1472 = vadd.xlane.f32.xlu0 %v1471
        %v1473 = vpop.xlane.xlu0 %1472
        %v1474 = vrcp.pop %v1473
        %v1475 = vmul.f32 %v1470, %v1474
        %1476 = vrot.lane.b32.xlu0 %v878, 32
        %v1477 = vpop.permute.xlu0 %1476
        %v1480 = vsel %vm958, %v1475, 0
        %1482 = vmatprep.subr.mxu0 0.0
        %1483 = vmatpush1.msra.mxu0 %v1477
        %1484 = vmatprep.subr.mxu0 0.0
        %1485 = vmatpush1.msra.mxu0 0.0
        %1486 = vmatprep.subr.mxu0 0.0
        %1487 = vmatpush1.msra.mxu0 0.0
        %1488 = vmatprep.subr.mxu0 0.0
        %1489 = vmatpush1.msra.mxu0 0.0
        %1490 = vmatprep.subr.mxu0 0.0
        %1491 = vmatpush1.msra.mxu0 0.0
        %1492 = vmatprep.subr.mxu0 0.0
        %1493 = vmatpush1.msra.mxu0 0.0
        %1494 = vmatprep.subr.mxu0 0.0
        %1495 = vmatpush1.msra.mxu0 0.0
        %1496 = vmatprep.subr.mxu0 0.0
        %1497 = vmatpush1.msra.mxu0 0.0
        %1498 = vmatprep.subr.mxu0 0.0
        %1499 = vmatpush1.msra.mxu0 0.0
        %1500 = vmatprep.subr.mxu0 0.0
        %1501 = vmatpush1.msra.mxu0 0.0
        %1502 = vmatprep.subr.mxu0 0.0
        %1503 = vmatpush1.msra.mxu0 0.0
        %1504 = vmatprep.subr.mxu0 0.0
        %1505 = vmatpush1.msra.mxu0 0.0
        %1506 = vmatprep.subr.mxu0 0.0
        %1507 = vmatpush1.msra.mxu0 0.0
        %1508 = vmatprep.subr.mxu0 0.0
        %1509 = vmatpush1.msra.mxu0 0.0
        %1510 = vmatprep.subr.mxu0 0.0
        %1511 = vmatpush1.msra.mxu0 0.0
        %1512 = vmatprep.subr.mxu0 0.0
        %1513 = vmatpush1.msra.mxu0 0.0
        %1514 = vmatprep.subr.mxu0 0.0
        %1515 = vmatpush1.msra.mxu0 0.0
        %1516 = vmatprep.subr.mxu0 0.0
        %1517 = vmatpush1.msra.mxu0 0.0
        %1518 = vmatprep.subr.mxu0 0.0
        %1519 = vmatpush1.msra.mxu0 0.0
        %1520 = vmatprep.subr.mxu0 0.0
        %1521 = vmatpush1.msra.mxu0 0.0
        %1522 = vmatprep.subr.mxu0 0.0
        %1523 = vmatpush1.msra.mxu0 0.0
        %1524 = vmatprep.subr.mxu0 0.0
        %1525 = vmatpush1.msra.mxu0 0.0
        %1526 = vmatprep.subr.mxu0 0.0
        %1527 = vmatpush1.msra.mxu0 0.0
        %1528 = vmatprep.subr.mxu0 0.0
        %1529 = vmatpush1.msra.mxu0 0.0
        %1530 = vmatprep.subr.mxu0 0.0
        %1531 = vmatpush1.msra.mxu0 0.0
        %1532 = vmatprep.subr.mxu0 0.0
        %1533 = vmatpush1.msra.mxu0 0.0
        %1534 = vmatprep.subr.mxu0 0.0
        %1535 = vmatpush1.msra.mxu0 0.0
        %1536 = vmatprep.subr.mxu0 0.0
        %1537 = vmatpush1.msra.mxu0 0.0
        %1538 = vmatprep.subr.mxu0 0.0
        %1539 = vmatpush1.msra.mxu0 0.0
        %1540 = vmatprep.subr.mxu0 0.0
        %1541 = vmatpush1.msra.mxu0 0.0
        %1542 = vmatprep.subr.mxu0 0.0
        %1543 = vmatpush1.msra.mxu0 0.0
        %1544 = vmatprep.subr.mxu0 0.0
        %1545 = vmatpush1.msra.mxu0 0.0
        %1546 = vmatprep.mubr.f32.mxu0 0.0
        %1547 = vmatmul.mubr.f32.gmra.mrb[0].mxu0 %v1480
        %v1548 = vpop.f32.mrb[0].mxu0
        %v1549 = vadd.f32 0.0, %v1548
        %v1550 = vpop.f32.mrb[0].mxu0
        %1551 = vdwg.mxu0
        %1553 = vrot.lane.b32.xlu0 %v1549, 96
        %v1554 = vpop.permute.xlu0 %1553
        %vm1556 = vcmask 1048320
        %1557 = vst.msk [vmem:[#allocation2] sm:$0xff] %vm1556, %v1554
        %v1558 = vld [vmem:[#allocation2] sm:$0xff]
        %v1559 = vld [vmem:[#allocation17] sm:$0xff]
        %v1560 = vld [vmem:[#allocation17 + $0x8] sm:$0xff]
        %v1561 = vld [vmem:[#allocation17 + $0x10] sm:$0xff]
        %v1562 = vld [vmem:[#allocation17 + $0x18] sm:$0xff]
        %v1563 = vld [vmem:[#allocation17 + $0x20] sm:$0xff]
        %v1564 = vld [vmem:[#allocation17 + $0x28] sm:$0xff]
        %v1565 = vld [vmem:[#allocation17 + $0x30] sm:$0xff]
        %v1566 = vld [vmem:[#allocation17 + $0x38] sm:$0xff]
        %v1567 = vld [vmem:[#allocation17 + $0x40] sm:$0xff]
        %v1568 = vld [vmem:[#allocation17 + $0x48] sm:$0xff]
        %v1569 = vld [vmem:[#allocation17 + $0x50] sm:$0xff]
        %v1570 = vld [vmem:[#allocation17 + $0x58] sm:$0xff]
        %v1571 = vld [vmem:[#allocation17 + $0x60] sm:$0xff]
        %v1572 = vld [vmem:[#allocation17 + $0x68] sm:$0xff]
        %v1573 = vld [vmem:[#allocation17 + $0x70] sm:$0xff]
        %v1574 = vld [vmem:[#allocation17 + $0x78] sm:$0xff]
        %v1575 = vld [vmem:[#allocation18] sm:$0x1]
        %v1577 = vlaneseq
        %v1578 = vshrl.u32 %v1577, 7
        %v1579 = vsub.s32 0, %v1578
        %v1580 = vrot.slane %v1575, %v1579
        %1582 = vmatprep.subr.mxu0 0.0
        %1583 = vmatpush1.msra.mxu0 %v1559
        %1584 = vmatprep.subr.mxu0 0.0
        %1585 = vmatpush1.msra.mxu0 %v1560
        %1586 = vmatprep.subr.mxu0 0.0
        %1587 = vmatpush1.msra.mxu0 %v1561
        %1588 = vmatprep.subr.mxu0 0.0
        %1589 = vmatpush1.msra.mxu0 %v1562
        %1590 = vmatprep.subr.mxu0 0.0
        %1591 = vmatpush1.msra.mxu0 %v1563
        %1592 = vmatprep.subr.mxu0 0.0
        %1593 = vmatpush1.msra.mxu0 %v1564
        %1594 = vmatprep.subr.mxu0 0.0
        %1595 = vmatpush1.msra.mxu0 %v1565
        %1596 = vmatprep.subr.mxu0 0.0
        %1597 = vmatpush1.msra.mxu0 %v1566
        %1598 = vmatprep.subr.mxu0 0.0
        %1599 = vmatpush1.msra.mxu0 %v1567
        %1600 = vmatprep.subr.mxu0 0.0
        %1601 = vmatpush1.msra.mxu0 %v1568
        %1602 = vmatprep.subr.mxu0 0.0
        %1603 = vmatpush1.msra.mxu0 %v1569
        %1604 = vmatprep.subr.mxu0 0.0
        %1605 = vmatpush1.msra.mxu0 %v1570
        %1606 = vmatprep.subr.mxu0 0.0
        %1607 = vmatpush1.msra.mxu0 %v1571
        %1608 = vmatprep.subr.mxu0 0.0
        %1609 = vmatpush1.msra.mxu0 %v1572
        %1610 = vmatprep.subr.mxu0 0.0
        %1611 = vmatpush1.msra.mxu0 %v1573
        %1612 = vmatprep.subr.mxu0 0.0
        %1613 = vmatpush1.msra.mxu0 %v1574
        %1614 = vmatprep.subr.mxu0 0.0
        %1615 = vmatpush1.msra.mxu0 0.0
        %1616 = vmatprep.subr.mxu0 0.0
        %1617 = vmatpush1.msra.mxu0 0.0
        %1618 = vmatprep.subr.mxu0 0.0
        %1619 = vmatpush1.msra.mxu0 0.0
        %1620 = vmatprep.subr.mxu0 0.0
        %1621 = vmatpush1.msra.mxu0 0.0
        %1622 = vmatprep.subr.mxu0 0.0
        %1623 = vmatpush1.msra.mxu0 0.0
        %1624 = vmatprep.subr.mxu0 0.0
        %1625 = vmatpush1.msra.mxu0 0.0
        %1626 = vmatprep.subr.mxu0 0.0
        %1627 = vmatpush1.msra.mxu0 0.0
        %1628 = vmatprep.subr.mxu0 0.0
        %1629 = vmatpush1.msra.mxu0 0.0
        %1630 = vmatprep.subr.mxu0 0.0
        %1631 = vmatpush1.msra.mxu0 0.0
        %1632 = vmatprep.subr.mxu0 0.0
        %1633 = vmatpush1.msra.mxu0 0.0
        %1634 = vmatprep.subr.mxu0 0.0
        %1635 = vmatpush1.msra.mxu0 0.0
        %1636 = vmatprep.subr.mxu0 0.0
        %1637 = vmatpush1.msra.mxu0 0.0
        %1638 = vmatprep.subr.mxu0 0.0
        %1639 = vmatpush1.msra.mxu0 0.0
        %1640 = vmatprep.subr.mxu0 0.0
        %1641 = vmatpush1.msra.mxu0 0.0
        %1642 = vmatprep.subr.mxu0 0.0
        %1643 = vmatpush1.msra.mxu0 0.0
        %1644 = vmatprep.subr.mxu0 0.0
        %1645 = vmatpush1.msra.mxu0 0.0
        %1646 = vmatprep.mubr.f32.mxu0 0.0
        %1647 = vmatmul.mubr.f32.gmra.mrb[0].mxu0 %v1558
        %v1648 = vpop.f32.mrb[0].mxu0
        %v1649 = vadd.f32 %v1580, %v1648
        %v1650 = vpop.f32.mrb[0].mxu0
        %1651 = vdwg.mxu0
        %v1652 = vadd.f32 %v599, %v1649
        %1653 = vadd.xlane.f32.xlu0 %v1652
        %v1654 = vpop.xlane.xlu0 %1653
        %v1655 = vrcp.pop 128.0
        %v1656 = vmul.f32 %v1654, %v1655
        %v1657 = vsub.f32 %v1652, %v1656
        %v1658 = vmul.f32 %v1657, %v1657
        %1659 = vadd.xlane.f32.xlu0 %v1658
        %v1660 = vpop.xlane.xlu0 %1659
        %v1661 = vmul.f32 %v1660, %v1655
        %v1662 = vadd.f32 %v1661, 1e-05
        %v1663 = vrsqrt.pop %v1662
        %v1664 = vmul.f32 %v1657, %v1663
        %v1665 = vld [vmem:[#allocation20] sm:$0x1]
        %v1667 = vlaneseq
        %v1668 = vshrl.u32 %v1667, 7
        %v1669 = vsub.s32 0, %v1668
        %v1670 = vrot.slane %v1665, %v1669
        %v1672 = vmul.f32 %v1664, %v1670
        %v1673 = vld [vmem:[#allocation21] sm:$0x1]
        %v1675 = vlaneseq
        %v1676 = vshrl.u32 %v1675, 7
        %v1677 = vsub.s32 0, %v1676
        %v1678 = vrot.slane %v1673, %v1677
        %v1680 = vadd.f32 %v1672, %v1678
        %1681 = vst [vmem:[%s598] sm:$0xff] %v1680
        %s1682 = sand.u32 %s307, 1
        %s1683 = scalar_lea.sflag [#allocation5], %s1682
        %s1684 = sand.u32 %s307, 1
        %s1685 = smul.addr %s1684, 8
        %s1686 = scalar_lea.vmem [#allocation23], %s1685
        // Predicated region
        $region117: #{forward.16} parent=67 // pred_check
          %p1687 = pneg %p317
        $region118: #{forward.16} parent=67 // pred_check_branch
          %1689 = sbr.rel (%p1687) target = $region120
        $region119: #{forward.16} parent=67 // pred_region
          %s1691 = ssub.s32 128, 128
          %1692 = vsyncadd %s1683, %s1691
          %s1693 = smul.addr %s37, 128
          %s1694 = scalar_lea.hbm %s12, %s1693
          %s1696 = sshll.u32 %s1686, 4
          %s1697 = int_to_ptr.vmem [resolvable:$true] %s1696
          %1699 = dma.vmem_to_hbm [thread:$0]  %s1697, 128, %s1694, %s1683
        $region120: #{forward.16} parent=67 // pred_fallthru
          _
      $region68: #{forward.16} parent=5 // pred_fallthru
        _
      %p1700 = scmp.le.s32.totalorder 2, %s32
      // Predicated region
      $region121: #{forward.16} parent=5 // pred_check
        %p1701 = pneg %p1700
      $region122: #{forward.16} parent=5 // pred_check_branch
        %1703 = sbr.rel (%p1701) target = $region124
      $region123: #{forward.16} parent=5 // pred_region
        %s1704 = ssub.s32 %s32, 2
        // Predicated region
        $region125: #{forward.16} parent=123 // pred_check
          %p1705 = pneg %p323
        $region126: #{forward.16} parent=123 // pred_check_branch
          %1707 = sbr.rel (%p1705) target = $region128
        $region127: #{forward.16} parent=123 // pred_region
          %s1708 = sand.u32 %s308, 1
          %s1709 = scalar_lea.sflag [#allocation5], %s1708
          %s1710 = sand.u32 %s308, 1
          %s1711 = smul.addr %s1710, 8
          %s1712 = scalar_lea.vmem [#allocation23], %s1711
          %1713 = dma.done %s1709, 128
        $region128: #{forward.16} parent=123 // pred_fallthru
          _
      $region124: #{forward.16} parent=5 // pred_fallthru
        _
    $region6: #{forward.16} parent=1 // loop_footer
      %s36 = sadd.s32 1, %s32
    $region7: #{forward.16} parent=1 // loop_footer_branch
      %31 = sbr.rel target = $region3
    $region8: #{forward.16} parent=1 // loop_exit
      _
    %1714 = vsyncpa [#allocation4], 1
    %s1715 = scalar_lea.sflag [#allocation4], 1
    %1716 = vsyncpa %s1715, 1
    %1717 = vsyncpa [#allocation7], 1
    %s1718 = scalar_lea.sflag [#allocation7], 1
    %1719 = vsyncpa %s1718, 1
    %1720 = vsyncpa [#allocation10], 1
    %1721 = vsyncpa [#allocation13], 1
    %1722 = vsyncpa [#allocation16], 1
    %1723 = vsyncpa [#allocation19], 1
    %1724 = vsyncpa [#allocation22], 1
    %1725 = vsyncpa [#allocation5], 1
    %s1726 = scalar_lea.sflag [#allocation5], 1
    %1727 = vsyncpa %s1726, 1

</llo_original>
